<compile_context>
chip_gen: v7x
topology: tpu7x:2x2x1
jax: 0.10.0
libtpu: 0.0.40
codegen_flags: <defaults>
</compile_context>

<pallas_src>
import functools

import jax
import jax.numpy as jnp
from jax.experimental import pallas as pl
from jax.experimental.pallas import tpu as pltpu


# ----------------------------------------------------------------------------
# helpers
# ----------------------------------------------------------------------------

def _round_up(x, m):
    return ((x + m - 1) // m) * m


def _pick_lane_tile(dim, cap):
    """Tile for a lane-mapped axis: full dim when small, else a multiple of 128
    that divides the (possibly padded) dim."""
    if dim <= cap:
        return dim, dim
    for t in range(cap, 127, -128):
        if dim % t == 0:
            return t, dim
    return cap, _round_up(dim, cap)


def _pick_head_group(num_heads, seq):
    """Largest head-group whose (G, seq, seq) f32 score tensor stays <= 8 MiB."""
    budget = 8 * 1024 * 1024
    for g in range(num_heads, 0, -1):
        if num_heads % g == 0 and g * seq * seq * 4 <= budget:
            return g
    return 1


# ----------------------------------------------------------------------------
# linear: tiled matmul + bias (+ optional SiLU), bf16 MXU / f32 accumulate
# ----------------------------------------------------------------------------

def _linear_kernel(x_ref, w_ref, b_ref, o_ref, acc_ref, *, activation):
    @pl.when(pl.program_id(2) == 0)
    def _():
        acc_ref[...] = jnp.zeros_like(acc_ref)

    acc_ref[...] += jnp.dot(x_ref[...], w_ref[...],
                            preferred_element_type=jnp.float32)

    @pl.when(pl.program_id(2) == pl.num_programs(2) - 1)
    def _():
        y = acc_ref[...] + b_ref[...]
        if activation == "silu":
            y = y * jax.nn.sigmoid(y)
        o_ref[...] = y.astype(o_ref.dtype)


def linear(x, w, b, activation="none"):
    """x: (..., K) @ w: (K, N) + b: (N,) -> (..., N)."""
    *lead, K = x.shape
    N = w.shape[1]
    x2 = x.reshape(-1, K)
    M = x2.shape[0]

    tm = min(256, _round_up(M, 8))
    tn, Np = _pick_lane_tile(N, 256)
    tk, Kp = _pick_lane_tile(K, 512)
    Mp = _round_up(M, tm)

    xb = x2.astype(jnp.bfloat16)
    wb = w.astype(jnp.bfloat16)
    bb = b.reshape(1, N).astype(jnp.float32)
    if (Mp, Kp) != (M, K):
        xb = jnp.pad(xb, ((0, Mp - M), (0, Kp - K)))
    if (Kp, Np) != (K, N):
        wb = jnp.pad(wb, ((0, Kp - K), (0, Np - N)))
    if Np != N:
        bb = jnp.pad(bb, ((0, 0), (0, Np - N)))

    out = pl.pallas_call(
        functools.partial(_linear_kernel, activation=activation),
        out_shape=jax.ShapeDtypeStruct((Mp, Np), jnp.float32),
        grid=(Mp // tm, Np // tn, Kp // tk),
        in_specs=[
            pl.BlockSpec((tm, tk), lambda i, j, k: (i, k)),
            pl.BlockSpec((tk, tn), lambda i, j, k: (k, j)),
            pl.BlockSpec((1, tn), lambda i, j, k: (0, j)),
        ],
        out_specs=pl.BlockSpec((tm, tn), lambda i, j, k: (i, j)),
        scratch_shapes=[pltpu.VMEM((tm, tn), jnp.float32)],
        compiler_params=pltpu.CompilerParams(
            dimension_semantics=("parallel", "parallel", "arbitrary")),
    )(xb, wb, bb)
    if (Mp, Np) != (M, N):
        out = out[:M, :N]
    return out.reshape(*lead, N)


# ----------------------------------------------------------------------------
# fused MLP: x @ w1 -> SiLU -> @ w2, hidden activation never touches HBM
# ----------------------------------------------------------------------------

def _mlp_kernel(x_ref, w1_ref, b1_ref, w2_ref, b2_ref, o_ref):
    h = jnp.dot(x_ref[...], w1_ref[...],
                preferred_element_type=jnp.float32) + b1_ref[...]
    h = h * jax.nn.sigmoid(h)
    o_ref[...] = (jnp.dot(h.astype(w2_ref.dtype), w2_ref[...],
                          preferred_element_type=jnp.float32)
                  + b2_ref[...]).astype(o_ref.dtype)


def mlp(x, w1, b1, w2, b2):
    *lead, K = x.shape
    Hm = w1.shape[1]
    N = w2.shape[1]

    # If the weights are too large to keep fully resident in VMEM, fall back to
    # two tiled linear calls (still pipelined / accumulated correctly).
    if (K * Hm + Hm * N) * 2 > 8 * 1024 * 1024:
        h = linear(x, w1, b1, activation="silu")
        return linear(h, w2, b2)

    x2 = x.reshape(-1, K)
    M = x2.shape[0]
    tm = min(256, _round_up(M, 8))
    Mp = _round_up(M, tm)
    xb = x2.astype(jnp.bfloat16)
    if Mp != M:
        xb = jnp.pad(xb, ((0, Mp - M), (0, 0)))

    out = pl.pallas_call(
        _mlp_kernel,
        out_shape=jax.ShapeDtypeStruct((Mp, N), jnp.float32),
        grid=(Mp // tm,),
        in_specs=[
            pl.BlockSpec((tm, K), lambda i: (i, 0)),
            pl.BlockSpec((K, Hm), lambda i: (0, 0)),
            pl.BlockSpec((1, Hm), lambda i: (0, 0)),
            pl.BlockSpec((Hm, N), lambda i: (0, 0)),
            pl.BlockSpec((1, N), lambda i: (0, 0)),
        ],
        out_specs=pl.BlockSpec((tm, N), lambda i: (i, 0)),
        compiler_params=pltpu.CompilerParams(dimension_semantics=("parallel",)),
    )(xb, w1.astype(jnp.bfloat16), b1.reshape(1, Hm).astype(jnp.float32),
      w2.astype(jnp.bfloat16), b2.reshape(1, N).astype(jnp.float32))
    if Mp != M:
        out = out[:M]
    return out.reshape(*lead, N)


# ----------------------------------------------------------------------------
# layernorm, row-tiled (mem-bound; "parallel" rows for megacore)
# ----------------------------------------------------------------------------

def _layernorm_kernel(x_ref, g_ref, b_ref, o_ref, *, eps):
    x = x_ref[...].astype(jnp.float32)
    mean = jnp.mean(x, axis=-1, keepdims=True)
    var = jnp.mean(jnp.square(x - mean), axis=-1, keepdims=True)
    y = (x - mean) * jax.lax.rsqrt(var + eps)
    o_ref[...] = (y * g_ref[...] + b_ref[...]).astype(o_ref.dtype)


def layernorm(x, g, b, eps=1e-5):
    *lead, D = x.shape
    x2 = x.reshape(-1, D)
    M = x2.shape[0]
    tm = min(256, _round_up(M, 8))
    Mp = _round_up(M, tm)
    if Mp != M:
        x2 = jnp.pad(x2, ((0, Mp - M), (0, 0)))
    out = pl.pallas_call(
        functools.partial(_layernorm_kernel, eps=eps),
        out_shape=jax.ShapeDtypeStruct((Mp, D), jnp.float32),
        grid=(Mp // tm,),
        in_specs=[
            pl.BlockSpec((tm, D), lambda i: (i, 0)),
            pl.BlockSpec((1, D), lambda i: (0, 0)),
            pl.BlockSpec((1, D), lambda i: (0, 0)),
        ],
        out_specs=pl.BlockSpec((tm, D), lambda i: (i, 0)),
        compiler_params=pltpu.CompilerParams(dimension_semantics=("parallel",)),
    )(x2, g.reshape(1, D), b.reshape(1, D))
    if Mp != M:
        out = out[:M]
    return out.reshape(*lead, D)


# ----------------------------------------------------------------------------
# attention (heads batched per grid step, masks generated in-kernel)
# ----------------------------------------------------------------------------

def _mha_causal_kernel(q_ref, k_ref, v_ref, o_ref, *, sm_scale):
    q = q_ref[0]                                   # (G, S, Dh) bf16
    k = k_ref[0]
    v = v_ref[0]
    s = jnp.einsum("hqd,hkd->hqk", q, k,
                   preferred_element_type=jnp.float32) * sm_scale
    S = s.shape[-1]
    row = jax.lax.broadcasted_iota(jnp.int32, (S, S), 0)
    col = jax.lax.broadcasted_iota(jnp.int32, (S, S), 1)
    s = jnp.where((row >= col)[None, :, :], s, -1e30)
    s = s - jnp.max(s, axis=-1, keepdims=True)
    p = jnp.exp(s)
    p = p * pl.reciprocal(jnp.sum(p, axis=-1, keepdims=True), approx=True)
    o = jnp.einsum("hqk,hkd->hqd", p.astype(v.dtype), v,
                   preferred_element_type=jnp.float32)
    o_ref[0] = o.astype(o_ref.dtype)


def _mha_ids_kernel(idc_ref, idr_ref, q_ref, k_ref, v_ref, o_ref, *, sm_scale):
    ids_col = idc_ref[0]                           # (V, 1)
    ids_row = idr_ref[0]                           # (1, V)
    same = ids_col == ids_row                      # (V, V) id-equality mask
    q = q_ref[0]                                   # (G, V, Dh) bf16
    k = k_ref[0]
    v = v_ref[0]
    s = jnp.einsum("hqd,hkd->hqk", q, k,
                   preferred_element_type=jnp.float32) * sm_scale
    s = jnp.where(same[None, :, :], s, -1e30)
    s = s - jnp.max(s, axis=-1, keepdims=True)
    p = jnp.exp(s)
    p = p * pl.reciprocal(jnp.sum(p, axis=-1, keepdims=True), approx=True)
    o = jnp.einsum("hqk,hkd->hqd", p.astype(v.dtype), v,
                   preferred_element_type=jnp.float32)
    o_ref[0] = o.astype(o_ref.dtype)


def attention_causal(q, k, v):
    """q/k/v: (N, H, S, Dh) bf16 -> (N, H, S, Dh) f32; causal mask in-kernel."""
    N, H, S, Dh = q.shape
    G = _pick_head_group(H, S)
    spec = pl.BlockSpec((1, G, S, Dh), lambda n, h: (n, h, 0, 0))
    return pl.pallas_call(
        functools.partial(_mha_causal_kernel, sm_scale=Dh ** -0.5),
        out_shape=jax.ShapeDtypeStruct((N, H, S, Dh), jnp.float32),
        grid=(N, H // G),
        in_specs=[spec, spec, spec],
        out_specs=spec,
        compiler_params=pltpu.CompilerParams(
            dimension_semantics=("parallel", "parallel")),
    )(q, k, v)


def attention_ids(q, k, v, ids_col, ids_row):
    """q/k/v: (N, H, V, Dh) bf16, ids_col: (N, V, 1), ids_row: (N, 1, V)."""
    N, H, V, Dh = q.shape
    G = _pick_head_group(H, V)
    spec = pl.BlockSpec((1, G, V, Dh), lambda n, h: (n, h, 0, 0))
    return pl.pallas_call(
        functools.partial(_mha_ids_kernel, sm_scale=Dh ** -0.5),
        out_shape=jax.ShapeDtypeStruct((N, H, V, Dh), jnp.float32),
        grid=(N, H // G),
        in_specs=[
            pl.BlockSpec((1, V, 1), lambda n, h: (n, 0, 0)),
            pl.BlockSpec((1, 1, V), lambda n, h: (n, 0, 0)),
            spec, spec, spec,
        ],
        out_specs=spec,
        compiler_params=pltpu.CompilerParams(
            dimension_semantics=("parallel", "parallel")),
    )(ids_col, ids_row, q, k, v)


# ----------------------------------------------------------------------------
# std-mean scaler, row-tiled (masked mean/std over the time axis)
# ----------------------------------------------------------------------------

def _std_mean_scaler_kernel(x_ref, w_ref, scaled_ref, loc_ref, scale_ref,
                            *, min_scale):
    x = x_ref[...].astype(jnp.float32)
    w = w_ref[...].astype(jnp.float32)
    denom = jnp.maximum(jnp.sum(w, axis=-1, keepdims=True), 1.0)
    loc = jnp.sum(x * w, axis=-1, keepdims=True) / denom
    var = jnp.sum(jnp.square(x - loc) * w, axis=-1, keepdims=True) / denom
    scale = jnp.sqrt(var + min_scale)
    scaled_ref[...] = ((x - loc) / scale).astype(scaled_ref.dtype)
    loc_ref[...] = loc
    scale_ref[...] = scale


def std_mean_scaler(inputs, weights, min_scale=1e-5):
    # TODO(synk): CausalPatchStdMeanScaler variant (per-patch causal stats with
    # global stabilization) not reproduced; this is the plain StdMean scaler.
    B, V, T = inputs.shape
    M = B * V
    tm = min(256, _round_up(M, 8))
    Mp = _round_up(M, tm)
    x2 = inputs.reshape(M, T)
    w2 = weights.reshape(M, T)
    if Mp != M:
        x2 = jnp.pad(x2, ((0, Mp - M), (0, 0)))
        w2 = jnp.pad(w2, ((0, Mp - M), (0, 0)))
    scaled, loc, scale = pl.pallas_call(
        functools.partial(_std_mean_scaler_kernel, min_scale=min_scale),
        out_shape=(
            jax.ShapeDtypeStruct((Mp, T), jnp.float32),
            jax.ShapeDtypeStruct((Mp, 1), jnp.float32),
            jax.ShapeDtypeStruct((Mp, 1), jnp.float32),
        ),
        grid=(Mp // tm,),
        in_specs=[
            pl.BlockSpec((tm, T), lambda i: (i, 0)),
            pl.BlockSpec((tm, T), lambda i: (i, 0)),
        ],
        out_specs=(
            pl.BlockSpec((tm, T), lambda i: (i, 0)),
            pl.BlockSpec((tm, 1), lambda i: (i, 0)),
            pl.BlockSpec((tm, 1), lambda i: (i, 0)),
        ),
        compiler_params=pltpu.CompilerParams(dimension_semantics=("parallel",)),
    )(x2, w2)
    return (scaled[:M].reshape(B, V, T),
            loc[:M].reshape(B, V, 1),
            scale[:M].reshape(B, V, 1))


# ----------------------------------------------------------------------------
# Model (glue in plain JAX, compute in the kernels above)
# ----------------------------------------------------------------------------

def _is_spacewise(layer_idx, every_n, spacewise_first):
    if spacewise_first:
        return layer_idx % every_n == 0
    return layer_idx % every_n == every_n - 1


def transformer_layer(x, p, *, spacewise, ids_col, ids_row, num_heads):
    """Pre-norm attention block + pre-norm MLP block.  x: (B, V, S, E)."""
    B, V, S, E = x.shape
    Dh = E // num_heads

    h = layernorm(x, p["ln1_g"], p["ln1_b"])
    qkv = linear(h, p["w_qkv"], p["b_qkv"])                     # (B, V, S, 3E)
    qkv = qkv.reshape(B, V, S, 3, num_heads, Dh)

    if not spacewise:
        # time-wise causal attention over the seq axis, per (b, variate)
        qkv3 = (qkv.transpose(3, 0, 1, 4, 2, 5)
                   .reshape(3, B * V, num_heads, S, Dh)
                   .astype(jnp.bfloat16))
        o = attention_causal(qkv3[0], qkv3[1], qkv3[2])
        o = (o.reshape(B, V, num_heads, S, Dh)
              .transpose(0, 1, 3, 2, 4)
              .reshape(B, V, S, E))
    else:
        # space-wise attention over the variate axis, per (b, seq position),
        # restricted to variates with equal id (mask computed in-kernel).
        qkv3 = (qkv.transpose(3, 0, 2, 4, 1, 5)
                   .reshape(3, B * S, num_heads, V, Dh)
                   .astype(jnp.bfloat16))
        o = attention_ids(qkv3[0], qkv3[1], qkv3[2], ids_col, ids_row)
        o = (o.reshape(B, S, num_heads, V, Dh)
              .transpose(0, 3, 1, 2, 4)
              .reshape(B, V, S, E))

    x = x + linear(o, p["wo"], p["bo"])

    # TODO(synk): Toto uses a SwiGLU feed-forward and RoPE on time-wise
    # attention; internals were not provided, so a SiLU MLP / plain attention
    # is used here.
    h2 = layernorm(x, p["ln2_g"], p["ln2_b"])
    return x + mlp(h2, p["w1"], p["b1"], p["w2"], p["b2"])


def toto_backbone_forward(params, inputs, input_padding_mask, id_mask, cfg):
    """Forward pass of TotoBackbone (eval mode, no kv_cache, dropout disabled).

    inputs/input_padding_mask/id_mask: (batch, variate, time_steps)
    Returns ((mu, sigma) distribution params over (B, V, T),
             loc (B, V, 1), scale (B, V, 1)).
    """
    B, V, T = inputs.shape
    P = cfg["patch_size"]
    E = cfg["embed_dim"]
    H = cfg["num_heads"]
    assert cfg["stride"] == P, "patch embedding implemented for stride == patch_size"
    S = T // P  # seq_len after patching

    # --- scaler (weights = ones * padding_mask, as in the PyTorch forward) ---
    weights = input_padding_mask.astype(jnp.float32)
    scaled, loc, scale = std_mean_scaler(inputs, weights)

    # --- patch embedding: (B,V,T) -> (B,V,S,P) -> Linear(P, E) ---
    patches = scaled.reshape(B, V, S, P)
    emb = linear(patches, params["patch_embed"]["w"], params["patch_embed"]["b"])

    # reduced id mask: max over each patch, broadcast over the variate axis
    idm = jnp.broadcast_to(id_mask, (B, V, T)).reshape(B, V, S, P)
    reduced_id_mask = jnp.max(idm, axis=-1)                      # (B, V, S)

    # hoisted once (identical for every space-wise layer): two tiny layouts of
    # the per-(b, s) id vector consumed in-kernel to build the V x V mask.
    ids_bsv = reduced_id_mask.transpose(0, 2, 1).reshape(B * S, V)
    ids_col = ids_bsv[:, :, None]                                # (B*S, V, 1)
    ids_row = ids_bsv[:, None, :]                                # (B*S, 1, V)

    # --- transformer: alternating space-wise / time-wise layers ---
    x = emb
    for i, lp in enumerate(params["layers"]):
        sw = _is_spacewise(i, cfg["spacewise_every_n_layers"], cfg["spacewise_first"])
        x = transformer_layer(x, lp, spacewise=sw,
                              ids_col=ids_col, ids_row=ids_row, num_heads=H)

    # --- unembed + rearrange '(seq (patch embed)) -> ((seq patch) embed)' ---
    un = linear(x, params["unembed"]["w"], params["unembed"]["b"])  # (B,V,S,P*E)
    flattened = un.reshape(B, V, S, P, E).reshape(B, V, S * P, E)

    # --- output distribution head ---
    # TODO(synk): torch.distributions (StudentT / mixture) head replaced by a
    # Gaussian parameter head: column 0 -> mean, column 1 -> softplus scale.
    head = linear(flattened, params["dist_head"]["w"], params["dist_head"]["b"])
    mu = head[..., 0]
    sigma = jax.nn.softplus(head[..., 1]) + 1e-4

    return (mu, sigma), loc, scale


# ----------------------------------------------------------------------------
# Deterministic parameter init
# ----------------------------------------------------------------------------

def init_params(key, cfg):
    E, P, Hm = cfg["embed_dim"], cfg["patch_size"], cfg["mlp_hidden_dim"]

    def dense(k, fan_in, fan_out):
        return jax.random.normal(k, (fan_in, fan_out), jnp.float32) * 0.02

    keys = jax.random.split(key, 3 + cfg["num_layers"])
    params = {
        "patch_embed": {"w": dense(keys[0], P, E), "b": jnp.zeros((E,), jnp.float32)},
        "unembed": {"w": dense(keys[1], E, E * P), "b": jnp.zeros((E * P,), jnp.float32)},
        "dist_head": {"w": dense(keys[2], E, 2), "b": jnp.zeros((2,), jnp.float32)},
        "layers": [],
    }
    for layer in range(cfg["num_layers"]):
        lk = jax.random.split(keys[3 + layer], 6)
        wq, wk, wv = dense(lk[0], E, E), dense(lk[1], E, E), dense(lk[2], E, E)
        params["layers"].append({
            "ln1_g": jnp.ones((E,), jnp.float32), "ln1_b": jnp.zeros((E,), jnp.float32),
            # fused QKV projection (exactly equivalent to separate q/k/v linears)
            "w_qkv": jnp.concatenate([wq, wk, wv], axis=1),
            "b_qkv": jnp.zeros((3 * E,), jnp.float32),
            "wo": dense(lk[3], E, E), "bo": jnp.zeros((E,), jnp.float32),
            "ln2_g": jnp.ones((E,), jnp.float32), "ln2_b": jnp.zeros((E,), jnp.float32),
            "w1": dense(lk[4], E, Hm), "b1": jnp.zeros((Hm,), jnp.float32),
            "w2": dense(lk[5], Hm, E), "b2": jnp.zeros((E,), jnp.float32),
        })
    return params


# ----------------------------------------------------------------------------
# Driver
# ----------------------------------------------------------------------------

if __name__ == "__main__":
    cfg = dict(
        patch_size=4,
        stride=4,
        embed_dim=32,
        num_layers=2,
        num_heads=4,
        mlp_hidden_dim=64,
        dropout=0.0,          # eval mode: dropout is identity
        spacewise_every_n_layers=2,
        spacewise_first=True,
    )

    key = jax.random.PRNGKey(0)
    pkey, xkey = jax.random.split(key)
    params = init_params(pkey, cfg)

    B, V, T = 2, 4, 16
    inputs = jax.random.normal(xkey, (B, V, T), jnp.float32)
    input_padding_mask = jnp.ones((B, V, T), dtype=jnp.bool_)
    # two groups of two variates each (same id -> may attend in space-wise layers)
    id_mask = jnp.broadcast_to(
        jnp.array([0.0, 0.0, 1.0, 1.0], jnp.float32)[None, :, None], (B, V, T)
    )

    fwd = jax.jit(
        lambda p, x, m, idm: toto_backbone_forward(p, x, m, idm, cfg)
    )
    (mu, sigma), loc, scale = fwd(params, inputs, input_padding_mask, id_mask)
    jax.block_until_ready((mu, sigma, loc, scale))

    assert mu.shape == (B, V, T)
    assert sigma.shape == (B, V, T)
    assert loc.shape == (B, V, 1)
    assert scale.shape == (B, V, 1)
    assert bool(jnp.all(jnp.isfinite(mu))) and bool(jnp.all(sigma > 0))

    print("KERNEL_OK")
</pallas_src>

<mosaic_0001>
module attributes {stable_mosaic.version = 11 : i64} {
  func.func @_std_mean_scaler_kernel(%arg0: i32, %arg1: memref<8x16xf32, #tpu.memory_space<vmem>>, %arg2: memref<8x16xf32, #tpu.memory_space<vmem>>, %arg3: memref<8x16xf32, #tpu.memory_space<vmem>>, %arg4: memref<8x1xf32, #tpu.memory_space<vmem>>, %arg5: memref<8x1xf32, #tpu.memory_space<vmem>>) attributes {dimension_semantics = [#tpu.dimension_semantics<parallel>], iteration_bounds = array<i64: 1>, scalar_prefetch = 0 : i64, scratch_operands = 0 : i64, tpu.core_type = #tpu.core_type<tc>, window_params = [{transform_indices = @transform_0, window_bounds = array<i64: 8, 16>}, {transform_indices = @transform_1, window_bounds = array<i64: 8, 16>}, {transform_indices = @transform_2, window_bounds = array<i64: 8, 16>}, {transform_indices = @transform_3, window_bounds = array<i64: 8, 1>}, {transform_indices = @transform_4, window_bounds = array<i64: 8, 1>}]} {
    %c0 = arith.constant 0 : index
    %c0_0 = arith.constant 0 : index
    %0 = vector.load %arg1[%c0, %c0_0] : memref<8x16xf32, #tpu.memory_space<vmem>>, vector<8x16xf32>
    %c0_1 = arith.constant 0 : index
    %c0_2 = arith.constant 0 : index
    %1 = vector.load %arg2[%c0_1, %c0_2] : memref<8x16xf32, #tpu.memory_space<vmem>>, vector<8x16xf32>
    %cst = arith.constant dense<0.000000e+00> : vector<8xf32>
    %2 = vector.multi_reduction <add>, %1, %cst [1] : vector<8x16xf32> to vector<8xf32>
    %3 = vector.shape_cast %2 : vector<8xf32> to vector<8x1xf32>
    %cst_3 = arith.constant 1.000000e+00 : f32
    %4 = vector.broadcast %cst_3 : f32 to vector<8x1xf32>
    %5 = arith.maximumf %3, %4 : vector<8x1xf32>
    %6 = arith.mulf %0, %1 : vector<8x16xf32>
    %cst_4 = arith.constant dense<0.000000e+00> : vector<8xf32>
    %7 = vector.multi_reduction <add>, %6, %cst_4 [1] : vector<8x16xf32> to vector<8xf32>
    %8 = vector.shape_cast %7 : vector<8xf32> to vector<8x1xf32>
    %9 = arith.divf %8, %5 : vector<8x1xf32>
    %10 = vector.broadcast %9 : vector<8x1xf32> to vector<8x16xf32>
    %11 = arith.subf %0, %10 : vector<8x16xf32>
    %12 = arith.mulf %11, %11 : vector<8x16xf32>
    %13 = arith.mulf %12, %1 : vector<8x16xf32>
    %cst_5 = arith.constant dense<0.000000e+00> : vector<8xf32>
    %14 = vector.multi_reduction <add>, %13, %cst_5 [1] : vector<8x16xf32> to vector<8xf32>
    %15 = vector.shape_cast %14 : vector<8xf32> to vector<8x1xf32>
    %16 = arith.divf %15, %5 : vector<8x1xf32>
    %cst_6 = arith.constant 9.99999974E-6 : f32
    %17 = vector.broadcast %cst_6 : f32 to vector<8x1xf32>
    %18 = arith.addf %16, %17 : vector<8x1xf32>
    %19 = math.sqrt %18 : vector<8x1xf32>
    %20 = vector.broadcast %9 : vector<8x1xf32> to vector<8x16xf32>
    %21 = arith.subf %0, %20 : vector<8x16xf32>
    %22 = vector.broadcast %19 : vector<8x1xf32> to vector<8x16xf32>
    %23 = arith.divf %21, %22 : vector<8x16xf32>
    %c0_7 = arith.constant 0 : index
    %c0_8 = arith.constant 0 : index
    %24 = vector.load %arg3[%c0_7, %c0_8] : memref<8x16xf32, #tpu.memory_space<vmem>>, vector<8x16xf32>
    tpu.vector_store %arg3[%c0_7, %c0_8], %23 {strides = array<i32>} : memref<8x16xf32, #tpu.memory_space<vmem>>, vector<8x16xf32>,
    %c0_9 = arith.constant 0 : index
    %c0_10 = arith.constant 0 : index
    %25 = vector.load %arg4[%c0_9, %c0_10] : memref<8x1xf32, #tpu.memory_space<vmem>>, vector<8x1xf32>
    tpu.vector_store %arg4[%c0_9, %c0_10], %9 {strides = array<i32>} : memref<8x1xf32, #tpu.memory_space<vmem>>, vector<8x1xf32>,
    %c0_11 = arith.constant 0 : index
    %c0_12 = arith.constant 0 : index
    %26 = vector.load %arg5[%c0_11, %c0_12] : memref<8x1xf32, #tpu.memory_space<vmem>>, vector<8x1xf32>
    tpu.vector_store %arg5[%c0_11, %c0_12], %19 {strides = array<i32>} : memref<8x1xf32, #tpu.memory_space<vmem>>, vector<8x1xf32>,
    return
  }
  func.func @transform_0(%arg0: i32) -> (i32, i32) {
    %c0_i32 = arith.constant 0 : i32
    %c0_i32_0 = arith.constant 0 : i32
    return %arg0, %c0_i32 : i32, i32
  }
  func.func @transform_1(%arg0: i32) -> (i32, i32) {
    %c0_i32 = arith.constant 0 : i32
    %c0_i32_0 = arith.constant 0 : i32
    return %arg0, %c0_i32 : i32, i32
  }
  func.func @transform_2(%arg0: i32) -> (i32, i32) {
    %c0_i32 = arith.constant 0 : i32
    %c0_i32_0 = arith.constant 0 : i32
    return %arg0, %c0_i32 : i32, i32
  }
  func.func @transform_3(%arg0: i32) -> (i32, i32) {
    %c0_i32 = arith.constant 0 : i32
    %c0_i32_0 = arith.constant 0 : i32
    return %arg0, %c0_i32 : i32, i32
  }
  func.func @transform_4(%arg0: i32) -> (i32, i32) {
    %c0_i32 = arith.constant 0 : i32
    %c0_i32_0 = arith.constant 0 : i32
    return %arg0, %c0_i32 : i32, i32
  }
}

module attributes {stable_mosaic.version = 11 : i64} {
  func.func @_linear_kernel(%arg0: i32, %arg1: i32, %arg2: i32, %arg3: memref<32x4xbf16, #tpu.memory_space<vmem>>, %arg4: memref<4x32xbf16, #tpu.memory_space<vmem>>, %arg5: memref<1x32xf32, #tpu.memory_space<vmem>>, %arg6: memref<32x32xf32, #tpu.memory_space<vmem>>, %arg7: memref<32x32xf32, #tpu.memory_space<vmem>>) attributes {dimension_semantics = [#tpu.dimension_semantics<parallel>, #tpu.dimension_semantics<parallel>, #tpu.dimension_semantics<arbitrary>], iteration_bounds = array<i64: 1, 1, 1>, scalar_prefetch = 0 : i64, scratch_operands = 1 : i64, tpu.core_type = #tpu.core_type<tc>, window_params = [{transform_indices = @transform_0, window_bounds = array<i64: 32, 4>}, {transform_indices = @transform_1, window_bounds = array<i64: 4, 32>}, {transform_indices = @transform_2, window_bounds = array<i64: 1, 32>}, {transform_indices = @transform_3, window_bounds = array<i64: 32, 32>}]} {
    %c0_i32 = arith.constant 0 : i32
    %0 = arith.cmpi eq, %arg2, %c0_i32 : i32
    %1 = arith.extui %0 : i1 to i32
    %c0_i32_0 = arith.constant 0 : i32
    %2 = arith.cmpi ne, %1, %c0_i32_0 : i32
    scf.if %2 {
      %cst_10 = arith.constant 0.000000e+00 : f32
      %12 = vector.broadcast %cst_10 : f32 to vector<32x32xf32>
      %c0_11 = arith.constant 0 : index
      %c0_12 = arith.constant 0 : index
      %13 = vector.load %arg7[%c0_11, %c0_12] : memref<32x32xf32, #tpu.memory_space<vmem>>, vector<32x32xf32>
      tpu.vector_store %arg7[%c0_11, %c0_12], %12 {strides = array<i32>} : memref<32x32xf32, #tpu.memory_space<vmem>>, vector<32x32xf32>,
    } else {
    }
    %c0 = arith.constant 0 : index
    %c0_1 = arith.constant 0 : index
    %3 = vector.load %arg7[%c0, %c0_1] : memref<32x32xf32, #tpu.memory_space<vmem>>, vector<32x32xf32>
    %c0_2 = arith.constant 0 : index
    %c0_3 = arith.constant 0 : index
    %4 = vector.load %arg3[%c0_2, %c0_3] : memref<32x4xbf16, #tpu.memory_space<vmem>>, vector<32x4xbf16>
    %c0_4 = arith.constant 0 : index
    %c0_5 = arith.constant 0 : index
    %5 = vector.load %arg4[%c0_4, %c0_5] : memref<4x32xbf16, #tpu.memory_space<vmem>>, vector<4x32xbf16>
    %cst = arith.constant dense<0.000000e+00> : vector<32x32xf32>
    %6 = tpu.matmul %4, %5, %cst {dimension_numbers = #tpu.dot_dimension_numbers<[1], [0], [0], [1], [0, 0, 1, 1], [], []>} : vector<32x4xbf16>, vector<4x32xbf16>, vector<32x32xf32> -> vector<32x32xf32>
    %7 = arith.addf %3, %6 : vector<32x32xf32>
    %c0_6 = arith.constant 0 : index
    %c0_7 = arith.constant 0 : index
    %8 = vector.load %arg7[%c0_6, %c0_7] : memref<32x32xf32, #tpu.memory_space<vmem>>, vector<32x32xf32>
    tpu.vector_store %arg7[%c0_6, %c0_7], %7 {strides = array<i32>} : memref<32x32xf32, #tpu.memory_space<vmem>>, vector<32x32xf32>,
    %c0_i32_8 = arith.constant 0 : i32
    %9 = arith.cmpi eq, %arg2, %c0_i32_8 : i32
    %10 = arith.extui %9 : i1 to i32
    %c0_i32_9 = arith.constant 0 : i32
    %11 = arith.cmpi ne, %10, %c0_i32_9 : i32
    scf.if %11 {
      %c0_10 = arith.constant 0 : index
      %c0_11 = arith.constant 0 : index
      %12 = vector.load %arg7[%c0_10, %c0_11] : memref<32x32xf32, #tpu.memory_space<vmem>>, vector<32x32xf32>
      %c0_12 = arith.constant 0 : index
      %c0_13 = arith.constant 0 : index
      %13 = vector.load %arg5[%c0_12, %c0_13] : memref<1x32xf32, #tpu.memory_space<vmem>>, vector<1x32xf32>
      %14 = vector.broadcast %13 : vector<1x32xf32> to vector<32x32xf32>
      %15 = arith.addf %12, %14 : vector<32x32xf32>
      %c0_14 = arith.constant 0 : index
      %c0_15 = arith.constant 0 : index
      %16 = vector.load %arg6[%c0_14, %c0_15] : memref<32x32xf32, #tpu.memory_space<vmem>>, vector<32x32xf32>
      tpu.vector_store %arg6[%c0_14, %c0_15], %15 {strides = array<i32>} : memref<32x32xf32, #tpu.memory_space<vmem>>, vector<32x32xf32>,
    } else {
    }
    return
  }
  func.func @transform_0(%arg0: i32, %arg1: i32, %arg2: i32) -> (i32, i32) {
    %c0_i32 = arith.constant 0 : i32
    return %arg0, %arg2 : i32, i32
  }
  func.func @transform_1(%arg0: i32, %arg1: i32, %arg2: i32) -> (i32, i32) {
    %c0_i32 = arith.constant 0 : i32
    return %arg2, %arg1 : i32, i32
  }
  func.func @transform_2(%arg0: i32, %arg1: i32, %arg2: i32) -> (i32, i32) {
    %c0_i32 = arith.constant 0 : i32
    %c0_i32_0 = arith.constant 0 : i32
    return %c0_i32, %arg1 : i32, i32
  }
  func.func @transform_3(%arg0: i32, %arg1: i32, %arg2: i32) -> (i32, i32) {
    %c0_i32 = arith.constant 0 : i32
    return %arg0, %arg1 : i32, i32
  }
}

module attributes {stable_mosaic.version = 11 : i64} {
  func.func @_layernorm_kernel(%arg0: i32, %arg1: memref<32x32xf32, #tpu.memory_space<vmem>>, %arg2: memref<1x32xf32, #tpu.memory_space<vmem>>, %arg3: memref<1x32xf32, #tpu.memory_space<vmem>>, %arg4: memref<32x32xf32, #tpu.memory_space<vmem>>) attributes {dimension_semantics = [#tpu.dimension_semantics<parallel>], iteration_bounds = array<i64: 1>, scalar_prefetch = 0 : i64, scratch_operands = 0 : i64, tpu.core_type = #tpu.core_type<tc>, window_params = [{transform_indices = @transform_0, window_bounds = array<i64: 32, 32>}, {pipeline_mode = #tpu.pipeline_mode<synchronous>, transform_indices = @transform_1, window_bounds = array<i64: 1, 32>}, {pipeline_mode = #tpu.pipeline_mode<synchronous>, transform_indices = @transform_2, window_bounds = array<i64: 1, 32>}, {transform_indices = @transform_3, window_bounds = array<i64: 32, 32>}]} {
    %c0 = arith.constant 0 : index
    %c0_0 = arith.constant 0 : index
    %0 = vector.load %arg1[%c0, %c0_0] : memref<32x32xf32, #tpu.memory_space<vmem>>, vector<32x32xf32>
    %cst = arith.constant dense<0.000000e+00> : vector<32xf32>
    %1 = vector.multi_reduction <add>, %0, %cst [1] : vector<32x32xf32> to vector<32xf32>
    %2 = vector.shape_cast %1 : vector<32xf32> to vector<32x1xf32>
    %cst_1 = arith.constant 3.200000e+01 : f32
    %3 = vector.broadcast %cst_1 : f32 to vector<32x1xf32>
    %4 = arith.divf %2, %3 : vector<32x1xf32>
    %5 = vector.broadcast %4 : vector<32x1xf32> to vector<32x32xf32>
    %6 = arith.subf %0, %5 : vector<32x32xf32>
    %7 = arith.mulf %6, %6 : vector<32x32xf32>
    %cst_2 = arith.constant dense<0.000000e+00> : vector<32xf32>
    %8 = vector.multi_reduction <add>, %7, %cst_2 [1] : vector<32x32xf32> to vector<32xf32>
    %9 = vector.shape_cast %8 : vector<32xf32> to vector<32x1xf32>
    %cst_3 = arith.constant 3.200000e+01 : f32
    %10 = vector.broadcast %cst_3 : f32 to vector<32x1xf32>
    %11 = arith.divf %9, %10 : vector<32x1xf32>
    %12 = vector.broadcast %4 : vector<32x1xf32> to vector<32x32xf32>
    %13 = arith.subf %0, %12 : vector<32x32xf32>
    %cst_4 = arith.constant 9.99999974E-6 : f32
    %14 = vector.broadcast %cst_4 : f32 to vector<32x1xf32>
    %15 = arith.addf %11, %14 : vector<32x1xf32>
    %16 = math.rsqrt %15 : vector<32x1xf32>
    %17 = vector.broadcast %16 : vector<32x1xf32> to vector<32x32xf32>
    %18 = arith.mulf %13, %17 : vector<32x32xf32>
    %c0_5 = arith.constant 0 : index
    %c0_6 = arith.constant 0 : index
    %19 = vector.load %arg2[%c0_5, %c0_6] : memref<1x32xf32, #tpu.memory_space<vmem>>, vector<1x32xf32>
    %20 = vector.broadcast %19 : vector<1x32xf32> to vector<32x32xf32>
    %21 = arith.mulf %18, %20 : vector<32x32xf32>
    %c0_7 = arith.constant 0 : index
    %c0_8 = arith.constant 0 : index
    %22 = vector.load %arg3[%c0_7, %c0_8] : memref<1x32xf32, #tpu.memory_space<vmem>>, vector<1x32xf32>
    %23 = vector.broadcast %22 : vector<1x32xf32> to vector<32x32xf32>
    %24 = arith.addf %21, %23 : vector<32x32xf32>
    %c0_9 = arith.constant 0 : index
    %c0_10 = arith.constant 0 : index
    %25 = vector.load %arg4[%c0_9, %c0_10] : memref<32x32xf32, #tpu.memory_space<vmem>>, vector<32x32xf32>
    tpu.vector_store %arg4[%c0_9, %c0_10], %24 {strides = array<i32>} : memref<32x32xf32, #tpu.memory_space<vmem>>, vector<32x32xf32>,
    return
  }
  func.func @transform_0(%arg0: i32) -> (i32, i32) {
    %c0_i32 = arith.constant 0 : i32
    %c0_i32_0 = arith.constant 0 : i32
    return %arg0, %c0_i32 : i32, i32
  }
  func.func @transform_1(%arg0: i32) -> (i32, i32) {
    %c0_i32 = arith.constant 0 : i32
    %c0_i32_0 = arith.constant 0 : i32
    %c0_i32_1 = arith.constant 0 : i32
    return %c0_i32, %c0_i32_0 : i32, i32
  }
  func.func @transform_2(%arg0: i32) -> (i32, i32) {
    %c0_i32 = arith.constant 0 : i32
    %c0_i32_0 = arith.constant 0 : i32
    %c0_i32_1 = arith.constant 0 : i32
    return %c0_i32, %c0_i32_0 : i32, i32
  }
  func.func @transform_3(%arg0: i32) -> (i32, i32) {
    %c0_i32 = arith.constant 0 : i32
    %c0_i32_0 = arith.constant 0 : i32
    return %arg0, %c0_i32 : i32, i32
  }
}

module attributes {stable_mosaic.version = 11 : i64} {
  func.func @_linear_kernel(%arg0: i32, %arg1: i32, %arg2: i32, %arg3: memref<32x32xbf16, #tpu.memory_space<vmem>>, %arg4: memref<32x96xbf16, #tpu.memory_space<vmem>>, %arg5: memref<1x96xf32, #tpu.memory_space<vmem>>, %arg6: memref<32x96xf32, #tpu.memory_space<vmem>>, %arg7: memref<32x96xf32, #tpu.memory_space<vmem>>) attributes {dimension_semantics = [#tpu.dimension_semantics<parallel>, #tpu.dimension_semantics<parallel>, #tpu.dimension_semantics<arbitrary>], iteration_bounds = array<i64: 1, 1, 1>, scalar_prefetch = 0 : i64, scratch_operands = 1 : i64, tpu.core_type = #tpu.core_type<tc>, window_params = [{transform_indices = @transform_0, window_bounds = array<i64: 32, 32>}, {transform_indices = @transform_1, window_bounds = array<i64: 32, 96>}, {transform_indices = @transform_2, window_bounds = array<i64: 1, 96>}, {transform_indices = @transform_3, window_bounds = array<i64: 32, 96>}]} {
    %c0_i32 = arith.constant 0 : i32
    %0 = arith.cmpi eq, %arg2, %c0_i32 : i32
    %1 = arith.extui %0 : i1 to i32
    %c0_i32_0 = arith.constant 0 : i32
    %2 = arith.cmpi ne, %1, %c0_i32_0 : i32
    scf.if %2 {
      %cst_10 = arith.constant 0.000000e+00 : f32
      %12 = vector.broadcast %cst_10 : f32 to vector<32x96xf32>
      %c0_11 = arith.constant 0 : index
      %c0_12 = arith.constant 0 : index
      %13 = vector.load %arg7[%c0_11, %c0_12] : memref<32x96xf32, #tpu.memory_space<vmem>>, vector<32x96xf32>
      tpu.vector_store %arg7[%c0_11, %c0_12], %12 {strides = array<i32>} : memref<32x96xf32, #tpu.memory_space<vmem>>, vector<32x96xf32>,
    } else {
    }
    %c0 = arith.constant 0 : index
    %c0_1 = arith.constant 0 : index
    %3 = vector.load %arg7[%c0, %c0_1] : memref<32x96xf32, #tpu.memory_space<vmem>>, vector<32x96xf32>
    %c0_2 = arith.constant 0 : index
    %c0_3 = arith.constant 0 : index
    %4 = vector.load %arg3[%c0_2, %c0_3] : memref<32x32xbf16, #tpu.memory_space<vmem>>, vector<32x32xbf16>
    %c0_4 = arith.constant 0 : index
    %c0_5 = arith.constant 0 : index
    %5 = vector.load %arg4[%c0_4, %c0_5] : memref<32x96xbf16, #tpu.memory_space<vmem>>, vector<32x96xbf16>
    %cst = arith.constant dense<0.000000e+00> : vector<32x96xf32>
    %6 = tpu.matmul %4, %5, %cst {dimension_numbers = #tpu.dot_dimension_numbers<[1], [0], [0], [1], [0, 0, 1, 1], [], []>} : vector<32x32xbf16>, vector<32x96xbf16>, vector<32x96xf32> -> vector<32x96xf32>
    %7 = arith.addf %3, %6 : vector<32x96xf32>
    %c0_6 = arith.constant 0 : index
    %c0_7 = arith.constant 0 : index
    %8 = vector.load %arg7[%c0_6, %c0_7] : memref<32x96xf32, #tpu.memory_space<vmem>>, vector<32x96xf32>
    tpu.vector_store %arg7[%c0_6, %c0_7], %7 {strides = array<i32>} : memref<32x96xf32, #tpu.memory_space<vmem>>, vector<32x96xf32>,
    %c0_i32_8 = arith.constant 0 : i32
    %9 = arith.cmpi eq, %arg2, %c0_i32_8 : i32
    %10 = arith.extui %9 : i1 to i32
    %c0_i32_9 = arith.constant 0 : i32
    %11 = arith.cmpi ne, %10, %c0_i32_9 : i32
    scf.if %11 {
      %c0_10 = arith.constant 0 : index
      %c0_11 = arith.constant 0 : index
      %12 = vector.load %arg7[%c0_10, %c0_11] : memref<32x96xf32, #tpu.memory_space<vmem>>, vector<32x96xf32>
      %c0_12 = arith.constant 0 : index
      %c0_13 = arith.constant 0 : index
      %13 = vector.load %arg5[%c0_12, %c0_13] : memref<1x96xf32, #tpu.memory_space<vmem>>, vector<1x96xf32>
      %14 = vector.broadcast %13 : vector<1x96xf32> to vector<32x96xf32>
      %15 = arith.addf %12, %14 : vector<32x96xf32>
      %c0_14 = arith.constant 0 : index
      %c0_15 = arith.constant 0 : index
      %16 = vector.load %arg6[%c0_14, %c0_15] : memref<32x96xf32, #tpu.memory_space<vmem>>, vector<32x96xf32>
      tpu.vector_store %arg6[%c0_14, %c0_15], %15 {strides = array<i32>} : memref<32x96xf32, #tpu.memory_space<vmem>>, vector<32x96xf32>,
    } else {
    }
    return
  }
  func.func @transform_0(%arg0: i32, %arg1: i32, %arg2: i32) -> (i32, i32) {
    %c0_i32 = arith.constant 0 : i32
    return %arg0, %arg2 : i32, i32
  }
  func.func @transform_1(%arg0: i32, %arg1: i32, %arg2: i32) -> (i32, i32) {
    %c0_i32 = arith.constant 0 : i32
    return %arg2, %arg1 : i32, i32
  }
  func.func @transform_2(%arg0: i32, %arg1: i32, %arg2: i32) -> (i32, i32) {
    %c0_i32 = arith.constant 0 : i32
    %c0_i32_0 = arith.constant 0 : i32
    return %c0_i32, %arg1 : i32, i32
  }
  func.func @transform_3(%arg0: i32, %arg1: i32, %arg2: i32) -> (i32, i32) {
    %c0_i32 = arith.constant 0 : i32
    return %arg0, %arg1 : i32, i32
  }
}

module attributes {stable_mosaic.version = 11 : i64} {
  func.func @_mha_ids_kernel(%arg0: i32, %arg1: i32, %arg2: memref<1x4x1xf32, #tpu.memory_space<vmem>>, %arg3: memref<1x1x4xf32, #tpu.memory_space<vmem>>, %arg4: memref<1x4x4x8xbf16, #tpu.memory_space<vmem>>, %arg5: memref<1x4x4x8xbf16, #tpu.memory_space<vmem>>, %arg6: memref<1x4x4x8xbf16, #tpu.memory_space<vmem>>, %arg7: memref<1x4x4x8xf32, #tpu.memory_space<vmem>>) attributes {dimension_semantics = [#tpu.dimension_semantics<parallel>, #tpu.dimension_semantics<parallel>], iteration_bounds = array<i64: 8, 1>, scalar_prefetch = 0 : i64, scratch_operands = 0 : i64, tpu.core_type = #tpu.core_type<tc>, window_params = [{transform_indices = @transform_0, window_bounds = array<i64: 1, 4, 1>}, {transform_indices = @transform_1, window_bounds = array<i64: 1, 1, 4>}, {transform_indices = @transform_2, window_bounds = array<i64: 1, 4, 4, 8>}, {transform_indices = @transform_3, window_bounds = array<i64: 1, 4, 4, 8>}, {transform_indices = @transform_4, window_bounds = array<i64: 1, 4, 4, 8>}, {transform_indices = @transform_5, window_bounds = array<i64: 1, 4, 4, 8>}]} {
    %c0 = arith.constant 0 : index
    %c0_0 = arith.constant 0 : index
    %c0_1 = arith.constant 0 : index
    %0 = vector.load %arg2[%c0, %c0_0, %c0_1] : memref<1x4x1xf32, #tpu.memory_space<vmem>>, vector<1x4x1xf32>
    %1 = vector.shape_cast %0 : vector<1x4x1xf32> to vector<4x1xf32>
    %c0_2 = arith.constant 0 : index
    %c0_3 = arith.constant 0 : index
    %c0_4 = arith.constant 0 : index
    %2 = vector.load %arg3[%c0_2, %c0_3, %c0_4] : memref<1x1x4xf32, #tpu.memory_space<vmem>>, vector<1x1x4xf32>
    %3 = vector.shape_cast %2 : vector<1x1x4xf32> to vector<1x4xf32>
    %4 = vector.broadcast %1 : vector<4x1xf32> to vector<4x4xf32>
    %5 = vector.broadcast %3 : vector<1x4xf32> to vector<4x4xf32>
    %6 = arith.cmpf oeq, %4, %5 : vector<4x4xf32>
    %c0_5 = arith.constant 0 : index
    %c0_6 = arith.constant 0 : index
    %c0_7 = arith.constant 0 : index
    %c0_8 = arith.constant 0 : index
    %7 = vector.load %arg4[%c0_5, %c0_6, %c0_7, %c0_8] : memref<1x4x4x8xbf16, #tpu.memory_space<vmem>>, vector<1x4x4x8xbf16>
    %8 = vector.shape_cast %7 : vector<1x4x4x8xbf16> to vector<4x4x8xbf16>
    %c0_9 = arith.constant 0 : index
    %c0_10 = arith.constant 0 : index
    %c0_11 = arith.constant 0 : index
    %c0_12 = arith.constant 0 : index
    %9 = vector.load %arg5[%c0_9, %c0_10, %c0_11, %c0_12] : memref<1x4x4x8xbf16, #tpu.memory_space<vmem>>, vector<1x4x4x8xbf16>
    %10 = vector.shape_cast %9 : vector<1x4x4x8xbf16> to vector<4x4x8xbf16>
    %c0_13 = arith.constant 0 : index
    %c0_14 = arith.constant 0 : index
    %c0_15 = arith.constant 0 : index
    %c0_16 = arith.constant 0 : index
    %11 = vector.load %arg6[%c0_13, %c0_14, %c0_15, %c0_16] : memref<1x4x4x8xbf16, #tpu.memory_space<vmem>>, vector<1x4x4x8xbf16>
    %12 = vector.shape_cast %11 : vector<1x4x4x8xbf16> to vector<4x4x8xbf16>
    "tpu.trace_start"() <{level = 10 : i32, message = "hqd,hkd->hqk"}> : () -> ()
    %cst = arith.constant dense<0.000000e+00> : vector<4x4x4xf32>
    %13 = tpu.matmul %8, %10, %cst {dimension_numbers = #tpu.dot_dimension_numbers<[2], [2], [1], [1], [0, 0, 0, 1, 1, 1], [0], [0]>} : vector<4x4x8xbf16>, vector<4x4x8xbf16>, vector<4x4x4xf32> -> vector<4x4x4xf32>
    "tpu.trace_stop"() : () -> ()
    %cst_17 = arith.constant 0.353553385 : f32
    %14 = vector.broadcast %cst_17 : f32 to vector<4x4x4xf32>
    %15 = arith.mulf %13, %14 : vector<4x4x4xf32>
    %16 = vector.shape_cast %6 : vector<4x4xi1> to vector<1x4x4xi1>
    %cst_18 = arith.constant -1.000000e+30 : f32
    %17 = vector.shape_cast %16 : vector<1x4x4xi1> to vector<1x4x4xi1>
    %18 = vector.broadcast %17 : vector<1x4x4xi1> to vector<4x4x4xi1>
    %19 = vector.broadcast %cst_18 : f32 to vector<4x4x4xf32>
    %20 = arith.select %18, %15, %19 : vector<4x4x4xi1>, vector<4x4x4xf32>
    %cst_19 = arith.constant dense<0xFF800000> : vector<4x4xf32>
    %21 = vector.multi_reduction <maximumf>, %20, %cst_19 [2] : vector<4x4x4xf32> to vector<4x4xf32>
    %22 = vector.shape_cast %21 : vector<4x4xf32> to vector<4x4x1xf32>
    %23 = vector.broadcast %22 : vector<4x4x1xf32> to vector<4x4x4xf32>
    %24 = arith.subf %20, %23 : vector<4x4x4xf32>
    %25 = math.exp %24 : vector<4x4x4xf32>
    %cst_20 = arith.constant dense<0.000000e+00> : vector<4x4xf32>
    %26 = vector.multi_reduction <add>, %25, %cst_20 [2] : vector<4x4x4xf32> to vector<4x4xf32>
    %27 = vector.shape_cast %26 : vector<4x4xf32> to vector<4x4x1xf32>
    %28 = tpu.reciprocal %27 {approx = true} : vector<4x4x1xf32> -> vector<4x4x1xf32>
    %29 = vector.broadcast %28 : vector<4x4x1xf32> to vector<4x4x4xf32>
    %30 = arith.mulf %25, %29 : vector<4x4x4xf32>
    %31 = arith.truncf %30 : vector<4x4x4xf32> to vector<4x4x4xbf16>
    "tpu.trace_start"() <{level = 10 : i32, message = "hqk,hkd->hqd"}> : () -> ()
    %cst_21 = arith.constant dense<0.000000e+00> : vector<4x4x8xf32>
    %32 = tpu.matmul %31, %12, %cst_21 {dimension_numbers = #tpu.dot_dimension_numbers<[2], [1], [1], [2], [0, 0, 0, 1, 1, 2], [0], [0]>} : vector<4x4x4xbf16>, vector<4x4x8xbf16>, vector<4x4x8xf32> -> vector<4x4x8xf32>
    "tpu.trace_stop"() : () -> ()
    %c0_22 = arith.constant 0 : index
    %c0_23 = arith.constant 0 : index
    %c0_24 = arith.constant 0 : index
    %c0_25 = arith.constant 0 : index
    %33 = vector.load %arg7[%c0_22, %c0_23, %c0_24, %c0_25] : memref<1x4x4x8xf32, #tpu.memory_space<vmem>>, vector<1x4x4x8xf32>
    %34 = vector.shape_cast %33 : vector<1x4x4x8xf32> to vector<4x4x8xf32>
    %35 = vector.shape_cast %32 : vector<4x4x8xf32> to vector<1x4x4x8xf32>
    tpu.vector_store %arg7[%c0_22, %c0_23, %c0_24, %c0_25], %35 {strides = array<i32>} : memref<1x4x4x8xf32, #tpu.memory_space<vmem>>, vector<1x4x4x8xf32>,
    return
  }
  func.func @transform_0(%arg0: i32, %arg1: i32) -> (i32, i32, i32) {
    %c0_i32 = arith.constant 0 : i32
    %c0_i32_0 = arith.constant 0 : i32
    %c0_i32_1 = arith.constant 0 : i32
    return %arg0, %c0_i32, %c0_i32_0 : i32, i32, i32
  }
  func.func @transform_1(%arg0: i32, %arg1: i32) -> (i32, i32, i32) {
    %c0_i32 = arith.constant 0 : i32
    %c0_i32_0 = arith.constant 0 : i32
    %c0_i32_1 = arith.constant 0 : i32
    return %arg0, %c0_i32, %c0_i32_0 : i32, i32, i32
  }
  func.func @transform_2(%arg0: i32, %arg1: i32) -> (i32, i32, i32, i32) {
    %c0_i32 = arith.constant 0 : i32
    %c0_i32_0 = arith.constant 0 : i32
    %c0_i32_1 = arith.constant 0 : i32
    return %arg0, %arg1, %c0_i32, %c0_i32_0 : i32, i32, i32, i32
  }
  func.func @transform_3(%arg0: i32, %arg1: i32) -> (i32, i32, i32, i32) {
    %c0_i32 = arith.constant 0 : i32
    %c0_i32_0 = arith.constant 0 : i32
    %c0_i32_1 = arith.constant 0 : i32
    return %arg0, %arg1, %c0_i32, %c0_i32_0 : i32, i32, i32, i32
  }
  func.func @transform_4(%arg0: i32, %arg1: i32) -> (i32, i32, i32, i32) {
    %c0_i32 = arith.constant 0 : i32
    %c0_i32_0 = arith.constant 0 : i32
    %c0_i32_1 = arith.constant 0 : i32
    return %arg0, %arg1, %c0_i32, %c0_i32_0 : i32, i32, i32, i32
  }
  func.func @transform_5(%arg0: i32, %arg1: i32) -> (i32, i32, i32, i32) {
    %c0_i32 = arith.constant 0 : i32
    %c0_i32_0 = arith.constant 0 : i32
    %c0_i32_1 = arith.constant 0 : i32
    return %arg0, %arg1, %c0_i32, %c0_i32_0 : i32, i32, i32, i32
  }
}

module attributes {stable_mosaic.version = 11 : i64} {
  func.func @_linear_kernel(%arg0: i32, %arg1: i32, %arg2: i32, %arg3: memref<32x32xbf16, #tpu.memory_space<vmem>>, %arg4: memref<32x32xbf16, #tpu.memory_space<vmem>>, %arg5: memref<1x32xf32, #tpu.memory_space<vmem>>, %arg6: memref<32x32xf32, #tpu.memory_space<vmem>>, %arg7: memref<32x32xf32, #tpu.memory_space<vmem>>) attributes {dimension_semantics = [#tpu.dimension_semantics<parallel>, #tpu.dimension_semantics<parallel>, #tpu.dimension_semantics<arbitrary>], iteration_bounds = array<i64: 1, 1, 1>, scalar_prefetch = 0 : i64, scratch_operands = 1 : i64, tpu.core_type = #tpu.core_type<tc>, window_params = [{transform_indices = @transform_0, window_bounds = array<i64: 32, 32>}, {transform_indices = @transform_1, window_bounds = array<i64: 32, 32>}, {transform_indices = @transform_2, window_bounds = array<i64: 1, 32>}, {transform_indices = @transform_3, window_bounds = array<i64: 32, 32>}]} {
    %c0_i32 = arith.constant 0 : i32
    %0 = arith.cmpi eq, %arg2, %c0_i32 : i32
    %1 = arith.extui %0 : i1 to i32
    %c0_i32_0 = arith.constant 0 : i32
    %2 = arith.cmpi ne, %1, %c0_i32_0 : i32
    scf.if %2 {
      %cst_10 = arith.constant 0.000000e+00 : f32
      %12 = vector.broadcast %cst_10 : f32 to vector<32x32xf32>
      %c0_11 = arith.constant 0 : index
      %c0_12 = arith.constant 0 : index
      %13 = vector.load %arg7[%c0_11, %c0_12] : memref<32x32xf32, #tpu.memory_space<vmem>>, vector<32x32xf32>
      tpu.vector_store %arg7[%c0_11, %c0_12], %12 {strides = array<i32>} : memref<32x32xf32, #tpu.memory_space<vmem>>, vector<32x32xf32>,
    } else {
    }
    %c0 = arith.constant 0 : index
    %c0_1 = arith.constant 0 : index
    %3 = vector.load %arg7[%c0, %c0_1] : memref<32x32xf32, #tpu.memory_space<vmem>>, vector<32x32xf32>
    %c0_2 = arith.constant 0 : index
    %c0_3 = arith.constant 0 : index
    %4 = vector.load %arg3[%c0_2, %c0_3] : memref<32x32xbf16, #tpu.memory_space<vmem>>, vector<32x32xbf16>
    %c0_4 = arith.constant 0 : index
    %c0_5 = arith.constant 0 : index
    %5 = vector.load %arg4[%c0_4, %c0_5] : memref<32x32xbf16, #tpu.memory_space<vmem>>, vector<32x32xbf16>
    %cst = arith.constant dense<0.000000e+00> : vector<32x32xf32>
    %6 = tpu.matmul %4, %5, %cst {dimension_numbers = #tpu.dot_dimension_numbers<[1], [0], [0], [1], [0, 0, 1, 1], [], []>} : vector<32x32xbf16>, vector<32x32xbf16>, vector<32x32xf32> -> vector<32x32xf32>
    %7 = arith.addf %3, %6 : vector<32x32xf32>
    %c0_6 = arith.constant 0 : index
    %c0_7 = arith.constant 0 : index
    %8 = vector.load %arg7[%c0_6, %c0_7] : memref<32x32xf32, #tpu.memory_space<vmem>>, vector<32x32xf32>
    tpu.vector_store %arg7[%c0_6, %c0_7], %7 {strides = array<i32>} : memref<32x32xf32, #tpu.memory_space<vmem>>, vector<32x32xf32>,
    %c0_i32_8 = arith.constant 0 : i32
    %9 = arith.cmpi eq, %arg2, %c0_i32_8 : i32
    %10 = arith.extui %9 : i1 to i32
    %c0_i32_9 = arith.constant 0 : i32
    %11 = arith.cmpi ne, %10, %c0_i32_9 : i32
    scf.if %11 {
      %c0_10 = arith.constant 0 : index
      %c0_11 = arith.constant 0 : index
      %12 = vector.load %arg7[%c0_10, %c0_11] : memref<32x32xf32, #tpu.memory_space<vmem>>, vector<32x32xf32>
      %c0_12 = arith.constant 0 : index
      %c0_13 = arith.constant 0 : index
      %13 = vector.load %arg5[%c0_12, %c0_13] : memref<1x32xf32, #tpu.memory_space<vmem>>, vector<1x32xf32>
      %14 = vector.broadcast %13 : vector<1x32xf32> to vector<32x32xf32>
      %15 = arith.addf %12, %14 : vector<32x32xf32>
      %c0_14 = arith.constant 0 : index
      %c0_15 = arith.constant 0 : index
      %16 = vector.load %arg6[%c0_14, %c0_15] : memref<32x32xf32, #tpu.memory_space<vmem>>, vector<32x32xf32>
      tpu.vector_store %arg6[%c0_14, %c0_15], %15 {strides = array<i32>} : memref<32x32xf32, #tpu.memory_space<vmem>>, vector<32x32xf32>,
    } else {
    }
    return
  }
  func.func @transform_0(%arg0: i32, %arg1: i32, %arg2: i32) -> (i32, i32) {
    %c0_i32 = arith.constant 0 : i32
    return %arg0, %arg2 : i32, i32
  }
  func.func @transform_1(%arg0: i32, %arg1: i32, %arg2: i32) -> (i32, i32) {
    %c0_i32 = arith.constant 0 : i32
    return %arg2, %arg1 : i32, i32
  }
  func.func @transform_2(%arg0: i32, %arg1: i32, %arg2: i32) -> (i32, i32) {
    %c0_i32 = arith.constant 0 : i32
    %c0_i32_0 = arith.constant 0 : i32
    return %c0_i32, %arg1 : i32, i32
  }
  func.func @transform_3(%arg0: i32, %arg1: i32, %arg2: i32) -> (i32, i32) {
    %c0_i32 = arith.constant 0 : i32
    return %arg0, %arg1 : i32, i32
  }
}

module attributes {stable_mosaic.version = 11 : i64} {
  func.func @_mlp_kernel(%arg0: i32, %arg1: memref<32x32xbf16, #tpu.memory_space<vmem>>, %arg2: memref<32x64xbf16, #tpu.memory_space<vmem>>, %arg3: memref<1x64xf32, #tpu.memory_space<vmem>>, %arg4: memref<64x32xbf16, #tpu.memory_space<vmem>>, %arg5: memref<1x32xf32, #tpu.memory_space<vmem>>, %arg6: memref<32x32xf32, #tpu.memory_space<vmem>>) attributes {dimension_semantics = [#tpu.dimension_semantics<parallel>], iteration_bounds = array<i64: 1>, scalar_prefetch = 0 : i64, scratch_operands = 0 : i64, tpu.core_type = #tpu.core_type<tc>, window_params = [{transform_indices = @transform_0, window_bounds = array<i64: 32, 32>}, {pipeline_mode = #tpu.pipeline_mode<synchronous>, transform_indices = @transform_1, window_bounds = array<i64: 32, 64>}, {pipeline_mode = #tpu.pipeline_mode<synchronous>, transform_indices = @transform_2, window_bounds = array<i64: 1, 64>}, {pipeline_mode = #tpu.pipeline_mode<synchronous>, transform_indices = @transform_3, window_bounds = array<i64: 64, 32>}, {pipeline_mode = #tpu.pipeline_mode<synchronous>, transform_indices = @transform_4, window_bounds = array<i64: 1, 32>}, {transform_indices = @transform_5, window_bounds = array<i64: 32, 32>}]} {
    %c0 = arith.constant 0 : index
    %c0_0 = arith.constant 0 : index
    %0 = vector.load %arg1[%c0, %c0_0] : memref<32x32xbf16, #tpu.memory_space<vmem>>, vector<32x32xbf16>
    %c0_1 = arith.constant 0 : index
    %c0_2 = arith.constant 0 : index
    %1 = vector.load %arg2[%c0_1, %c0_2] : memref<32x64xbf16, #tpu.memory_space<vmem>>, vector<32x64xbf16>
    %cst = arith.constant dense<0.000000e+00> : vector<32x64xf32>
    %2 = tpu.matmul %0, %1, %cst {dimension_numbers = #tpu.dot_dimension_numbers<[1], [0], [0], [1], [0, 0, 1, 1], [], []>} : vector<32x32xbf16>, vector<32x64xbf16>, vector<32x64xf32> -> vector<32x64xf32>
    %c0_3 = arith.constant 0 : index
    %c0_4 = arith.constant 0 : index
    %3 = vector.load %arg3[%c0_3, %c0_4] : memref<1x64xf32, #tpu.memory_space<vmem>>, vector<1x64xf32>
    %4 = vector.broadcast %3 : vector<1x64xf32> to vector<32x64xf32>
    %5 = arith.addf %2, %4 : vector<32x64xf32>
    %6 = arith.negf %5 : vector<32x64xf32>
    %7 = math.exp %6 : vector<32x64xf32>
    %cst_5 = arith.constant 1.000000e+00 : f32
    %8 = vector.broadcast %cst_5 : f32 to vector<32x64xf32>
    %9 = arith.addf %8, %7 : vector<32x64xf32>
    %10 = arith.divf %8, %9 : vector<32x64xf32>
    %11 = arith.mulf %5, %10 : vector<32x64xf32>
    %12 = arith.truncf %11 : vector<32x64xf32> to vector<32x64xbf16>
    %c0_6 = arith.constant 0 : index
    %c0_7 = arith.constant 0 : index
    %13 = vector.load %arg4[%c0_6, %c0_7] : memref<64x32xbf16, #tpu.memory_space<vmem>>, vector<64x32xbf16>
    %cst_8 = arith.constant dense<0.000000e+00> : vector<32x32xf32>
    %14 = tpu.matmul %12, %13, %cst_8 {dimension_numbers = #tpu.dot_dimension_numbers<[1], [0], [0], [1], [0, 0, 1, 1], [], []>} : vector<32x64xbf16>, vector<64x32xbf16>, vector<32x32xf32> -> vector<32x32xf32>
    %c0_9 = arith.constant 0 : index
    %c0_10 = arith.constant 0 : index
    %15 = vector.load %arg5[%c0_9, %c0_10] : memref<1x32xf32, #tpu.memory_space<vmem>>, vector<1x32xf32>
    %16 = vector.broadcast %15 : vector<1x32xf32> to vector<32x32xf32>
    %17 = arith.addf %14, %16 : vector<32x32xf32>
    %c0_11 = arith.constant 0 : index
    %c0_12 = arith.constant 0 : index
    %18 = vector.load %arg6[%c0_11, %c0_12] : memref<32x32xf32, #tpu.memory_space<vmem>>, vector<32x32xf32>
    tpu.vector_store %arg6[%c0_11, %c0_12], %17 {strides = array<i32>} : memref<32x32xf32, #tpu.memory_space<vmem>>, vector<32x32xf32>,
    return
  }
  func.func @transform_0(%arg0: i32) -> (i32, i32) {
    %c0_i32 = arith.constant 0 : i32
    %c0_i32_0 = arith.constant 0 : i32
    return %arg0, %c0_i32 : i32, i32
  }
  func.func @transform_1(%arg0: i32) -> (i32, i32) {
    %c0_i32 = arith.constant 0 : i32
    %c0_i32_0 = arith.constant 0 : i32
    %c0_i32_1 = arith.constant 0 : i32
    return %c0_i32, %c0_i32_0 : i32, i32
  }
  func.func @transform_2(%arg0: i32) -> (i32, i32) {
    %c0_i32 = arith.constant 0 : i32
    %c0_i32_0 = arith.constant 0 : i32
    %c0_i32_1 = arith.constant 0 : i32
    return %c0_i32, %c0_i32_0 : i32, i32
  }
  func.func @transform_3(%arg0: i32) -> (i32, i32) {
    %c0_i32 = arith.constant 0 : i32
    %c0_i32_0 = arith.constant 0 : i32
    %c0_i32_1 = arith.constant 0 : i32
    return %c0_i32, %c0_i32_0 : i32, i32
  }
  func.func @transform_4(%arg0: i32) -> (i32, i32) {
    %c0_i32 = arith.constant 0 : i32
    %c0_i32_0 = arith.constant 0 : i32
    %c0_i32_1 = arith.constant 0 : i32
    return %c0_i32, %c0_i32_0 : i32, i32
  }
  func.func @transform_5(%arg0: i32) -> (i32, i32) {
    %c0_i32 = arith.constant 0 : i32
    %c0_i32_0 = arith.constant 0 : i32
    return %arg0, %c0_i32 : i32, i32
  }
}

module attributes {stable_mosaic.version = 11 : i64} {
  func.func @_mha_causal_kernel(%arg0: i32, %arg1: i32, %arg2: memref<1x4x4x8xbf16, #tpu.memory_space<vmem>>, %arg3: memref<1x4x4x8xbf16, #tpu.memory_space<vmem>>, %arg4: memref<1x4x4x8xbf16, #tpu.memory_space<vmem>>, %arg5: memref<1x4x4x8xf32, #tpu.memory_space<vmem>>) attributes {dimension_semantics = [#tpu.dimension_semantics<parallel>, #tpu.dimension_semantics<parallel>], iteration_bounds = array<i64: 8, 1>, scalar_prefetch = 0 : i64, scratch_operands = 0 : i64, tpu.core_type = #tpu.core_type<tc>, window_params = [{transform_indices = @transform_0, window_bounds = array<i64: 1, 4, 4, 8>}, {transform_indices = @transform_1, window_bounds = array<i64: 1, 4, 4, 8>}, {transform_indices = @transform_2, window_bounds = array<i64: 1, 4, 4, 8>}, {transform_indices = @transform_3, window_bounds = array<i64: 1, 4, 4, 8>}]} {
    %c0 = arith.constant 0 : index
    %c0_0 = arith.constant 0 : index
    %c0_1 = arith.constant 0 : index
    %c0_2 = arith.constant 0 : index
    %0 = vector.load %arg2[%c0, %c0_0, %c0_1, %c0_2] : memref<1x4x4x8xbf16, #tpu.memory_space<vmem>>, vector<1x4x4x8xbf16>
    %1 = vector.shape_cast %0 : vector<1x4x4x8xbf16> to vector<4x4x8xbf16>
    %c0_3 = arith.constant 0 : index
    %c0_4 = arith.constant 0 : index
    %c0_5 = arith.constant 0 : index
    %c0_6 = arith.constant 0 : index
    %2 = vector.load %arg3[%c0_3, %c0_4, %c0_5, %c0_6] : memref<1x4x4x8xbf16, #tpu.memory_space<vmem>>, vector<1x4x4x8xbf16>
    %3 = vector.shape_cast %2 : vector<1x4x4x8xbf16> to vector<4x4x8xbf16>
    %c0_7 = arith.constant 0 : index
    %c0_8 = arith.constant 0 : index
    %c0_9 = arith.constant 0 : index
    %c0_10 = arith.constant 0 : index
    %4 = vector.load %arg4[%c0_7, %c0_8, %c0_9, %c0_10] : memref<1x4x4x8xbf16, #tpu.memory_space<vmem>>, vector<1x4x4x8xbf16>
    %5 = vector.shape_cast %4 : vector<1x4x4x8xbf16> to vector<4x4x8xbf16>
    "tpu.trace_start"() <{level = 10 : i32, message = "hqd,hkd->hqk"}> : () -> ()
    %cst = arith.constant dense<0.000000e+00> : vector<4x4x4xf32>
    %6 = tpu.matmul %1, %3, %cst {dimension_numbers = #tpu.dot_dimension_numbers<[2], [2], [1], [1], [0, 0, 0, 1, 1, 1], [0], [0]>} : vector<4x4x8xbf16>, vector<4x4x8xbf16>, vector<4x4x4xf32> -> vector<4x4x4xf32>
    "tpu.trace_stop"() : () -> ()
    %cst_11 = arith.constant 0.353553385 : f32
    %7 = vector.broadcast %cst_11 : f32 to vector<4x4x4xf32>
    %8 = arith.mulf %6, %7 : vector<4x4x4xf32>
    %9 = tpu.iota {dimensions = array<i32: 0>} : vector<4x4xi32>
    %10 = tpu.iota {dimensions = array<i32: 1>} : vector<4x4xi32>
    %11 = arith.cmpi sge, %9, %10 : vector<4x4xi32>
    %12 = vector.shape_cast %11 : vector<4x4xi1> to vector<1x4x4xi1>
    %cst_12 = arith.constant -1.000000e+30 : f32
    %13 = vector.shape_cast %12 : vector<1x4x4xi1> to vector<1x4x4xi1>
    %14 = vector.broadcast %13 : vector<1x4x4xi1> to vector<4x4x4xi1>
    %15 = vector.broadcast %cst_12 : f32 to vector<4x4x4xf32>
    %16 = arith.select %14, %8, %15 : vector<4x4x4xi1>, vector<4x4x4xf32>
    %cst_13 = arith.constant dense<0xFF800000> : vector<4x4xf32>
    %17 = vector.multi_reduction <maximumf>, %16, %cst_13 [2] : vector<4x4x4xf32> to vector<4x4xf32>
    %18 = vector.shape_cast %17 : vector<4x4xf32> to vector<4x4x1xf32>
    %19 = vector.broadcast %18 : vector<4x4x1xf32> to vector<4x4x4xf32>
    %20 = arith.subf %16, %19 : vector<4x4x4xf32>
    %21 = math.exp %20 : vector<4x4x4xf32>
    %cst_14 = arith.constant dense<0.000000e+00> : vector<4x4xf32>
    %22 = vector.multi_reduction <add>, %21, %cst_14 [2] : vector<4x4x4xf32> to vector<4x4xf32>
    %23 = vector.shape_cast %22 : vector<4x4xf32> to vector<4x4x1xf32>
    %24 = tpu.reciprocal %23 {approx = true} : vector<4x4x1xf32> -> vector<4x4x1xf32>
    %25 = vector.broadcast %24 : vector<4x4x1xf32> to vector<4x4x4xf32>
    %26 = arith.mulf %21, %25 : vector<4x4x4xf32>
    %27 = arith.truncf %26 : vector<4x4x4xf32> to vector<4x4x4xbf16>
    "tpu.trace_start"() <{level = 10 : i32, message = "hqk,hkd->hqd"}> : () -> ()
    %cst_15 = arith.constant dense<0.000000e+00> : vector<4x4x8xf32>
    %28 = tpu.matmul %27, %5, %cst_15 {dimension_numbers = #tpu.dot_dimension_numbers<[2], [1], [1], [2], [0, 0, 0, 1, 1, 2], [0], [0]>} : vector<4x4x4xbf16>, vector<4x4x8xbf16>, vector<4x4x8xf32> -> vector<4x4x8xf32>
    "tpu.trace_stop"() : () -> ()
    %c0_16 = arith.constant 0 : index
    %c0_17 = arith.constant 0 : index
    %c0_18 = arith.constant 0 : index
    %c0_19 = arith.constant 0 : index
    %29 = vector.load %arg5[%c0_16, %c0_17, %c0_18, %c0_19] : memref<1x4x4x8xf32, #tpu.memory_space<vmem>>, vector<1x4x4x8xf32>
    %30 = vector.shape_cast %29 : vector<1x4x4x8xf32> to vector<4x4x8xf32>
    %31 = vector.shape_cast %28 : vector<4x4x8xf32> to vector<1x4x4x8xf32>
    tpu.vector_store %arg5[%c0_16, %c0_17, %c0_18, %c0_19], %31 {strides = array<i32>} : memref<1x4x4x8xf32, #tpu.memory_space<vmem>>, vector<1x4x4x8xf32>,
    return
  }
  func.func @transform_0(%arg0: i32, %arg1: i32) -> (i32, i32, i32, i32) {
    %c0_i32 = arith.constant 0 : i32
    %c0_i32_0 = arith.constant 0 : i32
    %c0_i32_1 = arith.constant 0 : i32
    return %arg0, %arg1, %c0_i32, %c0_i32_0 : i32, i32, i32, i32
  }
  func.func @transform_1(%arg0: i32, %arg1: i32) -> (i32, i32, i32, i32) {
    %c0_i32 = arith.constant 0 : i32
    %c0_i32_0 = arith.constant 0 : i32
    %c0_i32_1 = arith.constant 0 : i32
    return %arg0, %arg1, %c0_i32, %c0_i32_0 : i32, i32, i32, i32
  }
  func.func @transform_2(%arg0: i32, %arg1: i32) -> (i32, i32, i32, i32) {
    %c0_i32 = arith.constant 0 : i32
    %c0_i32_0 = arith.constant 0 : i32
    %c0_i32_1 = arith.constant 0 : i32
    return %arg0, %arg1, %c0_i32, %c0_i32_0 : i32, i32, i32, i32
  }
  func.func @transform_3(%arg0: i32, %arg1: i32) -> (i32, i32, i32, i32) {
    %c0_i32 = arith.constant 0 : i32
    %c0_i32_0 = arith.constant 0 : i32
    %c0_i32_1 = arith.constant 0 : i32
    return %arg0, %arg1, %c0_i32, %c0_i32_0 : i32, i32, i32, i32
  }
}

module attributes {stable_mosaic.version = 11 : i64} {
  func.func @_linear_kernel(%arg0: i32, %arg1: i32, %arg2: i32, %arg3: memref<32x32xbf16, #tpu.memory_space<vmem>>, %arg4: memref<32x128xbf16, #tpu.memory_space<vmem>>, %arg5: memref<1x128xf32, #tpu.memory_space<vmem>>, %arg6: memref<32x128xf32, #tpu.memory_space<vmem>>, %arg7: memref<32x128xf32, #tpu.memory_space<vmem>>) attributes {dimension_semantics = [#tpu.dimension_semantics<parallel>, #tpu.dimension_semantics<parallel>, #tpu.dimension_semantics<arbitrary>], iteration_bounds = array<i64: 1, 1, 1>, scalar_prefetch = 0 : i64, scratch_operands = 1 : i64, tpu.core_type = #tpu.core_type<tc>, window_params = [{transform_indices = @transform_0, window_bounds = array<i64: 32, 32>}, {transform_indices = @transform_1, window_bounds = array<i64: 32, 128>}, {transform_indices = @transform_2, window_bounds = array<i64: 1, 128>}, {transform_indices = @transform_3, window_bounds = array<i64: 32, 128>}]} {
    %c0_i32 = arith.constant 0 : i32
    %0 = arith.cmpi eq, %arg2, %c0_i32 : i32
    %1 = arith.extui %0 : i1 to i32
    %c0_i32_0 = arith.constant 0 : i32
    %2 = arith.cmpi ne, %1, %c0_i32_0 : i32
    scf.if %2 {
      %cst_10 = arith.constant 0.000000e+00 : f32
      %12 = vector.broadcast %cst_10 : f32 to vector<32x128xf32>
      %c0_11 = arith.constant 0 : index
      %c0_12 = arith.constant 0 : index
      %13 = vector.load %arg7[%c0_11, %c0_12] : memref<32x128xf32, #tpu.memory_space<vmem>>, vector<32x128xf32>
      tpu.vector_store %arg7[%c0_11, %c0_12], %12 {strides = array<i32>} : memref<32x128xf32, #tpu.memory_space<vmem>>, vector<32x128xf32>,
    } else {
    }
    %c0 = arith.constant 0 : index
    %c0_1 = arith.constant 0 : index
    %3 = vector.load %arg7[%c0, %c0_1] : memref<32x128xf32, #tpu.memory_space<vmem>>, vector<32x128xf32>
    %c0_2 = arith.constant 0 : index
    %c0_3 = arith.constant 0 : index
    %4 = vector.load %arg3[%c0_2, %c0_3] : memref<32x32xbf16, #tpu.memory_space<vmem>>, vector<32x32xbf16>
    %c0_4 = arith.constant 0 : index
    %c0_5 = arith.constant 0 : index
    %5 = vector.load %arg4[%c0_4, %c0_5] : memref<32x128xbf16, #tpu.memory_space<vmem>>, vector<32x128xbf16>
    %cst = arith.constant dense<0.000000e+00> : vector<32x128xf32>
    %6 = tpu.matmul %4, %5, %cst {dimension_numbers = #tpu.dot_dimension_numbers<[1], [0], [0], [1], [0, 0, 1, 1], [], []>} : vector<32x32xbf16>, vector<32x128xbf16>, vector<32x128xf32> -> vector<32x128xf32>
    %7 = arith.addf %3, %6 : vector<32x128xf32>
    %c0_6 = arith.constant 0 : index
    %c0_7 = arith.constant 0 : index
    %8 = vector.load %arg7[%c0_6, %c0_7] : memref<32x128xf32, #tpu.memory_space<vmem>>, vector<32x128xf32>
    tpu.vector_store %arg7[%c0_6, %c0_7], %7 {strides = array<i32>} : memref<32x128xf32, #tpu.memory_space<vmem>>, vector<32x128xf32>,
    %c0_i32_8 = arith.constant 0 : i32
    %9 = arith.cmpi eq, %arg2, %c0_i32_8 : i32
    %10 = arith.extui %9 : i1 to i32
    %c0_i32_9 = arith.constant 0 : i32
    %11 = arith.cmpi ne, %10, %c0_i32_9 : i32
    scf.if %11 {
      %c0_10 = arith.constant 0 : index
      %c0_11 = arith.constant 0 : index
      %12 = vector.load %arg7[%c0_10, %c0_11] : memref<32x128xf32, #tpu.memory_space<vmem>>, vector<32x128xf32>
      %c0_12 = arith.constant 0 : index
      %c0_13 = arith.constant 0 : index
      %13 = vector.load %arg5[%c0_12, %c0_13] : memref<1x128xf32, #tpu.memory_space<vmem>>, vector<1x128xf32>
      %14 = vector.broadcast %13 : vector<1x128xf32> to vector<32x128xf32>
      %15 = arith.addf %12, %14 : vector<32x128xf32>
      %c0_14 = arith.constant 0 : index
      %c0_15 = arith.constant 0 : index
      %16 = vector.load %arg6[%c0_14, %c0_15] : memref<32x128xf32, #tpu.memory_space<vmem>>, vector<32x128xf32>
      tpu.vector_store %arg6[%c0_14, %c0_15], %15 {strides = array<i32>} : memref<32x128xf32, #tpu.memory_space<vmem>>, vector<32x128xf32>,
    } else {
    }
    return
  }
  func.func @transform_0(%arg0: i32, %arg1: i32, %arg2: i32) -> (i32, i32) {
    %c0_i32 = arith.constant 0 : i32
    return %arg0, %arg2 : i32, i32
  }
  func.func @transform_1(%arg0: i32, %arg1: i32, %arg2: i32) -> (i32, i32) {
    %c0_i32 = arith.constant 0 : i32
    return %arg2, %arg1 : i32, i32
  }
  func.func @transform_2(%arg0: i32, %arg1: i32, %arg2: i32) -> (i32, i32) {
    %c0_i32 = arith.constant 0 : i32
    %c0_i32_0 = arith.constant 0 : i32
    return %c0_i32, %arg1 : i32, i32
  }
  func.func @transform_3(%arg0: i32, %arg1: i32, %arg2: i32) -> (i32, i32) {
    %c0_i32 = arith.constant 0 : i32
    return %arg0, %arg1 : i32, i32
  }
}

module attributes {stable_mosaic.version = 11 : i64} {
  func.func @_linear_kernel(%arg0: i32, %arg1: i32, %arg2: i32, %arg3: memref<128x32xbf16, #tpu.memory_space<vmem>>, %arg4: memref<32x2xbf16, #tpu.memory_space<vmem>>, %arg5: memref<1x2xf32, #tpu.memory_space<vmem>>, %arg6: memref<128x2xf32, #tpu.memory_space<vmem>>, %arg7: memref<128x2xf32, #tpu.memory_space<vmem>>) attributes {dimension_semantics = [#tpu.dimension_semantics<parallel>, #tpu.dimension_semantics<parallel>, #tpu.dimension_semantics<arbitrary>], iteration_bounds = array<i64: 1, 1, 1>, scalar_prefetch = 0 : i64, scratch_operands = 1 : i64, tpu.core_type = #tpu.core_type<tc>, window_params = [{transform_indices = @transform_0, window_bounds = array<i64: 128, 32>}, {transform_indices = @transform_1, window_bounds = array<i64: 32, 2>}, {transform_indices = @transform_2, window_bounds = array<i64: 1, 2>}, {transform_indices = @transform_3, window_bounds = array<i64: 128, 2>}]} {
    %c0_i32 = arith.constant 0 : i32
    %0 = arith.cmpi eq, %arg2, %c0_i32 : i32
    %1 = arith.extui %0 : i1 to i32
    %c0_i32_0 = arith.constant 0 : i32
    %2 = arith.cmpi ne, %1, %c0_i32_0 : i32
    scf.if %2 {
      %cst_10 = arith.constant 0.000000e+00 : f32
      %12 = vector.broadcast %cst_10 : f32 to vector<128x2xf32>
      %c0_11 = arith.constant 0 : index
      %c0_12 = arith.constant 0 : index
      %13 = vector.load %arg7[%c0_11, %c0_12] : memref<128x2xf32, #tpu.memory_space<vmem>>, vector<128x2xf32>
      tpu.vector_store %arg7[%c0_11, %c0_12], %12 {strides = array<i32>} : memref<128x2xf32, #tpu.memory_space<vmem>>, vector<128x2xf32>,
    } else {
    }
    %c0 = arith.constant 0 : index
    %c0_1 = arith.constant 0 : index
    %3 = vector.load %arg7[%c0, %c0_1] : memref<128x2xf32, #tpu.memory_space<vmem>>, vector<128x2xf32>
    %c0_2 = arith.constant 0 : index
    %c0_3 = arith.constant 0 : index
    %4 = vector.load %arg3[%c0_2, %c0_3] : memref<128x32xbf16, #tpu.memory_space<vmem>>, vector<128x32xbf16>
    %c0_4 = arith.constant 0 : index
    %c0_5 = arith.constant 0 : index
    %5 = vector.load %arg4[%c0_4, %c0_5] : memref<32x2xbf16, #tpu.memory_space<vmem>>, vector<32x2xbf16>
    %cst = arith.constant dense<0.000000e+00> : vector<128x2xf32>
    %6 = tpu.matmul %4, %5, %cst {dimension_numbers = #tpu.dot_dimension_numbers<[1], [0], [0], [1], [0, 0, 1, 1], [], []>} : vector<128x32xbf16>, vector<32x2xbf16>, vector<128x2xf32> -> vector<128x2xf32>
    %7 = arith.addf %3, %6 : vector<128x2xf32>
    %c0_6 = arith.constant 0 : index
    %c0_7 = arith.constant 0 : index
    %8 = vector.load %arg7[%c0_6, %c0_7] : memref<128x2xf32, #tpu.memory_space<vmem>>, vector<128x2xf32>
    tpu.vector_store %arg7[%c0_6, %c0_7], %7 {strides = array<i32>} : memref<128x2xf32, #tpu.memory_space<vmem>>, vector<128x2xf32>,
    %c0_i32_8 = arith.constant 0 : i32
    %9 = arith.cmpi eq, %arg2, %c0_i32_8 : i32
    %10 = arith.extui %9 : i1 to i32
    %c0_i32_9 = arith.constant 0 : i32
    %11 = arith.cmpi ne, %10, %c0_i32_9 : i32
    scf.if %11 {
      %c0_10 = arith.constant 0 : index
      %c0_11 = arith.constant 0 : index
      %12 = vector.load %arg7[%c0_10, %c0_11] : memref<128x2xf32, #tpu.memory_space<vmem>>, vector<128x2xf32>
      %c0_12 = arith.constant 0 : index
      %c0_13 = arith.constant 0 : index
      %13 = vector.load %arg5[%c0_12, %c0_13] : memref<1x2xf32, #tpu.memory_space<vmem>>, vector<1x2xf32>
      %14 = vector.broadcast %13 : vector<1x2xf32> to vector<128x2xf32>
      %15 = arith.addf %12, %14 : vector<128x2xf32>
      %c0_14 = arith.constant 0 : index
      %c0_15 = arith.constant 0 : index
      %16 = vector.load %arg6[%c0_14, %c0_15] : memref<128x2xf32, #tpu.memory_space<vmem>>, vector<128x2xf32>
      tpu.vector_store %arg6[%c0_14, %c0_15], %15 {strides = array<i32>} : memref<128x2xf32, #tpu.memory_space<vmem>>, vector<128x2xf32>,
    } else {
    }
    return
  }
  func.func @transform_0(%arg0: i32, %arg1: i32, %arg2: i32) -> (i32, i32) {
    %c0_i32 = arith.constant 0 : i32
    return %arg0, %arg2 : i32, i32
  }
  func.func @transform_1(%arg0: i32, %arg1: i32, %arg2: i32) -> (i32, i32) {
    %c0_i32 = arith.constant 0 : i32
    return %arg2, %arg1 : i32, i32
  }
  func.func @transform_2(%arg0: i32, %arg1: i32, %arg2: i32) -> (i32, i32) {
    %c0_i32 = arith.constant 0 : i32
    %c0_i32_0 = arith.constant 0 : i32
    return %c0_i32, %arg1 : i32, i32
  }
  func.func @transform_3(%arg0: i32, %arg1: i32, %arg2: i32) -> (i32, i32) {
    %c0_i32 = arith.constant 0 : i32
    return %arg0, %arg1 : i32, i32
  }
}

</mosaic_0001>

<llo_original>
// kernel: _lambda_.18
$region0: #{_lambda_.18}
  #allocation0 [shape = 'u32[]', space=smem, size = 0x4, offset = 0x4, fixed_abs, tag = 'smem constant byte address 0x4 - core index']
  #allocation1 [shape = 'u32[144,128]{1,0:T(1,128)}', space=vmem, size = 0x12000, scoped, tag = 'internal scratch']
  %s0 = inlined_call_operand.vmem [shape: f32[32,32], index: 0, kind: input, shape index: {}]
  %s1 = inlined_call_operand.vmem [shape: f32[1,32], index: 1, kind: input, shape index: {}]
  %s2 = inlined_call_operand.vmem [shape: f32[1,32], index: 2, kind: input, shape index: {}]
  %s3 = inlined_call_operand.vmem [shape: f32[32,32], index: 3, kind: output, shape index: {}]
  %s4 = sld [smem:[#allocation0]]
  $region22: #{_lambda_.18} parent=0
    _
  %s6 = ssub.s32 1, %s4
  %s7 = scalar_select 0, %s6, %s4
  // Predicated region
  $region2: #{_lambda_.18} parent=0 // pred_check
    _
  $region3: #{_lambda_.18} parent=0 // pred_check_branch
    %9 = sbr.rel (0) target = $region5
  $region4: #{_lambda_.18} parent=0 // pred_region
    _
  $region5: #{_lambda_.18} parent=0 // pred_fallthru
    _
  // Predicated region
  $region6: #{_lambda_.18} parent=0 // pred_check
    _
  $region7: #{_lambda_.18} parent=0 // pred_check_branch
    %11 = sbr.rel (0) target = $region9
  $region8: #{_lambda_.18} parent=0 // pred_region
    _
  $region9: #{_lambda_.18} parent=0 // pred_fallthru
    _
  // Predicated region
  $region10: #{_lambda_.18} parent=0 // pred_check
    _
  $region11: #{_lambda_.18} parent=0 // pred_check_branch
    %13 = sbr.rel (0) target = $region13
  $region12: #{_lambda_.18} parent=0 // pred_region
    _
  $region13: #{_lambda_.18} parent=0 // pred_fallthru
    _
  %v14 = vld [vmem:[%s0] sm:$0xff]
  %v15 = vld [vmem:[%s0 + $0x8] sm:$0xff]
  %v16 = vld [vmem:[%s0 + $0x10] sm:$0xff]
  %v17 = vld [vmem:[%s0 + $0x18] sm:$0xff]
  %vm18 = vcmask 261120
  %v19 = vsel %vm18, %v14, 0.0
  %20 = vadd.xlane.f32.xlu0 %v19
  %v21 = vpop.xlane.xlu0 %20
  %v22 = vsel %vm18, %v15, 0.0
  %23 = vadd.xlane.f32.xlu0 %v22
  %v24 = vpop.xlane.xlu0 %23
  %v25 = vsel %vm18, %v16, 0.0
  %26 = vadd.xlane.f32.xlu0 %v25
  %v27 = vpop.xlane.xlu0 %26
  %v28 = vsel %vm18, %v17, 0.0
  %29 = vadd.xlane.f32.xlu0 %v28
  %v30 = vpop.xlane.xlu0 %29
  %v31 = vrcp.pop 32.0
  %v32 = vmul.f32 %v21, %v31
  %v33 = vmul.f32 %v24, %v31
  %v34 = vmul.f32 %v27, %v31
  %v35 = vmul.f32 %v30, %v31
  %v36 = vsub.f32 %v14, %v32
  %v37 = vsub.f32 %v15, %v33
  %v38 = vsub.f32 %v16, %v34
  %v39 = vsub.f32 %v17, %v35
  %v40 = vmul.f32 %v36, %v36
  %v41 = vmul.f32 %v37, %v37
  %v42 = vmul.f32 %v38, %v38
  %v43 = vmul.f32 %v39, %v39
  %v44 = vsel %vm18, %v40, 0.0
  %45 = vadd.xlane.f32.xlu0 %v44
  %v46 = vpop.xlane.xlu0 %45
  %v47 = vsel %vm18, %v41, 0.0
  %48 = vadd.xlane.f32.xlu0 %v47
  %v49 = vpop.xlane.xlu0 %48
  %v50 = vsel %vm18, %v42, 0.0
  %51 = vadd.xlane.f32.xlu0 %v50
  %v52 = vpop.xlane.xlu0 %51
  %v53 = vsel %vm18, %v43, 0.0
  %54 = vadd.xlane.f32.xlu0 %v53
  %v55 = vpop.xlane.xlu0 %54
  %v56 = vmul.f32 %v46, %v31
  %v57 = vmul.f32 %v49, %v31
  %v58 = vmul.f32 %v52, %v31
  %v59 = vmul.f32 %v55, %v31
  %v60 = vadd.f32 %v56, 1e-05
  %v61 = vadd.f32 %v57, 1e-05
  %v62 = vadd.f32 %v58, 1e-05
  %v63 = vadd.f32 %v59, 1e-05
  %v64 = vrsqrt.pop %v60
  %v65 = vrsqrt.pop %v61
  %v66 = vrsqrt.pop %v62
  %v67 = vrsqrt.pop %v63
  %v68 = vmul.f32 %v36, %v64
  %v69 = vmul.f32 %v37, %v65
  %v70 = vmul.f32 %v38, %v66
  %v71 = vmul.f32 %v39, %v67
  %v72 = vld [vmem:[%s1] sm:$0x1]
  %v74 = vlaneseq
  %v75 = vshrl.u32 %v74, 7
  %v76 = vsub.s32 0, %v75
  %v77 = vrot.slane %v72, %v76
  %v79 = vmul.f32 %v68, %v77
  %v80 = vmul.f32 %v69, %v77
  %v81 = vmul.f32 %v70, %v77
  %v82 = vmul.f32 %v71, %v77
  %v83 = vld [vmem:[%s2] sm:$0x1]
  %v85 = vlaneseq
  %v86 = vshrl.u32 %v85, 7
  %v87 = vsub.s32 0, %v86
  %v88 = vrot.slane %v83, %v87
  %v90 = vadd.f32 %v79, %v88
  %v91 = vadd.f32 %v80, %v88
  %v92 = vadd.f32 %v81, %v88
  %v93 = vadd.f32 %v82, %v88
  %94 = vst.msk [vmem:[%s3] sm:$0xff] %vm18, %v90
  %95 = vst.msk [vmem:[%s3 + $0x8] sm:$0xff] %vm18, %v91
  %96 = vst.msk [vmem:[%s3 + $0x10] sm:$0xff] %vm18, %v92
  %97 = vst.msk [vmem:[%s3 + $0x18] sm:$0xff] %vm18, %v93
  // Predicated region
  $region14: #{_lambda_.18} parent=0 // pred_check
    _
  $region15: #{_lambda_.18} parent=0 // pred_check_branch
    %99 = sbr.rel (0) target = $region17
  $region16: #{_lambda_.18} parent=0 // pred_region
    _
  $region17: #{_lambda_.18} parent=0 // pred_fallthru
    _
  // Predicated region
  $region18: #{_lambda_.18} parent=0 // pred_check
    _
  $region19: #{_lambda_.18} parent=0 // pred_check_branch
    %101 = sbr.rel (0) target = $region21
  $region20: #{_lambda_.18} parent=0 // pred_region
    _
  $region21: #{_lambda_.18} parent=0 // pred_fallthru
    _

// kernel: _lambda_.16
$region0: #{_lambda_.16}
  #allocation0 [shape = 'u32[]', space=smem, size = 0x4, offset = 0x4, fixed_abs, tag = 'smem constant byte address 0x4 - core index']
  #allocation1 [shape = 'u32[144,128]{1,0:T(1,128)}', space=vmem, size = 0x12000, scoped, tag = 'internal scratch']
  %s0 = inlined_call_operand.vmem [shape: f32[8,16], index: 0, kind: input, shape index: {}]
  %s1 = inlined_call_operand.vmem [shape: f32[8,16], index: 1, kind: input, shape index: {}]
  %s2 = inlined_call_operand.vmem [shape: f32[8,16], index: 2, kind: output, shape index: {0}]
  %s3 = inlined_call_operand.vmem [shape: f32[8,1], index: 3, kind: output, shape index: {1}]
  %s4 = inlined_call_operand.vmem [shape: f32[8,1], index: 4, kind: output, shape index: {2}]
  %5 = xla_tuple %s2, %s3, %s4
  %s6 = sld [smem:[#allocation0]]
  $region34: #{_lambda_.16} parent=0
    _
  %s8 = ssub.s32 1, %s6
  %s9 = scalar_select 0, %s8, %s6
  // Predicated region
  $region2: #{_lambda_.16} parent=0 // pred_check
    _
  $region3: #{_lambda_.16} parent=0 // pred_check_branch
    %11 = sbr.rel (0) target = $region5
  $region4: #{_lambda_.16} parent=0 // pred_region
    _
  $region5: #{_lambda_.16} parent=0 // pred_fallthru
    _
  // Predicated region
  $region6: #{_lambda_.16} parent=0 // pred_check
    _
  $region7: #{_lambda_.16} parent=0 // pred_check_branch
    %13 = sbr.rel (0) target = $region9
  $region8: #{_lambda_.16} parent=0 // pred_region
    _
  $region9: #{_lambda_.16} parent=0 // pred_fallthru
    _
  %v14 = vld [vmem:[%s0] sm:$0xff]
  %v15 = vld [vmem:[%s1] sm:$0xff]
  %vm16 = vcmask 130048
  %v17 = vsel %vm16, %v15, 0.0
  %18 = vadd.xlane.f32.xlu0 %v17
  %v19 = vpop.xlane.xlu0 %18
  %v20 = vmax.f32 %v19, 1.0
  %v21 = vmul.f32 %v14, %v15
  %v22 = vsel %vm16, %v21, 0.0
  %23 = vadd.xlane.f32.xlu0 %v22
  %v24 = vpop.xlane.xlu0 %23
  %v25 = vrcp.pop %v20
  %v26 = vmul.f32 %v24, %v25
  %v27 = vsub.f32 %v14, %v26
  %v28 = vmul.f32 %v27, %v27
  %v29 = vmul.f32 %v28, %v15
  %v30 = vsel %vm16, %v29, 0.0
  %31 = vadd.xlane.f32.xlu0 %v30
  %v32 = vpop.xlane.xlu0 %31
  %v33 = vmul.f32 %v32, %v25
  %v34 = vadd.f32 %v33, 1e-05
  %v35 = vrsqrt.pop %v34
  %v36 = vmul.f32 %v34, %v35
  %vm37 = vcmp.eq.f32.partialorder %v34, inf
  %v38 = vsel %vm37, %v34, %v36
  %vm39 = vcmp.eq.f32.partialorder %v34, 0.0
  %v40 = vand.u32 %v34, 2147483648
  %v41 = vsel %vm39, %v40, %v38
  %v42 = vrcp.pop %v41
  %v43 = vmul.f32 %v27, %v42
  %44 = vst.msk [vmem:[%s2] sm:$0xff] %vm16, %v43
  %vm45 = vcmask 7168
  %46 = vst.msk [vmem:[%s3] sm:$0xff] %vm45, %v26
  %47 = vst.msk [vmem:[%s4] sm:$0xff] %vm45, %v41
  // Predicated region
  $region10: #{_lambda_.16} parent=0 // pred_check
    _
  $region11: #{_lambda_.16} parent=0 // pred_check_branch
    %49 = sbr.rel (0) target = $region13
  $region12: #{_lambda_.16} parent=0 // pred_region
    _
  $region13: #{_lambda_.16} parent=0 // pred_fallthru
    _
  // Predicated region
  $region14: #{_lambda_.16} parent=0 // pred_check
    _
  $region15: #{_lambda_.16} parent=0 // pred_check_branch
    %51 = sbr.rel (0) target = $region17
  $region16: #{_lambda_.16} parent=0 // pred_region
    _
  $region17: #{_lambda_.16} parent=0 // pred_fallthru
    _
  // Predicated region
  $region18: #{_lambda_.16} parent=0 // pred_check
    _
  $region19: #{_lambda_.16} parent=0 // pred_check_branch
    %53 = sbr.rel (0) target = $region21
  $region20: #{_lambda_.16} parent=0 // pred_region
    _
  $region21: #{_lambda_.16} parent=0 // pred_fallthru
    _
  // Predicated region
  $region22: #{_lambda_.16} parent=0 // pred_check
    _
  $region23: #{_lambda_.16} parent=0 // pred_check_branch
    %55 = sbr.rel (0) target = $region25
  $region24: #{_lambda_.16} parent=0 // pred_region
    _
  $region25: #{_lambda_.16} parent=0 // pred_fallthru
    _
  // Predicated region
  $region26: #{_lambda_.16} parent=0 // pred_check
    _
  $region27: #{_lambda_.16} parent=0 // pred_check_branch
    %57 = sbr.rel (0) target = $region29
  $region28: #{_lambda_.16} parent=0 // pred_region
    _
  $region29: #{_lambda_.16} parent=0 // pred_fallthru
    _
  // Predicated region
  $region30: #{_lambda_.16} parent=0 // pred_check
    _
  $region31: #{_lambda_.16} parent=0 // pred_check_branch
    %59 = sbr.rel (0) target = $region33
  $region32: #{_lambda_.16} parent=0 // pred_region
    _
  $region33: #{_lambda_.16} parent=0 // pred_fallthru
    _

// kernel: _lambda_.17
$region0: #{_lambda_.17}
  #allocation0 [shape = 'u32[]', space=smem, size = 0x4, offset = 0x4, fixed_abs, tag = 'smem constant byte address 0x4 - core index']
  #allocation1 [shape = 'u32[144,128]{1,0:T(1,128)}', space=vmem, size = 0x12000, scoped, tag = 'internal scratch']
  #allocation2 [shape = 'f32[32,32]{1,0:T(8,128)}', space=vmem, size = 0x4000, scoped, tag = 'scratch operand']
  %s0 = inlined_call_operand.vmem [shape: bf16[32,4], index: 0, kind: input, shape index: {}]
  %s1 = inlined_call_operand.vmem [shape: bf16[4,32], index: 1, kind: input, shape index: {}]
  %s2 = inlined_call_operand.vmem [shape: f32[1,32], index: 2, kind: input, shape index: {}]
  %s3 = inlined_call_operand.vmem [shape: f32[32,32], index: 3, kind: output, shape index: {}]
  %s4 = sld [smem:[#allocation0]]
  $region30: #{_lambda_.17} parent=0
    _
  %s6 = ssub.s32 1, %s4
  %s7 = scalar_select 0, %s6, %s4
  // Predicated region
  $region2: #{_lambda_.17} parent=0 // pred_check
    _
  $region3: #{_lambda_.17} parent=0 // pred_check_branch
    %9 = sbr.rel (0) target = $region5
  $region4: #{_lambda_.17} parent=0 // pred_region
    _
  $region5: #{_lambda_.17} parent=0 // pred_fallthru
    _
  // Predicated region
  $region6: #{_lambda_.17} parent=0 // pred_check
    _
  $region7: #{_lambda_.17} parent=0 // pred_check_branch
    %11 = sbr.rel (0) target = $region9
  $region8: #{_lambda_.17} parent=0 // pred_region
    _
  $region9: #{_lambda_.17} parent=0 // pred_fallthru
    _
  // Predicated region
  $region10: #{_lambda_.17} parent=0 // pred_check
    _
  $region11: #{_lambda_.17} parent=0 // pred_check_branch
    %13 = sbr.rel (0) target = $region13
  $region12: #{_lambda_.17} parent=0 // pred_region
    _
  $region13: #{_lambda_.17} parent=0 // pred_fallthru
    _
  %p15 = scmp.eq.s32.totalorder 0, 0
  // Predicated region
  $region14: #{_lambda_.17} parent=0 // pred_check
    %p16 = pneg %p15
  $region15: #{_lambda_.17} parent=0 // pred_check_branch
    %18 = sbr.rel (%p16) target = $region17
  $region16: #{_lambda_.17} parent=0 // pred_region
    %vm19 = vcmask 261120
    %20 = vst.msk [vmem:[#allocation2] sm:$0xff] %vm19, 0.0
    %21 = vst.msk [vmem:[#allocation2 + $0x8] sm:$0xff] %vm19, 0.0
    %22 = vst.msk [vmem:[#allocation2 + $0x10] sm:$0xff] %vm19, 0.0
    %23 = vst.msk [vmem:[#allocation2 + $0x18] sm:$0xff] %vm19, 0.0
  $region17: #{_lambda_.17} parent=0 // pred_fallthru
    _
  %v24 = vld [vmem:[#allocation2] sm:$0xff]
  %v25 = vld [vmem:[#allocation2 + $0x8] sm:$0xff]
  %v26 = vld [vmem:[#allocation2 + $0x10] sm:$0xff]
  %v27 = vld [vmem:[#allocation2 + $0x18] sm:$0xff]
  %v28 = vld [vmem:[%s0] sm:$0xf]
  %v29 = vld [vmem:[%s0 + $0x4] sm:$0xf]
  %v30 = vld [vmem:[%s0 + $0x8] sm:$0xf]
  %v31 = vld [vmem:[%s0 + $0xc] sm:$0xf]
  %v32 = vld [vmem:[%s1] sm:$0x3]
  %v37 = vunpack.c.l.b16 %v28
  %v38 = vunpack.c.l.b16 %v29
  %v39 = vunpack.c.l.b16 %v30
  %v40 = vunpack.c.l.b16 %v31
  %v41 = vpack.c.b16 %v38, %v37
  %v42 = vpack.c.b16 %v40, %v39
  %vm43 = vcmask 31744
  %v45 = vsel %vm43, %v41, 0
  %v48 = vsel %vm43, %v42, 0
  %vm50 = vcmask 1041408
  %v52 = vsel %vm50, %v32, 0
  %54 = vmatprep.subr.bf16.mxu0 0
  %55 = vmatpush1.bf16.msra.mxu0 %v52
  %56 = vmatprep.subr.bf16.mxu0 0
  %57 = vmatpush1.bf16.msra.mxu0 0
  %58 = vmatprep.subr.bf16.mxu0 0
  %59 = vmatpush1.bf16.msra.mxu0 0
  %60 = vmatprep.subr.bf16.mxu0 0
  %61 = vmatpush1.bf16.msra.mxu0 0
  %62 = vmatprep.subr.bf16.mxu0 0
  %63 = vmatpush1.bf16.msra.mxu0 0
  %64 = vmatprep.subr.bf16.mxu0 0
  %65 = vmatpush1.bf16.msra.mxu0 0
  %66 = vmatprep.subr.bf16.mxu0 0
  %67 = vmatpush1.bf16.msra.mxu0 0
  %68 = vmatprep.subr.bf16.mxu0 0
  %69 = vmatpush1.bf16.msra.mxu0 0
  %70 = vmatprep.subr.bf16.mxu0 0
  %71 = vmatpush1.bf16.msra.mxu0 0
  %72 = vmatprep.subr.bf16.mxu0 0
  %73 = vmatpush1.bf16.msra.mxu0 0
  %74 = vmatprep.subr.bf16.mxu0 0
  %75 = vmatpush1.bf16.msra.mxu0 0
  %76 = vmatprep.subr.bf16.mxu0 0
  %77 = vmatpush1.bf16.msra.mxu0 0
  %78 = vmatprep.subr.bf16.mxu0 0
  %79 = vmatpush1.bf16.msra.mxu0 0
  %80 = vmatprep.subr.bf16.mxu0 0
  %81 = vmatpush1.bf16.msra.mxu0 0
  %82 = vmatprep.subr.bf16.mxu0 0
  %83 = vmatpush1.bf16.msra.mxu0 0
  %84 = vmatprep.subr.bf16.mxu0 0
  %85 = vmatpush1.bf16.msra.mxu0 0
  %86 = vmatprep.mubr.bf16.mxu0 0
  %87 = vmatmul.mubr.bf16.gmra.mrb[0].mxu0 %v45
  %v88 = vpop.f32.mrb[0].mxu0
  %v89 = vadd.f32 0.0, %v88
  %v90 = vpop.f32.mrb[0].mxu0
  %v91 = vpop.f32.mrb[0].mxu0
  %v92 = vadd.f32 0.0, %v91
  %v93 = vpop.f32.mrb[0].mxu0
  %94 = vmatprep.mubr.bf16.mxu0 0
  %95 = vmatmul.mubr.bf16.gmra.mrb[0].mxu0 %v48
  %v96 = vpop.f32.mrb[0].mxu0
  %v97 = vadd.f32 0.0, %v96
  %v98 = vpop.f32.mrb[0].mxu0
  %v99 = vpop.f32.mrb[0].mxu0
  %v100 = vadd.f32 0.0, %v99
  %v101 = vpop.f32.mrb[0].mxu0
  %102 = vdwg.mxu0
  %v103 = vadd.f32 %v24, %v89
  %v104 = vadd.f32 %v25, %v92
  %v105 = vadd.f32 %v26, %v97
  %v106 = vadd.f32 %v27, %v100
  %vm107 = vcmask 261120
  %108 = vst.msk [vmem:[#allocation2] sm:$0xff] %vm107, %v103
  %109 = vst.msk [vmem:[#allocation2 + $0x8] sm:$0xff] %vm107, %v104
  %110 = vst.msk [vmem:[#allocation2 + $0x10] sm:$0xff] %vm107, %v105
  %111 = vst.msk [vmem:[#allocation2 + $0x18] sm:$0xff] %vm107, %v106
  // Predicated region
  $region18: #{_lambda_.17} parent=0 // pred_check
    %p112 = pneg %p15
  $region19: #{_lambda_.17} parent=0 // pred_check_branch
    %114 = sbr.rel (%p112) target = $region21
  $region20: #{_lambda_.17} parent=0 // pred_region
    %v115 = vld [vmem:[#allocation2] sm:$0xff]
    %v116 = vld [vmem:[#allocation2 + $0x8] sm:$0xff]
    %v117 = vld [vmem:[#allocation2 + $0x10] sm:$0xff]
    %v118 = vld [vmem:[#allocation2 + $0x18] sm:$0xff]
    %v119 = vld [vmem:[%s2] sm:$0x1]
    %v121 = vlaneseq
    %v122 = vshrl.u32 %v121, 7
    %v123 = vsub.s32 0, %v122
    %v124 = vrot.slane %v119, %v123
    %v126 = vadd.f32 %v115, %v124
    %v127 = vadd.f32 %v116, %v124
    %v128 = vadd.f32 %v117, %v124
    %v129 = vadd.f32 %v118, %v124
    %130 = vst.msk [vmem:[%s3] sm:$0xff] %vm107, %v126
    %131 = vst.msk [vmem:[%s3 + $0x8] sm:$0xff] %vm107, %v127
    %132 = vst.msk [vmem:[%s3 + $0x10] sm:$0xff] %vm107, %v128
    %133 = vst.msk [vmem:[%s3 + $0x18] sm:$0xff] %vm107, %v129
  $region21: #{_lambda_.17} parent=0 // pred_fallthru
    _
  // Predicated region
  $region22: #{_lambda_.17} parent=0 // pred_check
    _
  $region23: #{_lambda_.17} parent=0 // pred_check_branch
    %135 = sbr.rel (0) target = $region25
  $region24: #{_lambda_.17} parent=0 // pred_region
    _
  $region25: #{_lambda_.17} parent=0 // pred_fallthru
    _
  // Predicated region
  $region26: #{_lambda_.17} parent=0 // pred_check
    _
  $region27: #{_lambda_.17} parent=0 // pred_check_branch
    %137 = sbr.rel (0) target = $region29
  $region28: #{_lambda_.17} parent=0 // pred_region
    _
  $region29: #{_lambda_.17} parent=0 // pred_fallthru
    _

// kernel: _lambda_.19
$region0: #{_lambda_.19}
  #allocation0 [shape = 'u32[]', space=smem, size = 0x4, offset = 0x4, fixed_abs, tag = 'smem constant byte address 0x4 - core index']
  #allocation1 [shape = 'u32[144,128]{1,0:T(1,128)}', space=vmem, size = 0x12000, scoped, tag = 'internal scratch']
  #allocation2 [shape = 'f32[32,96]{1,0:T(8,128)}', space=vmem, size = 0x4000, scoped, tag = 'scratch operand']
  %s0 = inlined_call_operand.vmem [shape: bf16[32,32], index: 0, kind: input, shape index: {}]
  %s1 = inlined_call_operand.vmem [shape: bf16[32,96], index: 1, kind: input, shape index: {}]
  %s2 = inlined_call_operand.vmem [shape: f32[1,96], index: 2, kind: input, shape index: {}]
  %s3 = inlined_call_operand.vmem [shape: f32[32,96], index: 3, kind: output, shape index: {}]
  %s4 = sld [smem:[#allocation0]]
  $region30: #{_lambda_.19} parent=0
    _
  %s6 = ssub.s32 1, %s4
  %s7 = scalar_select 0, %s6, %s4
  // Predicated region
  $region2: #{_lambda_.19} parent=0 // pred_check
    _
  $region3: #{_lambda_.19} parent=0 // pred_check_branch
    %9 = sbr.rel (0) target = $region5
  $region4: #{_lambda_.19} parent=0 // pred_region
    _
  $region5: #{_lambda_.19} parent=0 // pred_fallthru
    _
  // Predicated region
  $region6: #{_lambda_.19} parent=0 // pred_check
    _
  $region7: #{_lambda_.19} parent=0 // pred_check_branch
    %11 = sbr.rel (0) target = $region9
  $region8: #{_lambda_.19} parent=0 // pred_region
    _
  $region9: #{_lambda_.19} parent=0 // pred_fallthru
    _
  // Predicated region
  $region10: #{_lambda_.19} parent=0 // pred_check
    _
  $region11: #{_lambda_.19} parent=0 // pred_check_branch
    %13 = sbr.rel (0) target = $region13
  $region12: #{_lambda_.19} parent=0 // pred_region
    _
  $region13: #{_lambda_.19} parent=0 // pred_fallthru
    _
  %p15 = scmp.eq.s32.totalorder 0, 0
  // Predicated region
  $region14: #{_lambda_.19} parent=0 // pred_check
    %p16 = pneg %p15
  $region15: #{_lambda_.19} parent=0 // pred_check_branch
    %18 = sbr.rel (%p16) target = $region17
  $region16: #{_lambda_.19} parent=0 // pred_region
    %vm19 = vcmask 785408
    %20 = vst.msk [vmem:[#allocation2] sm:$0xff] %vm19, 0.0
    %21 = vst.msk [vmem:[#allocation2 + $0x8] sm:$0xff] %vm19, 0.0
    %22 = vst.msk [vmem:[#allocation2 + $0x10] sm:$0xff] %vm19, 0.0
    %23 = vst.msk [vmem:[#allocation2 + $0x18] sm:$0xff] %vm19, 0.0
  $region17: #{_lambda_.19} parent=0 // pred_fallthru
    _
  %v24 = vld [vmem:[#allocation2] sm:$0xff]
  %v25 = vld [vmem:[#allocation2 + $0x8] sm:$0xff]
  %v26 = vld [vmem:[#allocation2 + $0x10] sm:$0xff]
  %v27 = vld [vmem:[#allocation2 + $0x18] sm:$0xff]
  %v28 = vld [vmem:[%s0] sm:$0xf]
  %v29 = vld [vmem:[%s0 + $0x4] sm:$0xf]
  %v30 = vld [vmem:[%s0 + $0x8] sm:$0xf]
  %v31 = vld [vmem:[%s0 + $0xc] sm:$0xf]
  %v32 = vld [vmem:[%s1] sm:$0xf]
  %v33 = vld [vmem:[%s1 + $0x4] sm:$0xf]
  %v34 = vld [vmem:[%s1 + $0x8] sm:$0xf]
  %v35 = vld [vmem:[%s1 + $0xc] sm:$0xf]
  %v40 = vunpack.c.l.b16 %v28
  %v41 = vunpack.c.l.b16 %v29
  %v42 = vunpack.c.l.b16 %v30
  %v43 = vunpack.c.l.b16 %v31
  %v44 = vpack.c.b16 %v41, %v40
  %v45 = vpack.c.b16 %v43, %v42
  %v50 = vunpack.c.l.b16 %v32
  %v51 = vunpack.c.l.b16 %v33
  %v52 = vunpack.c.l.b16 %v34
  %v53 = vunpack.c.l.b16 %v35
  %v54 = vpack.c.b16 %v51, %v50
  %v55 = vpack.c.b16 %v53, %v52
  %vm58 = vcmask 261120
  %v60 = vsel %vm58, %v44, 0
  %v63 = vsel %vm58, %v45, 0
  %65 = vmatprep.subr.bf16.mxu0 0
  %66 = vmatpush1.bf16.msra.mxu0 %v54
  %67 = vmatprep.subr.bf16.mxu0 0
  %68 = vmatpush1.bf16.msra.mxu0 %v55
  %69 = vmatprep.subr.bf16.mxu0 0
  %70 = vmatpush1.bf16.msra.mxu0 0
  %71 = vmatprep.subr.bf16.mxu0 0
  %72 = vmatpush1.bf16.msra.mxu0 0
  %73 = vmatprep.subr.bf16.mxu0 0
  %74 = vmatpush1.bf16.msra.mxu0 0
  %75 = vmatprep.subr.bf16.mxu0 0
  %76 = vmatpush1.bf16.msra.mxu0 0
  %77 = vmatprep.subr.bf16.mxu0 0
  %78 = vmatpush1.bf16.msra.mxu0 0
  %79 = vmatprep.subr.bf16.mxu0 0
  %80 = vmatpush1.bf16.msra.mxu0 0
  %81 = vmatprep.subr.bf16.mxu0 0
  %82 = vmatpush1.bf16.msra.mxu0 0
  %83 = vmatprep.subr.bf16.mxu0 0
  %84 = vmatpush1.bf16.msra.mxu0 0
  %85 = vmatprep.subr.bf16.mxu0 0
  %86 = vmatpush1.bf16.msra.mxu0 0
  %87 = vmatprep.subr.bf16.mxu0 0
  %88 = vmatpush1.bf16.msra.mxu0 0
  %89 = vmatprep.subr.bf16.mxu0 0
  %90 = vmatpush1.bf16.msra.mxu0 0
  %91 = vmatprep.subr.bf16.mxu0 0
  %92 = vmatpush1.bf16.msra.mxu0 0
  %93 = vmatprep.subr.bf16.mxu0 0
  %94 = vmatpush1.bf16.msra.mxu0 0
  %95 = vmatprep.subr.bf16.mxu0 0
  %96 = vmatpush1.bf16.msra.mxu0 0
  %97 = vmatprep.mubr.bf16.mxu0 0
  %98 = vmatmul.mubr.bf16.gmra.mrb[0].mxu0 %v60
  %v99 = vpop.f32.mrb[0].mxu0
  %v100 = vadd.f32 0.0, %v99
  %v101 = vpop.f32.mrb[0].mxu0
  %v102 = vpop.f32.mrb[0].mxu0
  %v103 = vadd.f32 0.0, %v102
  %v104 = vpop.f32.mrb[0].mxu0
  %105 = vmatprep.mubr.bf16.mxu0 0
  %106 = vmatmul.mubr.bf16.gmra.mrb[0].mxu0 %v63
  %v107 = vpop.f32.mrb[0].mxu0
  %v108 = vadd.f32 0.0, %v107
  %v109 = vpop.f32.mrb[0].mxu0
  %v110 = vpop.f32.mrb[0].mxu0
  %v111 = vadd.f32 0.0, %v110
  %v112 = vpop.f32.mrb[0].mxu0
  %113 = vdwg.mxu0
  %v114 = vadd.f32 %v24, %v100
  %v115 = vadd.f32 %v25, %v103
  %v116 = vadd.f32 %v26, %v108
  %v117 = vadd.f32 %v27, %v111
  %vm118 = vcmask 785408
  %119 = vst.msk [vmem:[#allocation2] sm:$0xff] %vm118, %v114
  %120 = vst.msk [vmem:[#allocation2 + $0x8] sm:$0xff] %vm118, %v115
  %121 = vst.msk [vmem:[#allocation2 + $0x10] sm:$0xff] %vm118, %v116
  %122 = vst.msk [vmem:[#allocation2 + $0x18] sm:$0xff] %vm118, %v117
  // Predicated region
  $region18: #{_lambda_.19} parent=0 // pred_check
    %p123 = pneg %p15
  $region19: #{_lambda_.19} parent=0 // pred_check_branch
    %125 = sbr.rel (%p123) target = $region21
  $region20: #{_lambda_.19} parent=0 // pred_region
    %v126 = vld [vmem:[#allocation2] sm:$0xff]
    %v127 = vld [vmem:[#allocation2 + $0x8] sm:$0xff]
    %v128 = vld [vmem:[#allocation2 + $0x10] sm:$0xff]
    %v129 = vld [vmem:[#allocation2 + $0x18] sm:$0xff]
    %v130 = vld [vmem:[%s2] sm:$0x1]
    %v132 = vlaneseq
    %v133 = vshrl.u32 %v132, 7
    %v134 = vsub.s32 0, %v133
    %v135 = vrot.slane %v130, %v134
    %v137 = vadd.f32 %v126, %v135
    %v138 = vadd.f32 %v127, %v135
    %v139 = vadd.f32 %v128, %v135
    %v140 = vadd.f32 %v129, %v135
    %141 = vst.msk [vmem:[%s3] sm:$0xff] %vm118, %v137
    %142 = vst.msk [vmem:[%s3 + $0x8] sm:$0xff] %vm118, %v138
    %143 = vst.msk [vmem:[%s3 + $0x10] sm:$0xff] %vm118, %v139
    %144 = vst.msk [vmem:[%s3 + $0x18] sm:$0xff] %vm118, %v140
  $region21: #{_lambda_.19} parent=0 // pred_fallthru
    _
  // Predicated region
  $region22: #{_lambda_.19} parent=0 // pred_check
    _
  $region23: #{_lambda_.19} parent=0 // pred_check_branch
    %146 = sbr.rel (0) target = $region25
  $region24: #{_lambda_.19} parent=0 // pred_region
    _
  $region25: #{_lambda_.19} parent=0 // pred_fallthru
    _
  // Predicated region
  $region26: #{_lambda_.19} parent=0 // pred_check
    _
  $region27: #{_lambda_.19} parent=0 // pred_check_branch
    %148 = sbr.rel (0) target = $region29
  $region28: #{_lambda_.19} parent=0 // pred_region
    _
  $region29: #{_lambda_.19} parent=0 // pred_fallthru
    _

// kernel: _lambda_.21
$region0: #{_lambda_.21}
  #allocation0 [shape = 'u32[]', space=smem, size = 0x4, offset = 0x4, fixed_abs, tag = 'smem constant byte address 0x4 - core index']
  #allocation1 [shape = 'u32[144,128]{1,0:T(1,128)}', space=vmem, size = 0x12000, scoped, tag = 'internal scratch']
  #allocation2 [shape = 'f32[32,32]{1,0:T(8,128)}', space=vmem, size = 0x4000, scoped, tag = 'scratch operand']
  %s0 = inlined_call_operand.vmem [shape: bf16[32,32], index: 0, kind: input, shape index: {}]
  %s1 = inlined_call_operand.vmem [shape: bf16[32,32], index: 1, kind: input, shape index: {}]
  %s2 = inlined_call_operand.vmem [shape: f32[1,32], index: 2, kind: input, shape index: {}]
  %s3 = inlined_call_operand.vmem [shape: f32[32,32], index: 3, kind: output, shape index: {}]
  %s4 = sld [smem:[#allocation0]]
  $region30: #{_lambda_.21} parent=0
    _
  %s6 = ssub.s32 1, %s4
  %s7 = scalar_select 0, %s6, %s4
  // Predicated region
  $region2: #{_lambda_.21} parent=0 // pred_check
    _
  $region3: #{_lambda_.21} parent=0 // pred_check_branch
    %9 = sbr.rel (0) target = $region5
  $region4: #{_lambda_.21} parent=0 // pred_region
    _
  $region5: #{_lambda_.21} parent=0 // pred_fallthru
    _
  // Predicated region
  $region6: #{_lambda_.21} parent=0 // pred_check
    _
  $region7: #{_lambda_.21} parent=0 // pred_check_branch
    %11 = sbr.rel (0) target = $region9
  $region8: #{_lambda_.21} parent=0 // pred_region
    _
  $region9: #{_lambda_.21} parent=0 // pred_fallthru
    _
  // Predicated region
  $region10: #{_lambda_.21} parent=0 // pred_check
    _
  $region11: #{_lambda_.21} parent=0 // pred_check_branch
    %13 = sbr.rel (0) target = $region13
  $region12: #{_lambda_.21} parent=0 // pred_region
    _
  $region13: #{_lambda_.21} parent=0 // pred_fallthru
    _
  %p15 = scmp.eq.s32.totalorder 0, 0
  // Predicated region
  $region14: #{_lambda_.21} parent=0 // pred_check
    %p16 = pneg %p15
  $region15: #{_lambda_.21} parent=0 // pred_check_branch
    %18 = sbr.rel (%p16) target = $region17
  $region16: #{_lambda_.21} parent=0 // pred_region
    %vm19 = vcmask 261120
    %20 = vst.msk [vmem:[#allocation2] sm:$0xff] %vm19, 0.0
    %21 = vst.msk [vmem:[#allocation2 + $0x8] sm:$0xff] %vm19, 0.0
    %22 = vst.msk [vmem:[#allocation2 + $0x10] sm:$0xff] %vm19, 0.0
    %23 = vst.msk [vmem:[#allocation2 + $0x18] sm:$0xff] %vm19, 0.0
  $region17: #{_lambda_.21} parent=0 // pred_fallthru
    _
  %v24 = vld [vmem:[#allocation2] sm:$0xff]
  %v25 = vld [vmem:[#allocation2 + $0x8] sm:$0xff]
  %v26 = vld [vmem:[#allocation2 + $0x10] sm:$0xff]
  %v27 = vld [vmem:[#allocation2 + $0x18] sm:$0xff]
  %v28 = vld [vmem:[%s0] sm:$0xf]
  %v29 = vld [vmem:[%s0 + $0x4] sm:$0xf]
  %v30 = vld [vmem:[%s0 + $0x8] sm:$0xf]
  %v31 = vld [vmem:[%s0 + $0xc] sm:$0xf]
  %v32 = vld [vmem:[%s1] sm:$0xf]
  %v33 = vld [vmem:[%s1 + $0x4] sm:$0xf]
  %v34 = vld [vmem:[%s1 + $0x8] sm:$0xf]
  %v35 = vld [vmem:[%s1 + $0xc] sm:$0xf]
  %v40 = vunpack.c.l.b16 %v28
  %v41 = vunpack.c.l.b16 %v29
  %v42 = vunpack.c.l.b16 %v30
  %v43 = vunpack.c.l.b16 %v31
  %v44 = vpack.c.b16 %v41, %v40
  %v45 = vpack.c.b16 %v43, %v42
  %v50 = vunpack.c.l.b16 %v32
  %v51 = vunpack.c.l.b16 %v33
  %v52 = vunpack.c.l.b16 %v34
  %v53 = vunpack.c.l.b16 %v35
  %v54 = vpack.c.b16 %v51, %v50
  %v55 = vpack.c.b16 %v53, %v52
  %vm58 = vcmask 261120
  %v60 = vsel %vm58, %v44, 0
  %v63 = vsel %vm58, %v45, 0
  %65 = vmatprep.subr.bf16.mxu0 0
  %66 = vmatpush1.bf16.msra.mxu0 %v54
  %67 = vmatprep.subr.bf16.mxu0 0
  %68 = vmatpush1.bf16.msra.mxu0 %v55
  %69 = vmatprep.subr.bf16.mxu0 0
  %70 = vmatpush1.bf16.msra.mxu0 0
  %71 = vmatprep.subr.bf16.mxu0 0
  %72 = vmatpush1.bf16.msra.mxu0 0
  %73 = vmatprep.subr.bf16.mxu0 0
  %74 = vmatpush1.bf16.msra.mxu0 0
  %75 = vmatprep.subr.bf16.mxu0 0
  %76 = vmatpush1.bf16.msra.mxu0 0
  %77 = vmatprep.subr.bf16.mxu0 0
  %78 = vmatpush1.bf16.msra.mxu0 0
  %79 = vmatprep.subr.bf16.mxu0 0
  %80 = vmatpush1.bf16.msra.mxu0 0
  %81 = vmatprep.subr.bf16.mxu0 0
  %82 = vmatpush1.bf16.msra.mxu0 0
  %83 = vmatprep.subr.bf16.mxu0 0
  %84 = vmatpush1.bf16.msra.mxu0 0
  %85 = vmatprep.subr.bf16.mxu0 0
  %86 = vmatpush1.bf16.msra.mxu0 0
  %87 = vmatprep.subr.bf16.mxu0 0
  %88 = vmatpush1.bf16.msra.mxu0 0
  %89 = vmatprep.subr.bf16.mxu0 0
  %90 = vmatpush1.bf16.msra.mxu0 0
  %91 = vmatprep.subr.bf16.mxu0 0
  %92 = vmatpush1.bf16.msra.mxu0 0
  %93 = vmatprep.subr.bf16.mxu0 0
  %94 = vmatpush1.bf16.msra.mxu0 0
  %95 = vmatprep.subr.bf16.mxu0 0
  %96 = vmatpush1.bf16.msra.mxu0 0
  %97 = vmatprep.mubr.bf16.mxu0 0
  %98 = vmatmul.mubr.bf16.gmra.mrb[0].mxu0 %v60
  %v99 = vpop.f32.mrb[0].mxu0
  %v100 = vadd.f32 0.0, %v99
  %v101 = vpop.f32.mrb[0].mxu0
  %v102 = vpop.f32.mrb[0].mxu0
  %v103 = vadd.f32 0.0, %v102
  %v104 = vpop.f32.mrb[0].mxu0
  %105 = vmatprep.mubr.bf16.mxu0 0
  %106 = vmatmul.mubr.bf16.gmra.mrb[0].mxu0 %v63
  %v107 = vpop.f32.mrb[0].mxu0
  %v108 = vadd.f32 0.0, %v107
  %v109 = vpop.f32.mrb[0].mxu0
  %v110 = vpop.f32.mrb[0].mxu0
  %v111 = vadd.f32 0.0, %v110
  %v112 = vpop.f32.mrb[0].mxu0
  %113 = vdwg.mxu0
  %v114 = vadd.f32 %v24, %v100
  %v115 = vadd.f32 %v25, %v103
  %v116 = vadd.f32 %v26, %v108
  %v117 = vadd.f32 %v27, %v111
  %118 = vst.msk [vmem:[#allocation2] sm:$0xff] %vm58, %v114
  %119 = vst.msk [vmem:[#allocation2 + $0x8] sm:$0xff] %vm58, %v115
  %120 = vst.msk [vmem:[#allocation2 + $0x10] sm:$0xff] %vm58, %v116
  %121 = vst.msk [vmem:[#allocation2 + $0x18] sm:$0xff] %vm58, %v117
  // Predicated region
  $region18: #{_lambda_.21} parent=0 // pred_check
    %p122 = pneg %p15
  $region19: #{_lambda_.21} parent=0 // pred_check_branch
    %124 = sbr.rel (%p122) target = $region21
  $region20: #{_lambda_.21} parent=0 // pred_region
    %v125 = vld [vmem:[#allocation2] sm:$0xff]
    %v126 = vld [vmem:[#allocation2 + $0x8] sm:$0xff]
    %v127 = vld [vmem:[#allocation2 + $0x10] sm:$0xff]
    %v128 = vld [vmem:[#allocation2 + $0x18] sm:$0xff]
    %v129 = vld [vmem:[%s2] sm:$0x1]
    %v131 = vlaneseq
    %v132 = vshrl.u32 %v131, 7
    %v133 = vsub.s32 0, %v132
    %v134 = vrot.slane %v129, %v133
    %v136 = vadd.f32 %v125, %v134
    %v137 = vadd.f32 %v126, %v134
    %v138 = vadd.f32 %v127, %v134
    %v139 = vadd.f32 %v128, %v134
    %140 = vst.msk [vmem:[%s3] sm:$0xff] %vm58, %v136
    %141 = vst.msk [vmem:[%s3 + $0x8] sm:$0xff] %vm58, %v137
    %142 = vst.msk [vmem:[%s3 + $0x10] sm:$0xff] %vm58, %v138
    %143 = vst.msk [vmem:[%s3 + $0x18] sm:$0xff] %vm58, %v139
  $region21: #{_lambda_.21} parent=0 // pred_fallthru
    _
  // Predicated region
  $region22: #{_lambda_.21} parent=0 // pred_check
    _
  $region23: #{_lambda_.21} parent=0 // pred_check_branch
    %145 = sbr.rel (0) target = $region25
  $region24: #{_lambda_.21} parent=0 // pred_region
    _
  $region25: #{_lambda_.21} parent=0 // pred_fallthru
    _
  // Predicated region
  $region26: #{_lambda_.21} parent=0 // pred_check
    _
  $region27: #{_lambda_.21} parent=0 // pred_check_branch
    %147 = sbr.rel (0) target = $region29
  $region28: #{_lambda_.21} parent=0 // pred_region
    _
  $region29: #{_lambda_.21} parent=0 // pred_fallthru
    _

// kernel: _lambda_.20
$region0: #{_lambda_.20}
  #allocation0 [shape = 'u32[]', space=smem, size = 0x4, offset = 0x4, fixed_abs, tag = 'smem constant byte address 0x4 - core index']
  #allocation1 [shape = 'u32[144,128]{1,0:T(1,128)}', space=vmem, size = 0x12000, scoped, tag = 'internal scratch']
  %s0 = inlined_call_operand.vmem [shape: f32[8,4,1], index: 0, kind: input, shape index: {}]
  %s1 = inlined_call_operand.vmem [shape: f32[8,1,4], index: 1, kind: input, shape index: {}]
  %s2 = inlined_call_operand.vmem [shape: bf16[8,4,4,8], index: 2, kind: input, shape index: {}]
  %s3 = inlined_call_operand.vmem [shape: bf16[8,4,4,8], index: 3, kind: input, shape index: {}]
  %s4 = inlined_call_operand.vmem [shape: bf16[8,4,4,8], index: 4, kind: input, shape index: {}]
  %s5 = inlined_call_operand.vmem [shape: f32[8,4,4,8], index: 5, kind: output, shape index: {}]
  %s6 = sld [smem:[#allocation0]]
  $region53: #{_lambda_.20} parent=0
    _
  %s8 = ssub.s32 1, %s6
  %s9 = scalar_select 0, %s8, %s6
  loop: start=0, step=1, limit=10
  $region2: #{_lambda_.20} parent=0 // loop_pre_header
    _
  $region3: #{_lambda_.20} parent=0 // loop_header
    %s11 = sphi 0, %s15
    %p12 = scmp.ge.s32.totalorder %s11, 10
    %s18 = sphi 0, %s30
    %s19 = sphi 0, %s26
    %s20 = sphi 0, %s18
    %s21 = sphi 0, %s19
    %s22 = sphi 0, %s20
    %s23 = sphi 0, %s21
    %s33 = sphi 0, %s35
    %s36 = sphi 0, %s33
    %s37 = sphi 0, %s36
    %s53 = sphi 0, %s37
    %s59 = sphi 0, %s61
    %s62 = sphi 0, %s59
    %s63 = sphi 0, %s62
    %s79 = sphi 0, %s63
    %s87 = sphi 0, %s89
    %s90 = sphi 0, %s87
    %s91 = sphi 0, %s90
    %s107 = sphi 0, %s91
    %s115 = sphi 0, %s117
    %s118 = sphi 0, %s115
    %s119 = sphi 0, %s118
    %s135 = sphi 0, %s119
    %s143 = sphi 0, %s145
    %s146 = sphi 0, %s143
    %s147 = sphi 0, %s146
    %s163 = sphi 0, %s147
    %s171 = sphi 0, %s173
    %s174 = sphi 0, %s171
    %s175 = sphi 0, %s174
    %s191 = sphi 0, %s175
  $region4: #{_lambda_.20} parent=0 // loop_header_branch
    %14 = sbr.rel (%p12) target = $region8
  $region5: #{_lambda_.20} parent=0 // loop_body
    %s16 = ssub.s32 %s11, 1
    %s17 = ssub.s32 %s11, 2
    %s24 = sadd.s32 1, %s19
    %p25 = scmp.ge.s32.totalorder %s24, 1
    %s26 = scalar_select %p25, 0, %s24
    %s27 = sadd.s32 1, %s18
    %s28 = scalar_select %p25, %s27, %s18
    %p29 = scmp.ge.s32.totalorder %s28, 8
    %s30 = scalar_select %p29, 0, %s28
    %s31 = ssub.s32 %s18, %s30
    %p32 = scmp.eq.s32.totalorder %s31, 0
    %s34 = sadd.s32 %s33, 1
    %s35 = scalar_select %p32, %s33, %s34
    %p38 = pneg %p32
    %p39 = scmp.eq.s32.totalorder %s11, 7
    %p40 = por %p38, %p39
    %p41 = scmp.ne.s32.totalorder %s33, %s36
    %p42 = scmp.eq.s32.totalorder %s11, 0
    %p43 = por %p41, %p42
    %p44 = scmp.ne.s32.totalorder %s33, %s36
    %p45 = scmp.eq.s32.totalorder %s16, 7
    %p46 = por %p44, %p45
    %p47 = scmp.ne.s32.totalorder %s36, %s37
    %p48 = scmp.eq.s32.totalorder %s16, 0
    %p49 = por %p47, %p48
    %p50 = scmp.ne.s32.totalorder %s36, %s37
    %p51 = scmp.eq.s32.totalorder %s17, 7
    %p52 = por %p50, %p51
    %p54 = scmp.ne.s32.totalorder %s37, %s53
    %p55 = scmp.eq.s32.totalorder %s17, 0
    %p56 = por %p54, %p55
    %s57 = ssub.s32 %s18, %s30
    %p58 = scmp.eq.s32.totalorder %s57, 0
    %s60 = sadd.s32 %s59, 1
    %s61 = scalar_select %p58, %s59, %s60
    %p64 = pneg %p58
    %p65 = scmp.eq.s32.totalorder %s11, 7
    %p66 = por %p64, %p65
    %p67 = scmp.ne.s32.totalorder %s59, %s62
    %p68 = scmp.eq.s32.totalorder %s11, 0
    %p69 = por %p67, %p68
    %p70 = scmp.ne.s32.totalorder %s59, %s62
    %p71 = scmp.eq.s32.totalorder %s16, 7
    %p72 = por %p70, %p71
    %p73 = scmp.ne.s32.totalorder %s62, %s63
    %p74 = scmp.eq.s32.totalorder %s16, 0
    %p75 = por %p73, %p74
    %p76 = scmp.ne.s32.totalorder %s62, %s63
    %p77 = scmp.eq.s32.totalorder %s17, 7
    %p78 = por %p76, %p77
    %p80 = scmp.ne.s32.totalorder %s63, %s79
    %p81 = scmp.eq.s32.totalorder %s17, 0
    %p82 = por %p80, %p81
    %s83 = ssub.s32 %s18, %s30
    %s84 = ssub.s32 %s19, %s26
    %s85 = sor.u32 %s83, %s84
    %p86 = scmp.eq.s32.totalorder %s85, 0
    %s88 = sadd.s32 %s87, 1
    %s89 = scalar_select %p86, %s87, %s88
    %p92 = pneg %p86
    %p93 = scmp.eq.s32.totalorder %s11, 7
    %p94 = por %p92, %p93
    %p95 = scmp.ne.s32.totalorder %s87, %s90
    %p96 = scmp.eq.s32.totalorder %s11, 0
    %p97 = por %p95, %p96
    %p98 = scmp.ne.s32.totalorder %s87, %s90
    %p99 = scmp.eq.s32.totalorder %s16, 7
    %p100 = por %p98, %p99
    %p101 = scmp.ne.s32.totalorder %s90, %s91
    %p102 = scmp.eq.s32.totalorder %s16, 0
    %p103 = por %p101, %p102
    %p104 = scmp.ne.s32.totalorder %s90, %s91
    %p105 = scmp.eq.s32.totalorder %s17, 7
    %p106 = por %p104, %p105
    %p108 = scmp.ne.s32.totalorder %s91, %s107
    %p109 = scmp.eq.s32.totalorder %s17, 0
    %p110 = por %p108, %p109
    %s111 = ssub.s32 %s18, %s30
    %s112 = ssub.s32 %s19, %s26
    %s113 = sor.u32 %s111, %s112
    %p114 = scmp.eq.s32.totalorder %s113, 0
    %s116 = sadd.s32 %s115, 1
    %s117 = scalar_select %p114, %s115, %s116
    %p120 = pneg %p114
    %p121 = scmp.eq.s32.totalorder %s11, 7
    %p122 = por %p120, %p121
    %p123 = scmp.ne.s32.totalorder %s115, %s118
    %p124 = scmp.eq.s32.totalorder %s11, 0
    %p125 = por %p123, %p124
    %p126 = scmp.ne.s32.totalorder %s115, %s118
    %p127 = scmp.eq.s32.totalorder %s16, 7
    %p128 = por %p126, %p127
    %p129 = scmp.ne.s32.totalorder %s118, %s119
    %p130 = scmp.eq.s32.totalorder %s16, 0
    %p131 = por %p129, %p130
    %p132 = scmp.ne.s32.totalorder %s118, %s119
    %p133 = scmp.eq.s32.totalorder %s17, 7
    %p134 = por %p132, %p133
    %p136 = scmp.ne.s32.totalorder %s119, %s135
    %p137 = scmp.eq.s32.totalorder %s17, 0
    %p138 = por %p136, %p137
    %s139 = ssub.s32 %s18, %s30
    %s140 = ssub.s32 %s19, %s26
    %s141 = sor.u32 %s139, %s140
    %p142 = scmp.eq.s32.totalorder %s141, 0
    %s144 = sadd.s32 %s143, 1
    %s145 = scalar_select %p142, %s143, %s144
    %p148 = pneg %p142
    %p149 = scmp.eq.s32.totalorder %s11, 7
    %p150 = por %p148, %p149
    %p151 = scmp.ne.s32.totalorder %s143, %s146
    %p152 = scmp.eq.s32.totalorder %s11, 0
    %p153 = por %p151, %p152
    %p154 = scmp.ne.s32.totalorder %s143, %s146
    %p155 = scmp.eq.s32.totalorder %s16, 7
    %p156 = por %p154, %p155
    %p157 = scmp.ne.s32.totalorder %s146, %s147
    %p158 = scmp.eq.s32.totalorder %s16, 0
    %p159 = por %p157, %p158
    %p160 = scmp.ne.s32.totalorder %s146, %s147
    %p161 = scmp.eq.s32.totalorder %s17, 7
    %p162 = por %p160, %p161
    %p164 = scmp.ne.s32.totalorder %s147, %s163
    %p165 = scmp.eq.s32.totalorder %s17, 0
    %p166 = por %p164, %p165
    %s167 = ssub.s32 %s18, %s30
    %s168 = ssub.s32 %s19, %s26
    %s169 = sor.u32 %s167, %s168
    %p170 = scmp.eq.s32.totalorder %s169, 0
    %s172 = sadd.s32 %s171, 1
    %s173 = scalar_select %p170, %s171, %s172
    %p176 = pneg %p170
    %p177 = scmp.eq.s32.totalorder %s11, 7
    %p178 = por %p176, %p177
    %p179 = scmp.ne.s32.totalorder %s171, %s174
    %p180 = scmp.eq.s32.totalorder %s11, 0
    %p181 = por %p179, %p180
    %p182 = scmp.ne.s32.totalorder %s171, %s174
    %p183 = scmp.eq.s32.totalorder %s16, 7
    %p184 = por %p182, %p183
    %p185 = scmp.ne.s32.totalorder %s174, %s175
    %p186 = scmp.eq.s32.totalorder %s16, 0
    %p187 = por %p185, %p186
    %p188 = scmp.ne.s32.totalorder %s174, %s175
    %p189 = scmp.eq.s32.totalorder %s17, 7
    %p190 = por %p188, %p189
    %p192 = scmp.ne.s32.totalorder %s175, %s191
    %p193 = scmp.eq.s32.totalorder %s17, 0
    %p194 = por %p192, %p193
    %p195 = scmp.le.s32.totalorder 1, %s11
    %p196 = scmp.lt.s32.totalorder %s11, 9
    %p197 = pnand %p195, %p196
    %p198 = pneg %p197
    // Predicated region
    $region9: #{_lambda_.20} parent=5 // pred_check
      _
    $region10: #{_lambda_.20} parent=5 // pred_check_branch
      %200 = sbr.rel (%p197) target = $region12
    $region11: #{_lambda_.20} parent=5 // pred_region
      %s201 = ssub.s32 %s11, 1
    $region12: #{_lambda_.20} parent=5 // pred_fallthru
      _
    %p202 = scmp.lt.s32.totalorder %s11, 8
    // Predicated region
    $region13: #{_lambda_.20} parent=5 // pred_check
      %p203 = pneg %p202
    $region14: #{_lambda_.20} parent=5 // pred_check_branch
      %205 = sbr.rel (%p203) target = $region16
    $region15: #{_lambda_.20} parent=5 // pred_region
      // Predicated region
      $region17: #{_lambda_.20} parent=15 // pred_check
        %p206 = pneg %p43
      $region18: #{_lambda_.20} parent=15 // pred_check_branch
        %208 = sbr.rel (%p206) target = $region20
      $region19: #{_lambda_.20} parent=15 // pred_region
        %p209 = scmp.lt.s32.totalorder %s18, 7
        %s210 = scalar_select %p209, %s18, 7
        %s211 = smul.addr %s210, 4
        %s212 = scalar_lea.vmem %s0, %s211
      $region20: #{_lambda_.20} parent=15 // pred_fallthru
        _
      // Predicated region
      $region21: #{_lambda_.20} parent=15 // pred_check
        %p213 = pneg %p69
      $region22: #{_lambda_.20} parent=15 // pred_check_branch
        %215 = sbr.rel (%p213) target = $region24
      $region23: #{_lambda_.20} parent=15 // pred_region
        %p216 = scmp.lt.s32.totalorder %s18, 7
        %s217 = scalar_select %p216, %s18, 7
        %s218 = scalar_lea.vmem %s1, %s217
      $region24: #{_lambda_.20} parent=15 // pred_fallthru
        _
      // Predicated region
      $region25: #{_lambda_.20} parent=15 // pred_check
        %p219 = pneg %p97
      $region26: #{_lambda_.20} parent=15 // pred_check_branch
        %221 = sbr.rel (%p219) target = $region28
      $region27: #{_lambda_.20} parent=15 // pred_region
        %s222 = smul.u32 4, %s19
        %p223 = scmp.lt.s32.totalorder %s18, 7
        %s224 = scalar_select %p223, %s18, 7
        %p225 = scmp.lt.s32.totalorder %s222, 3
        %s226 = scalar_select %p225, %s222, 3
        %s227 = smul.addr %s224, 4
        %s228 = sadd.s32 %s226, %s227
        %s229 = smul.addr %s228, 2
        %s230 = scalar_lea.vmem %s2, %s229
        %s231 = smul.u32 4, %s19
      $region28: #{_lambda_.20} parent=15 // pred_fallthru
        _
      // Predicated region
      $region29: #{_lambda_.20} parent=15 // pred_check
        %p232 = pneg %p125
      $region30: #{_lambda_.20} parent=15 // pred_check_branch
        %234 = sbr.rel (%p232) target = $region32
      $region31: #{_lambda_.20} parent=15 // pred_region
        %s235 = smul.u32 4, %s19
        %p236 = scmp.lt.s32.totalorder %s18, 7
        %s237 = scalar_select %p236, %s18, 7
        %p238 = scmp.lt.s32.totalorder %s235, 3
        %s239 = scalar_select %p238, %s235, 3
        %s240 = smul.addr %s237, 4
        %s241 = sadd.s32 %s239, %s240
        %s242 = smul.addr %s241, 2
        %s243 = scalar_lea.vmem %s3, %s242
        %s244 = smul.u32 4, %s19
      $region32: #{_lambda_.20} parent=15 // pred_fallthru
        _
      // Predicated region
      $region33: #{_lambda_.20} parent=15 // pred_check
        %p245 = pneg %p153
      $region34: #{_lambda_.20} parent=15 // pred_check_branch
        %247 = sbr.rel (%p245) target = $region36
      $region35: #{_lambda_.20} parent=15 // pred_region
        %s248 = smul.u32 4, %s19
        %p249 = scmp.lt.s32.totalorder %s18, 7
        %s250 = scalar_select %p249, %s18, 7
        %p251 = scmp.lt.s32.totalorder %s248, 3
        %s252 = scalar_select %p251, %s248, 3
        %s253 = smul.addr %s250, 4
        %s254 = sadd.s32 %s252, %s253
        %s255 = smul.addr %s254, 2
        %s256 = scalar_lea.vmem %s4, %s255
        %s257 = smul.u32 4, %s19
      $region36: #{_lambda_.20} parent=15 // pred_fallthru
        _
    $region16: #{_lambda_.20} parent=5 // pred_fallthru
      _
    %p258 = scmp.le.s32.totalorder 1, %s11
    %p259 = scmp.lt.s32.totalorder %s11, 9
    %p260 = pnand %p258, %p259
    %p261 = pneg %p260
    // Predicated region
    $region37: #{_lambda_.20} parent=5 // pred_check
      _
    $region38: #{_lambda_.20} parent=5 // pred_check_branch
      %263 = sbr.rel (%p260) target = $region40
    $region39: #{_lambda_.20} parent=5 // pred_region
      %s264 = ssub.s32 %s11, 1
      %p265 = scmp.lt.s32.totalorder %s20, 7
      %s266 = scalar_select %p265, %s20, 7
      %s267 = smul.addr %s266, 4
      %s268 = scalar_lea.vmem %s0, %s267
      %p269 = pneg %p49
      %p270 = pneg %p46
      %p271 = scmp.lt.s32.totalorder %s20, 7
      %s272 = scalar_select %p271, %s20, 7
      %s273 = scalar_lea.vmem %s1, %s272
      %p274 = pneg %p75
      %p275 = pneg %p72
      %s276 = smul.u32 4, %s21
      %p277 = scmp.lt.s32.totalorder %s20, 7
      %s278 = scalar_select %p277, %s20, 7
      %p279 = scmp.lt.s32.totalorder %s276, 3
      %s280 = scalar_select %p279, %s276, 3
      %s281 = smul.addr %s278, 4
      %s282 = sadd.s32 %s280, %s281
      %s283 = smul.addr %s282, 2
      %s284 = scalar_lea.vmem %s2, %s283
      %p285 = pneg %p103
      %p286 = pneg %p100
      %s287 = smul.u32 4, %s21
      %p288 = scmp.lt.s32.totalorder %s20, 7
      %s289 = scalar_select %p288, %s20, 7
      %p290 = scmp.lt.s32.totalorder %s287, 3
      %s291 = scalar_select %p290, %s287, 3
      %s292 = smul.addr %s289, 4
      %s293 = sadd.s32 %s291, %s292
      %s294 = smul.addr %s293, 2
      %s295 = scalar_lea.vmem %s3, %s294
      %p296 = pneg %p131
      %p297 = pneg %p128
      %s298 = smul.u32 4, %s21
      %p299 = scmp.lt.s32.totalorder %s20, 7
      %s300 = scalar_select %p299, %s20, 7
      %p301 = scmp.lt.s32.totalorder %s298, 3
      %s302 = scalar_select %p301, %s298, 3
      %s303 = smul.addr %s300, 4
      %s304 = sadd.s32 %s302, %s303
      %s305 = smul.addr %s304, 2
      %s306 = scalar_lea.vmem %s4, %s305
      %p307 = pneg %p159
      %p308 = pneg %p156
      %p309 = pneg %p187
      %p310 = pneg %p184
      %s311 = smul.u32 4, %s21
      %p312 = scmp.lt.s32.totalorder %s20, 7
      %s313 = scalar_select %p312, %s20, 7
      %p314 = scmp.lt.s32.totalorder %s311, 3
      %s315 = scalar_select %p314, %s311, 3
      %s316 = smul.addr %s313, 4
      %s317 = sadd.s32 %s315, %s316
      %s318 = smul.addr %s317, 4
      %s319 = scalar_lea.vmem %s5, %s318
      %p320 = scmp.lt.s32.totalorder %s20, 7
      %s321 = scalar_select %p320, %s20, 7
      %s322 = smul.addr %s321, 4
      %s323 = scalar_lea.vmem %s0, %s322
      %p324 = scmp.lt.s32.totalorder %s20, 7
      %s325 = scalar_select %p324, %s20, 7
      %s326 = scalar_lea.vmem %s1, %s325
      %s327 = smul.u32 4, %s21
      %p328 = scmp.lt.s32.totalorder %s20, 7
      %s329 = scalar_select %p328, %s20, 7
      %p330 = scmp.lt.s32.totalorder %s327, 3
      %s331 = scalar_select %p330, %s327, 3
      %s332 = smul.addr %s329, 4
      %s333 = sadd.s32 %s331, %s332
      %s334 = smul.addr %s333, 2
      %s335 = scalar_lea.vmem %s2, %s334
      %s336 = smul.u32 4, %s21
      %s337 = smul.u32 4, %s21
      %p338 = scmp.lt.s32.totalorder %s20, 7
      %s339 = scalar_select %p338, %s20, 7
      %p340 = scmp.lt.s32.totalorder %s337, 3
      %s341 = scalar_select %p340, %s337, 3
      %s342 = smul.addr %s339, 4
      %s343 = sadd.s32 %s341, %s342
      %s344 = smul.addr %s343, 2
      %s345 = scalar_lea.vmem %s3, %s344
      %s346 = smul.u32 4, %s21
      %s347 = smul.u32 4, %s21
      %p348 = scmp.lt.s32.totalorder %s20, 7
      %s349 = scalar_select %p348, %s20, 7
      %p350 = scmp.lt.s32.totalorder %s347, 3
      %s351 = scalar_select %p350, %s347, 3
      %s352 = smul.addr %s349, 4
      %s353 = sadd.s32 %s351, %s352
      %s354 = smul.addr %s353, 2
      %s355 = scalar_lea.vmem %s4, %s354
      %s356 = smul.u32 4, %s21
      %s357 = smul.u32 4, %s21
      %p358 = scmp.lt.s32.totalorder %s20, 7
      %s359 = scalar_select %p358, %s20, 7
      %p360 = scmp.lt.s32.totalorder %s357, 3
      %s361 = scalar_select %p360, %s357, 3
      %s362 = smul.addr %s359, 4
      %s363 = sadd.s32 %s361, %s362
      %s364 = smul.addr %s363, 4
      %s365 = scalar_lea.vmem %s5, %s364
      %s366 = smul.u32 4, %s21
      %v368 = vld [vmem:[%s323] sm:$0xf]
      %v369 = vld [vmem:[%s326] sm:$0x1]
      %371 = vset.pattern.permute.xlu0 0
      %372 = vperm.xlu0 %371, %v368
      %v373 = vpop.permute.xlu0 %372
      %v376 = vlaneseq
      %v377 = vshrl.u32 %v376, 7
      %v378 = vsub.s32 0, %v377
      %v379 = vrot.slane %v369, %v378
      %vm381 = vcmp.eq.f32.partialorder %v373, %v379
      %v382 = vld [vmem:[%s335] sm:$0x3]
      %v383 = vld [vmem:[%s335 + $0x2] sm:$0x3]
      %v384 = vld [vmem:[%s335 + $0x4] sm:$0x3]
      %v385 = vld [vmem:[%s335 + $0x6] sm:$0x3]
      %v386 = vld [vmem:[%s345] sm:$0x3]
      %v387 = vld [vmem:[%s345 + $0x2] sm:$0x3]
      %v388 = vld [vmem:[%s345 + $0x4] sm:$0x3]
      %v389 = vld [vmem:[%s345 + $0x6] sm:$0x3]
      %v390 = vld [vmem:[%s355] sm:$0x3]
      %v391 = vld [vmem:[%s355 + $0x2] sm:$0x3]
      %v392 = vld [vmem:[%s355 + $0x4] sm:$0x3]
      %v393 = vld [vmem:[%s355 + $0x6] sm:$0x3]
      %vm394 = vcmask 64512
      %v396 = vsel %vm394, %v382, 0
      %v399 = vsel %vm394, %v386, 0
      %401 = vmatprep.subr.bf16.mxu0 0
      %402 = vmatpush1.bf16.xpose.msra.mxu0 %v399
      %403 = vmatprep.subr.bf16.mxu0 0
      %404 = vmatpush1.bf16.xpose.msra.mxu0 0
      %405 = vmatprep.subr.bf16.mxu0 0
      %406 = vmatpush1.bf16.xpose.msra.mxu0 0
      %407 = vmatprep.subr.bf16.mxu0 0
      %408 = vmatpush1.bf16.xpose.msra.mxu0 0
      %409 = vmatprep.subr.bf16.mxu0 0
      %410 = vmatpush1.bf16.xpose.msra.mxu0 0
      %411 = vmatprep.subr.bf16.mxu0 0
      %412 = vmatpush1.bf16.xpose.msra.mxu0 0
      %413 = vmatprep.subr.bf16.mxu0 0
      %414 = vmatpush1.bf16.xpose.msra.mxu0 0
      %415 = vmatprep.subr.bf16.mxu0 0
      %416 = vmatpush1.bf16.xpose.msra.mxu0 0
      %417 = vmatprep.subr.bf16.mxu0 0
      %418 = vmatpush1.bf16.xpose.msra.mxu0 0
      %419 = vmatprep.subr.bf16.mxu0 0
      %420 = vmatpush1.bf16.xpose.msra.mxu0 0
      %421 = vmatprep.subr.bf16.mxu0 0
      %422 = vmatpush1.bf16.xpose.msra.mxu0 0
      %423 = vmatprep.subr.bf16.mxu0 0
      %424 = vmatpush1.bf16.xpose.msra.mxu0 0
      %425 = vmatprep.subr.bf16.mxu0 0
      %426 = vmatpush1.bf16.xpose.msra.mxu0 0
      %427 = vmatprep.subr.bf16.mxu0 0
      %428 = vmatpush1.bf16.xpose.msra.mxu0 0
      %429 = vmatprep.subr.bf16.mxu0 0
      %430 = vmatpush1.bf16.xpose.msra.mxu0 0
      %431 = vmatprep.subr.bf16.mxu0 0
      %432 = vmatpush1.bf16.xpose.msra.mxu0 0
      %433 = vmatprep.mubr.bf16.mxu0 0
      %434 = vmatmul.mubr.bf16.gmra.mrb[0].mxu0 %v396
      %v435 = vpop.f32.mrb[0].mxu0
      %v436 = vadd.f32 0.0, %v435
      %v437 = vpop.f32.mrb[0].mxu0
      %v438 = vpop.f32.mrb[0].mxu0
      %v439 = vpop.f32.mrb[0].mxu0
      %440 = vdwg.mxu0
      %v442 = vsel %vm394, %v383, 0
      %v445 = vsel %vm394, %v387, 0
      %447 = vmatprep.subr.bf16.mxu0 0
      %448 = vmatpush1.bf16.xpose.msra.mxu0 %v445
      %449 = vmatprep.subr.bf16.mxu0 0
      %450 = vmatpush1.bf16.xpose.msra.mxu0 0
      %451 = vmatprep.subr.bf16.mxu0 0
      %452 = vmatpush1.bf16.xpose.msra.mxu0 0
      %453 = vmatprep.subr.bf16.mxu0 0
      %454 = vmatpush1.bf16.xpose.msra.mxu0 0
      %455 = vmatprep.subr.bf16.mxu0 0
      %456 = vmatpush1.bf16.xpose.msra.mxu0 0
      %457 = vmatprep.subr.bf16.mxu0 0
      %458 = vmatpush1.bf16.xpose.msra.mxu0 0
      %459 = vmatprep.subr.bf16.mxu0 0
      %460 = vmatpush1.bf16.xpose.msra.mxu0 0
      %461 = vmatprep.subr.bf16.mxu0 0
      %462 = vmatpush1.bf16.xpose.msra.mxu0 0
      %463 = vmatprep.subr.bf16.mxu0 0
      %464 = vmatpush1.bf16.xpose.msra.mxu0 0
      %465 = vmatprep.subr.bf16.mxu0 0
      %466 = vmatpush1.bf16.xpose.msra.mxu0 0
      %467 = vmatprep.subr.bf16.mxu0 0
      %468 = vmatpush1.bf16.xpose.msra.mxu0 0
      %469 = vmatprep.subr.bf16.mxu0 0
      %470 = vmatpush1.bf16.xpose.msra.mxu0 0
      %471 = vmatprep.subr.bf16.mxu0 0
      %472 = vmatpush1.bf16.xpose.msra.mxu0 0
      %473 = vmatprep.subr.bf16.mxu0 0
      %474 = vmatpush1.bf16.xpose.msra.mxu0 0
      %475 = vmatprep.subr.bf16.mxu0 0
      %476 = vmatpush1.bf16.xpose.msra.mxu0 0
      %477 = vmatprep.subr.bf16.mxu0 0
      %478 = vmatpush1.bf16.xpose.msra.mxu0 0
      %479 = vmatprep.mubr.bf16.mxu0 0
      %480 = vmatmul.mubr.bf16.gmra.mrb[0].mxu0 %v442
      %v481 = vpop.f32.mrb[0].mxu0
      %v482 = vadd.f32 0.0, %v481
      %v483 = vpop.f32.mrb[0].mxu0
      %v484 = vpop.f32.mrb[0].mxu0
      %v485 = vpop.f32.mrb[0].mxu0
      %486 = vdwg.mxu0
      %v488 = vsel %vm394, %v384, 0
      %v491 = vsel %vm394, %v388, 0
      %493 = vmatprep.subr.bf16.mxu0 0
      %494 = vmatpush1.bf16.xpose.msra.mxu0 %v491
      %495 = vmatprep.subr.bf16.mxu0 0
      %496 = vmatpush1.bf16.xpose.msra.mxu0 0
      %497 = vmatprep.subr.bf16.mxu0 0
      %498 = vmatpush1.bf16.xpose.msra.mxu0 0
      %499 = vmatprep.subr.bf16.mxu0 0
      %500 = vmatpush1.bf16.xpose.msra.mxu0 0
      %501 = vmatprep.subr.bf16.mxu0 0
      %502 = vmatpush1.bf16.xpose.msra.mxu0 0
      %503 = vmatprep.subr.bf16.mxu0 0
      %504 = vmatpush1.bf16.xpose.msra.mxu0 0
      %505 = vmatprep.subr.bf16.mxu0 0
      %506 = vmatpush1.bf16.xpose.msra.mxu0 0
      %507 = vmatprep.subr.bf16.mxu0 0
      %508 = vmatpush1.bf16.xpose.msra.mxu0 0
      %509 = vmatprep.subr.bf16.mxu0 0
      %510 = vmatpush1.bf16.xpose.msra.mxu0 0
      %511 = vmatprep.subr.bf16.mxu0 0
      %512 = vmatpush1.bf16.xpose.msra.mxu0 0
      %513 = vmatprep.subr.bf16.mxu0 0
      %514 = vmatpush1.bf16.xpose.msra.mxu0 0
      %515 = vmatprep.subr.bf16.mxu0 0
      %516 = vmatpush1.bf16.xpose.msra.mxu0 0
      %517 = vmatprep.subr.bf16.mxu0 0
      %518 = vmatpush1.bf16.xpose.msra.mxu0 0
      %519 = vmatprep.subr.bf16.mxu0 0
      %520 = vmatpush1.bf16.xpose.msra.mxu0 0
      %521 = vmatprep.subr.bf16.mxu0 0
      %522 = vmatpush1.bf16.xpose.msra.mxu0 0
      %523 = vmatprep.subr.bf16.mxu0 0
      %524 = vmatpush1.bf16.xpose.msra.mxu0 0
      %525 = vmatprep.mubr.bf16.mxu0 0
      %526 = vmatmul.mubr.bf16.gmra.mrb[0].mxu0 %v488
      %v527 = vpop.f32.mrb[0].mxu0
      %v528 = vadd.f32 0.0, %v527
      %v529 = vpop.f32.mrb[0].mxu0
      %v530 = vpop.f32.mrb[0].mxu0
      %v531 = vpop.f32.mrb[0].mxu0
      %532 = vdwg.mxu0
      %v534 = vsel %vm394, %v385, 0
      %v537 = vsel %vm394, %v389, 0
      %539 = vmatprep.subr.bf16.mxu0 0
      %540 = vmatpush1.bf16.xpose.msra.mxu0 %v537
      %541 = vmatprep.subr.bf16.mxu0 0
      %542 = vmatpush1.bf16.xpose.msra.mxu0 0
      %543 = vmatprep.subr.bf16.mxu0 0
      %544 = vmatpush1.bf16.xpose.msra.mxu0 0
      %545 = vmatprep.subr.bf16.mxu0 0
      %546 = vmatpush1.bf16.xpose.msra.mxu0 0
      %547 = vmatprep.subr.bf16.mxu0 0
      %548 = vmatpush1.bf16.xpose.msra.mxu0 0
      %549 = vmatprep.subr.bf16.mxu0 0
      %550 = vmatpush1.bf16.xpose.msra.mxu0 0
      %551 = vmatprep.subr.bf16.mxu0 0
      %552 = vmatpush1.bf16.xpose.msra.mxu0 0
      %553 = vmatprep.subr.bf16.mxu0 0
      %554 = vmatpush1.bf16.xpose.msra.mxu0 0
      %555 = vmatprep.subr.bf16.mxu0 0
      %556 = vmatpush1.bf16.xpose.msra.mxu0 0
      %557 = vmatprep.subr.bf16.mxu0 0
      %558 = vmatpush1.bf16.xpose.msra.mxu0 0
      %559 = vmatprep.subr.bf16.mxu0 0
      %560 = vmatpush1.bf16.xpose.msra.mxu0 0
      %561 = vmatprep.subr.bf16.mxu0 0
      %562 = vmatpush1.bf16.xpose.msra.mxu0 0
      %563 = vmatprep.subr.bf16.mxu0 0
      %564 = vmatpush1.bf16.xpose.msra.mxu0 0
      %565 = vmatprep.subr.bf16.mxu0 0
      %566 = vmatpush1.bf16.xpose.msra.mxu0 0
      %567 = vmatprep.subr.bf16.mxu0 0
      %568 = vmatpush1.bf16.xpose.msra.mxu0 0
      %569 = vmatprep.subr.bf16.mxu0 0
      %570 = vmatpush1.bf16.xpose.msra.mxu0 0
      %571 = vmatprep.mubr.bf16.mxu0 0
      %572 = vmatmul.mubr.bf16.gmra.mrb[0].mxu0 %v534
      %v573 = vpop.f32.mrb[0].mxu0
      %v574 = vadd.f32 0.0, %v573
      %v575 = vpop.f32.mrb[0].mxu0
      %v576 = vpop.f32.mrb[0].mxu0
      %v577 = vpop.f32.mrb[0].mxu0
      %578 = vdwg.mxu0
      %v579 = vmul.f32 %v436, 0.35355338
      %v580 = vmul.f32 %v482, 0.35355338
      %v581 = vmul.f32 %v528, 0.35355338
      %v582 = vmul.f32 %v574, 0.35355338
      %v583 = vsel %vm381, 1, 0
      %vm584 = vcmp.eq.s32.totalorder %v583, 1
      %v585 = vsel %vm584, %v579, -1e+30
      %v586 = vsel %vm584, %v580, -1e+30
      %v587 = vsel %vm584, %v581, -1e+30
      %v588 = vsel %vm584, %v582, -1e+30
      %vm589 = vcmask 27648
      %v590 = vsel %vm589, %v585, -inf
      %591 = vmax.xlane.f32.xlu0 %v590
      %v592 = vpop.xlane.xlu0 %591
      %v593 = vsel %vm589, %v586, -inf
      %594 = vmax.xlane.f32.xlu0 %v593
      %v595 = vpop.xlane.xlu0 %594
      %v596 = vsel %vm589, %v587, -inf
      %597 = vmax.xlane.f32.xlu0 %v596
      %v598 = vpop.xlane.xlu0 %597
      %v599 = vsel %vm589, %v588, -inf
      %600 = vmax.xlane.f32.xlu0 %v599
      %v601 = vpop.xlane.xlu0 %600
      %v602 = vsub.f32 %v585, %v592
      %v603 = vsub.f32 %v586, %v595
      %v604 = vsub.f32 %v587, %v598
      %v605 = vsub.f32 %v588, %v601
      %v606 = vmul.f32 %v602, 1.442695
      %v607 = vpow.pop %v606
      %v608 = vmul.f32 %v603, 1.442695
      %v609 = vpow.pop %v608
      %v610 = vmul.f32 %v604, 1.442695
      %v611 = vpow.pop %v610
      %v612 = vmul.f32 %v605, 1.442695
      %v613 = vpow.pop %v612
      %v614 = vsel %vm589, %v607, 0.0
      %615 = vadd.xlane.f32.xlu0 %v614
      %v616 = vpop.xlane.xlu0 %615
      %v617 = vsel %vm589, %v609, 0.0
      %618 = vadd.xlane.f32.xlu0 %v617
      %v619 = vpop.xlane.xlu0 %618
      %v620 = vsel %vm589, %v611, 0.0
      %621 = vadd.xlane.f32.xlu0 %v620
      %v622 = vpop.xlane.xlu0 %621
      %v623 = vsel %vm589, %v613, 0.0
      %624 = vadd.xlane.f32.xlu0 %v623
      %v625 = vpop.xlane.xlu0 %624
      %v626 = vrcp.pop %v616
      %v627 = vrcp.pop %v619
      %v628 = vrcp.pop %v622
      %v629 = vrcp.pop %v625
      %v630 = vmul.f32 %v607, %v626
      %v631 = vmul.f32 %v609, %v627
      %v632 = vmul.f32 %v611, %v628
      %v633 = vmul.f32 %v613, %v629
      %v634 = vpack.c.bf16 %v630, %v630
      %v635 = vpack.c.bf16 %v631, %v631
      %v636 = vpack.c.bf16 %v632, %v632
      %v637 = vpack.c.bf16 %v633, %v633
      %vm638 = vcmask 31744
      %v640 = vsel %vm638, %v634, 0
      %vm642 = vcmask 1041408
      %v644 = vsel %vm642, %v390, 0
      %646 = vmatprep.subr.bf16.mxu0 0
      %647 = vmatpush1.bf16.msra.mxu0 %v644
      %648 = vmatprep.subr.bf16.mxu0 0
      %649 = vmatpush1.bf16.msra.mxu0 0
      %650 = vmatprep.subr.bf16.mxu0 0
      %651 = vmatpush1.bf16.msra.mxu0 0
      %652 = vmatprep.subr.bf16.mxu0 0
      %653 = vmatpush1.bf16.msra.mxu0 0
      %654 = vmatprep.subr.bf16.mxu0 0
      %655 = vmatpush1.bf16.msra.mxu0 0
      %656 = vmatprep.subr.bf16.mxu0 0
      %657 = vmatpush1.bf16.msra.mxu0 0
      %658 = vmatprep.subr.bf16.mxu0 0
      %659 = vmatpush1.bf16.msra.mxu0 0
      %660 = vmatprep.subr.bf16.mxu0 0
      %661 = vmatpush1.bf16.msra.mxu0 0
      %662 = vmatprep.subr.bf16.mxu0 0
      %663 = vmatpush1.bf16.msra.mxu0 0
      %664 = vmatprep.subr.bf16.mxu0 0
      %665 = vmatpush1.bf16.msra.mxu0 0
      %666 = vmatprep.subr.bf16.mxu0 0
      %667 = vmatpush1.bf16.msra.mxu0 0
      %668 = vmatprep.subr.bf16.mxu0 0
      %669 = vmatpush1.bf16.msra.mxu0 0
      %670 = vmatprep.subr.bf16.mxu0 0
      %671 = vmatpush1.bf16.msra.mxu0 0
      %672 = vmatprep.subr.bf16.mxu0 0
      %673 = vmatpush1.bf16.msra.mxu0 0
      %674 = vmatprep.subr.bf16.mxu0 0
      %675 = vmatpush1.bf16.msra.mxu0 0
      %676 = vmatprep.subr.bf16.mxu0 0
      %677 = vmatpush1.bf16.msra.mxu0 0
      %678 = vmatprep.mubr.bf16.mxu0 0
      %679 = vmatmul.mubr.bf16.gmra.mrb[0].mxu0 %v640
      %v680 = vpop.f32.mrb[0].mxu0
      %v681 = vadd.f32 0.0, %v680
      %v682 = vpop.f32.mrb[0].mxu0
      %v683 = vpop.f32.mrb[0].mxu0
      %v684 = vpop.f32.mrb[0].mxu0
      %685 = vdwg.mxu0
      %v687 = vsel %vm638, %v635, 0
      %v690 = vsel %vm642, %v391, 0
      %692 = vmatprep.subr.bf16.mxu0 0
      %693 = vmatpush1.bf16.msra.mxu0 %v690
      %694 = vmatprep.subr.bf16.mxu0 0
      %695 = vmatpush1.bf16.msra.mxu0 0
      %696 = vmatprep.subr.bf16.mxu0 0
      %697 = vmatpush1.bf16.msra.mxu0 0
      %698 = vmatprep.subr.bf16.mxu0 0
      %699 = vmatpush1.bf16.msra.mxu0 0
      %700 = vmatprep.subr.bf16.mxu0 0
      %701 = vmatpush1.bf16.msra.mxu0 0
      %702 = vmatprep.subr.bf16.mxu0 0
      %703 = vmatpush1.bf16.msra.mxu0 0
      %704 = vmatprep.subr.bf16.mxu0 0
      %705 = vmatpush1.bf16.msra.mxu0 0
      %706 = vmatprep.subr.bf16.mxu0 0
      %707 = vmatpush1.bf16.msra.mxu0 0
      %708 = vmatprep.subr.bf16.mxu0 0
      %709 = vmatpush1.bf16.msra.mxu0 0
      %710 = vmatprep.subr.bf16.mxu0 0
      %711 = vmatpush1.bf16.msra.mxu0 0
      %712 = vmatprep.subr.bf16.mxu0 0
      %713 = vmatpush1.bf16.msra.mxu0 0
      %714 = vmatprep.subr.bf16.mxu0 0
      %715 = vmatpush1.bf16.msra.mxu0 0
      %716 = vmatprep.subr.bf16.mxu0 0
      %717 = vmatpush1.bf16.msra.mxu0 0
      %718 = vmatprep.subr.bf16.mxu0 0
      %719 = vmatpush1.bf16.msra.mxu0 0
      %720 = vmatprep.subr.bf16.mxu0 0
      %721 = vmatpush1.bf16.msra.mxu0 0
      %722 = vmatprep.subr.bf16.mxu0 0
      %723 = vmatpush1.bf16.msra.mxu0 0
      %724 = vmatprep.mubr.bf16.mxu0 0
      %725 = vmatmul.mubr.bf16.gmra.mrb[0].mxu0 %v687
      %v726 = vpop.f32.mrb[0].mxu0
      %v727 = vadd.f32 0.0, %v726
      %v728 = vpop.f32.mrb[0].mxu0
      %v729 = vpop.f32.mrb[0].mxu0
      %v730 = vpop.f32.mrb[0].mxu0
      %731 = vdwg.mxu0
      %v733 = vsel %vm638, %v636, 0
      %v736 = vsel %vm642, %v392, 0
      %738 = vmatprep.subr.bf16.mxu0 0
      %739 = vmatpush1.bf16.msra.mxu0 %v736
      %740 = vmatprep.subr.bf16.mxu0 0
      %741 = vmatpush1.bf16.msra.mxu0 0
      %742 = vmatprep.subr.bf16.mxu0 0
      %743 = vmatpush1.bf16.msra.mxu0 0
      %744 = vmatprep.subr.bf16.mxu0 0
      %745 = vmatpush1.bf16.msra.mxu0 0
      %746 = vmatprep.subr.bf16.mxu0 0
      %747 = vmatpush1.bf16.msra.mxu0 0
      %748 = vmatprep.subr.bf16.mxu0 0
      %749 = vmatpush1.bf16.msra.mxu0 0
      %750 = vmatprep.subr.bf16.mxu0 0
      %751 = vmatpush1.bf16.msra.mxu0 0
      %752 = vmatprep.subr.bf16.mxu0 0
      %753 = vmatpush1.bf16.msra.mxu0 0
      %754 = vmatprep.subr.bf16.mxu0 0
      %755 = vmatpush1.bf16.msra.mxu0 0
      %756 = vmatprep.subr.bf16.mxu0 0
      %757 = vmatpush1.bf16.msra.mxu0 0
      %758 = vmatprep.subr.bf16.mxu0 0
      %759 = vmatpush1.bf16.msra.mxu0 0
      %760 = vmatprep.subr.bf16.mxu0 0
      %761 = vmatpush1.bf16.msra.mxu0 0
      %762 = vmatprep.subr.bf16.mxu0 0
      %763 = vmatpush1.bf16.msra.mxu0 0
      %764 = vmatprep.subr.bf16.mxu0 0
      %765 = vmatpush1.bf16.msra.mxu0 0
      %766 = vmatprep.subr.bf16.mxu0 0
      %767 = vmatpush1.bf16.msra.mxu0 0
      %768 = vmatprep.subr.bf16.mxu0 0
      %769 = vmatpush1.bf16.msra.mxu0 0
      %770 = vmatprep.mubr.bf16.mxu0 0
      %771 = vmatmul.mubr.bf16.gmra.mrb[0].mxu0 %v733
      %v772 = vpop.f32.mrb[0].mxu0
      %v773 = vadd.f32 0.0, %v772
      %v774 = vpop.f32.mrb[0].mxu0
      %v775 = vpop.f32.mrb[0].mxu0
      %v776 = vpop.f32.mrb[0].mxu0
      %777 = vdwg.mxu0
      %v779 = vsel %vm638, %v637, 0
      %v782 = vsel %vm642, %v393, 0
      %784 = vmatprep.subr.bf16.mxu0 0
      %785 = vmatpush1.bf16.msra.mxu0 %v782
      %786 = vmatprep.subr.bf16.mxu0 0
      %787 = vmatpush1.bf16.msra.mxu0 0
      %788 = vmatprep.subr.bf16.mxu0 0
      %789 = vmatpush1.bf16.msra.mxu0 0
      %790 = vmatprep.subr.bf16.mxu0 0
      %791 = vmatpush1.bf16.msra.mxu0 0
      %792 = vmatprep.subr.bf16.mxu0 0
      %793 = vmatpush1.bf16.msra.mxu0 0
      %794 = vmatprep.subr.bf16.mxu0 0
      %795 = vmatpush1.bf16.msra.mxu0 0
      %796 = vmatprep.subr.bf16.mxu0 0
      %797 = vmatpush1.bf16.msra.mxu0 0
      %798 = vmatprep.subr.bf16.mxu0 0
      %799 = vmatpush1.bf16.msra.mxu0 0
      %800 = vmatprep.subr.bf16.mxu0 0
      %801 = vmatpush1.bf16.msra.mxu0 0
      %802 = vmatprep.subr.bf16.mxu0 0
      %803 = vmatpush1.bf16.msra.mxu0 0
      %804 = vmatprep.subr.bf16.mxu0 0
      %805 = vmatpush1.bf16.msra.mxu0 0
      %806 = vmatprep.subr.bf16.mxu0 0
      %807 = vmatpush1.bf16.msra.mxu0 0
      %808 = vmatprep.subr.bf16.mxu0 0
      %809 = vmatpush1.bf16.msra.mxu0 0
      %810 = vmatprep.subr.bf16.mxu0 0
      %811 = vmatpush1.bf16.msra.mxu0 0
      %812 = vmatprep.subr.bf16.mxu0 0
      %813 = vmatpush1.bf16.msra.mxu0 0
      %814 = vmatprep.subr.bf16.mxu0 0
      %815 = vmatpush1.bf16.msra.mxu0 0
      %816 = vmatprep.mubr.bf16.mxu0 0
      %817 = vmatmul.mubr.bf16.gmra.mrb[0].mxu0 %v779
      %v818 = vpop.f32.mrb[0].mxu0
      %v819 = vadd.f32 0.0, %v818
      %v820 = vpop.f32.mrb[0].mxu0
      %v821 = vpop.f32.mrb[0].mxu0
      %v822 = vpop.f32.mrb[0].mxu0
      %823 = vdwg.mxu0
      %vm824 = vcmask 60416
      %825 = vst.msk [vmem:[%s365] sm:$0xf] %vm824, %v681
      %826 = vst.msk [vmem:[%s365 + $0x4] sm:$0xf] %vm824, %v727
      %827 = vst.msk [vmem:[%s365 + $0x8] sm:$0xf] %vm824, %v773
      %828 = vst.msk [vmem:[%s365 + $0xc] sm:$0xf] %vm824, %v819
      %s829 = smul.u32 4, %s21
      %p830 = scmp.lt.s32.totalorder %s20, 7
      %s831 = scalar_select %p830, %s20, 7
      %p832 = scmp.lt.s32.totalorder %s829, 3
      %s833 = scalar_select %p832, %s829, 3
      %s834 = smul.addr %s831, 4
      %s835 = sadd.s32 %s833, %s834
      %s836 = smul.addr %s835, 4
      %s837 = scalar_lea.vmem %s5, %s836
      // Predicated region
      $region41: #{_lambda_.20} parent=39 // pred_check
        %p838 = pneg %p184
      $region42: #{_lambda_.20} parent=39 // pred_check_branch
        %840 = sbr.rel (%p838) target = $region44
      $region43: #{_lambda_.20} parent=39 // pred_region
        %s841 = smul.u32 4, %s21
      $region44: #{_lambda_.20} parent=39 // pred_fallthru
        _
    $region40: #{_lambda_.20} parent=5 // pred_fallthru
      _
    %p842 = scmp.le.s32.totalorder 2, %s11
    // Predicated region
    $region45: #{_lambda_.20} parent=5 // pred_check
      %p843 = pneg %p842
    $region46: #{_lambda_.20} parent=5 // pred_check_branch
      %845 = sbr.rel (%p843) target = $region48
    $region47: #{_lambda_.20} parent=5 // pred_region
      %s846 = ssub.s32 %s11, 2
      // Predicated region
      $region49: #{_lambda_.20} parent=47 // pred_check
        %p847 = pneg %p190
      $region50: #{_lambda_.20} parent=47 // pred_check_branch
        %849 = sbr.rel (%p847) target = $region52
      $region51: #{_lambda_.20} parent=47 // pred_region
        %s850 = smul.u32 4, %s23
        %p851 = scmp.lt.s32.totalorder %s22, 7
        %s852 = scalar_select %p851, %s22, 7
        %p853 = scmp.lt.s32.totalorder %s850, 3
        %s854 = scalar_select %p853, %s850, 3
        %s855 = smul.addr %s852, 4
        %s856 = sadd.s32 %s854, %s855
        %s857 = smul.addr %s856, 4
        %s858 = scalar_lea.vmem %s5, %s857
      $region52: #{_lambda_.20} parent=47 // pred_fallthru
        _
    $region48: #{_lambda_.20} parent=5 // pred_fallthru
      _
  $region6: #{_lambda_.20} parent=0 // loop_footer
    %s15 = sadd.s32 1, %s11
  $region7: #{_lambda_.20} parent=0 // loop_footer_branch
    %10 = sbr.rel target = $region3
  $region8: #{_lambda_.20} parent=0 // loop_exit
    _

// kernel: _lambda_.23
$region0: #{_lambda_.23}
  #allocation0 [shape = 'u32[]', space=smem, size = 0x4, offset = 0x4, fixed_abs, tag = 'smem constant byte address 0x4 - core index']
  #allocation1 [shape = 'u32[144,128]{1,0:T(1,128)}', space=vmem, size = 0x12000, scoped, tag = 'internal scratch']
  %s0 = inlined_call_operand.vmem [shape: bf16[32,32], index: 0, kind: input, shape index: {}]
  %s1 = inlined_call_operand.vmem [shape: bf16[32,64], index: 1, kind: input, shape index: {}]
  %s2 = inlined_call_operand.vmem [shape: f32[1,64], index: 2, kind: input, shape index: {}]
  %s3 = inlined_call_operand.vmem [shape: bf16[64,32], index: 3, kind: input, shape index: {}]
  %s4 = inlined_call_operand.vmem [shape: f32[1,32], index: 4, kind: input, shape index: {}]
  %s5 = inlined_call_operand.vmem [shape: f32[32,32], index: 5, kind: output, shape index: {}]
  %s6 = sld [smem:[#allocation0]]
  $region30: #{_lambda_.23} parent=0
    _
  %s8 = ssub.s32 1, %s6
  %s9 = scalar_select 0, %s8, %s6
  // Predicated region
  $region2: #{_lambda_.23} parent=0 // pred_check
    _
  $region3: #{_lambda_.23} parent=0 // pred_check_branch
    %11 = sbr.rel (0) target = $region5
  $region4: #{_lambda_.23} parent=0 // pred_region
    _
  $region5: #{_lambda_.23} parent=0 // pred_fallthru
    _
  // Predicated region
  $region6: #{_lambda_.23} parent=0 // pred_check
    _
  $region7: #{_lambda_.23} parent=0 // pred_check_branch
    %13 = sbr.rel (0) target = $region9
  $region8: #{_lambda_.23} parent=0 // pred_region
    _
  $region9: #{_lambda_.23} parent=0 // pred_fallthru
    _
  // Predicated region
  $region10: #{_lambda_.23} parent=0 // pred_check
    _
  $region11: #{_lambda_.23} parent=0 // pred_check_branch
    %15 = sbr.rel (0) target = $region13
  $region12: #{_lambda_.23} parent=0 // pred_region
    _
  $region13: #{_lambda_.23} parent=0 // pred_fallthru
    _
  // Predicated region
  $region14: #{_lambda_.23} parent=0 // pred_check
    _
  $region15: #{_lambda_.23} parent=0 // pred_check_branch
    %17 = sbr.rel (0) target = $region17
  $region16: #{_lambda_.23} parent=0 // pred_region
    _
  $region17: #{_lambda_.23} parent=0 // pred_fallthru
    _
  // Predicated region
  $region18: #{_lambda_.23} parent=0 // pred_check
    _
  $region19: #{_lambda_.23} parent=0 // pred_check_branch
    %19 = sbr.rel (0) target = $region21
  $region20: #{_lambda_.23} parent=0 // pred_region
    _
  $region21: #{_lambda_.23} parent=0 // pred_fallthru
    _
  %v21 = vld [vmem:[%s0] sm:$0xf]
  %v22 = vld [vmem:[%s0 + $0x4] sm:$0xf]
  %v23 = vld [vmem:[%s0 + $0x8] sm:$0xf]
  %v24 = vld [vmem:[%s0 + $0xc] sm:$0xf]
  %v25 = vld [vmem:[%s1] sm:$0xf]
  %v26 = vld [vmem:[%s1 + $0x4] sm:$0xf]
  %v27 = vld [vmem:[%s1 + $0x8] sm:$0xf]
  %v28 = vld [vmem:[%s1 + $0xc] sm:$0xf]
  %v29 = vld [vmem:[%s2] sm:$0x1]
  %v31 = vlaneseq
  %v32 = vshrl.u32 %v31, 7
  %v33 = vsub.s32 0, %v32
  %v34 = vrot.slane %v29, %v33
  %v40 = vunpack.c.l.b16 %v21
  %v41 = vunpack.c.l.b16 %v22
  %v42 = vunpack.c.l.b16 %v23
  %v43 = vunpack.c.l.b16 %v24
  %v44 = vpack.c.b16 %v41, %v40
  %v45 = vpack.c.b16 %v43, %v42
  %v50 = vunpack.c.l.b16 %v25
  %v51 = vunpack.c.l.b16 %v26
  %v52 = vunpack.c.l.b16 %v27
  %v53 = vunpack.c.l.b16 %v28
  %v54 = vpack.c.b16 %v51, %v50
  %v55 = vpack.c.b16 %v53, %v52
  %vm58 = vcmask 261120
  %v60 = vsel %vm58, %v44, 0
  %v63 = vsel %vm58, %v45, 0
  %65 = vmatprep.subr.bf16.mxu0 0
  %66 = vmatpush1.bf16.msra.mxu0 %v54
  %67 = vmatprep.subr.bf16.mxu0 0
  %68 = vmatpush1.bf16.msra.mxu0 %v55
  %69 = vmatprep.subr.bf16.mxu0 0
  %70 = vmatpush1.bf16.msra.mxu0 0
  %71 = vmatprep.subr.bf16.mxu0 0
  %72 = vmatpush1.bf16.msra.mxu0 0
  %73 = vmatprep.subr.bf16.mxu0 0
  %74 = vmatpush1.bf16.msra.mxu0 0
  %75 = vmatprep.subr.bf16.mxu0 0
  %76 = vmatpush1.bf16.msra.mxu0 0
  %77 = vmatprep.subr.bf16.mxu0 0
  %78 = vmatpush1.bf16.msra.mxu0 0
  %79 = vmatprep.subr.bf16.mxu0 0
  %80 = vmatpush1.bf16.msra.mxu0 0
  %81 = vmatprep.subr.bf16.mxu0 0
  %82 = vmatpush1.bf16.msra.mxu0 0
  %83 = vmatprep.subr.bf16.mxu0 0
  %84 = vmatpush1.bf16.msra.mxu0 0
  %85 = vmatprep.subr.bf16.mxu0 0
  %86 = vmatpush1.bf16.msra.mxu0 0
  %87 = vmatprep.subr.bf16.mxu0 0
  %88 = vmatpush1.bf16.msra.mxu0 0
  %89 = vmatprep.subr.bf16.mxu0 0
  %90 = vmatpush1.bf16.msra.mxu0 0
  %91 = vmatprep.subr.bf16.mxu0 0
  %92 = vmatpush1.bf16.msra.mxu0 0
  %93 = vmatprep.subr.bf16.mxu0 0
  %94 = vmatpush1.bf16.msra.mxu0 0
  %95 = vmatprep.subr.bf16.mxu0 0
  %96 = vmatpush1.bf16.msra.mxu0 0
  %97 = vmatprep.mubr.bf16.mxu0 0
  %98 = vmatmul.mubr.bf16.gmra.mrb[0].mxu0 %v60
  %v99 = vpop.f32.mrb[0].mxu0
  %v100 = vadd.f32 %v34, %v99
  %v101 = vpop.f32.mrb[0].mxu0
  %v102 = vpop.f32.mrb[0].mxu0
  %v103 = vadd.f32 %v34, %v102
  %v104 = vpop.f32.mrb[0].mxu0
  %105 = vmatprep.mubr.bf16.mxu0 0
  %106 = vmatmul.mubr.bf16.gmra.mrb[0].mxu0 %v63
  %v107 = vpop.f32.mrb[0].mxu0
  %v108 = vadd.f32 %v34, %v107
  %v109 = vpop.f32.mrb[0].mxu0
  %v110 = vpop.f32.mrb[0].mxu0
  %v111 = vadd.f32 %v34, %v110
  %v112 = vpop.f32.mrb[0].mxu0
  %113 = vdwg.mxu0
  %v114 = vxor.u32 %v100, 2147483648
  %v115 = vxor.u32 %v103, 2147483648
  %v116 = vxor.u32 %v108, 2147483648
  %v117 = vxor.u32 %v111, 2147483648
  %v118 = vmul.f32 %v114, 1.442695
  %v119 = vpow.pop %v118
  %v120 = vmul.f32 %v115, 1.442695
  %v121 = vpow.pop %v120
  %v122 = vmul.f32 %v116, 1.442695
  %v123 = vpow.pop %v122
  %v124 = vmul.f32 %v117, 1.442695
  %v125 = vpow.pop %v124
  %v126 = vadd.f32 %v119, 1.0
  %v127 = vadd.f32 %v121, 1.0
  %v128 = vadd.f32 %v123, 1.0
  %v129 = vadd.f32 %v125, 1.0
  %v130 = vrcp.pop %v126
  %v131 = vmul.f32 1.0, %v130
  %v132 = vrcp.pop %v127
  %v133 = vmul.f32 1.0, %v132
  %v134 = vrcp.pop %v128
  %v135 = vmul.f32 1.0, %v134
  %v136 = vrcp.pop %v129
  %v137 = vmul.f32 1.0, %v136
  %v138 = vmul.f32 %v100, %v131
  %v139 = vmul.f32 %v103, %v133
  %v140 = vmul.f32 %v108, %v135
  %v141 = vmul.f32 %v111, %v137
  %v142 = vpack.c.bf16 %v139, %v138
  %v143 = vpack.c.bf16 %v141, %v140
  %v144 = vld [vmem:[%s3] sm:$0xf]
  %v145 = vld [vmem:[%s3 + $0x4] sm:$0xf]
  %v146 = vld [vmem:[%s3 + $0x8] sm:$0xf]
  %v147 = vld [vmem:[%s3 + $0xc] sm:$0xf]
  %v148 = vld [vmem:[%s3 + $0x10] sm:$0xf]
  %v149 = vld [vmem:[%s3 + $0x14] sm:$0xf]
  %v150 = vld [vmem:[%s3 + $0x18] sm:$0xf]
  %v151 = vld [vmem:[%s3 + $0x1c] sm:$0xf]
  %v152 = vld [vmem:[%s4] sm:$0x1]
  %v154 = vlaneseq
  %v155 = vshrl.u32 %v154, 7
  %v156 = vsub.s32 0, %v155
  %v157 = vrot.slane %v152, %v156
  %v167 = vunpack.c.l.b16 %v144
  %v168 = vunpack.c.l.b16 %v145
  %v169 = vunpack.c.l.b16 %v146
  %v170 = vunpack.c.l.b16 %v147
  %v171 = vunpack.c.l.b16 %v148
  %v172 = vunpack.c.l.b16 %v149
  %v173 = vunpack.c.l.b16 %v150
  %v174 = vunpack.c.l.b16 %v151
  %v175 = vpack.c.b16 %v168, %v167
  %v176 = vpack.c.b16 %v170, %v169
  %v177 = vpack.c.b16 %v172, %v171
  %v178 = vpack.c.b16 %v174, %v173
  %vm183 = vcmask 523264
  %v185 = vsel %vm183, %v142, 0
  %v188 = vsel %vm183, %v143, 0
  %190 = vmatprep.subr.bf16.mxu0 0
  %191 = vmatpush1.bf16.msra.mxu0 %v175
  %192 = vmatprep.subr.bf16.mxu0 0
  %193 = vmatpush1.bf16.msra.mxu0 %v176
  %194 = vmatprep.subr.bf16.mxu0 0
  %195 = vmatpush1.bf16.msra.mxu0 %v177
  %196 = vmatprep.subr.bf16.mxu0 0
  %197 = vmatpush1.bf16.msra.mxu0 %v178
  %198 = vmatprep.subr.bf16.mxu0 0
  %199 = vmatpush1.bf16.msra.mxu0 0
  %200 = vmatprep.subr.bf16.mxu0 0
  %201 = vmatpush1.bf16.msra.mxu0 0
  %202 = vmatprep.subr.bf16.mxu0 0
  %203 = vmatpush1.bf16.msra.mxu0 0
  %204 = vmatprep.subr.bf16.mxu0 0
  %205 = vmatpush1.bf16.msra.mxu0 0
  %206 = vmatprep.subr.bf16.mxu0 0
  %207 = vmatpush1.bf16.msra.mxu0 0
  %208 = vmatprep.subr.bf16.mxu0 0
  %209 = vmatpush1.bf16.msra.mxu0 0
  %210 = vmatprep.subr.bf16.mxu0 0
  %211 = vmatpush1.bf16.msra.mxu0 0
  %212 = vmatprep.subr.bf16.mxu0 0
  %213 = vmatpush1.bf16.msra.mxu0 0
  %214 = vmatprep.subr.bf16.mxu0 0
  %215 = vmatpush1.bf16.msra.mxu0 0
  %216 = vmatprep.subr.bf16.mxu0 0
  %217 = vmatpush1.bf16.msra.mxu0 0
  %218 = vmatprep.subr.bf16.mxu0 0
  %219 = vmatpush1.bf16.msra.mxu0 0
  %220 = vmatprep.subr.bf16.mxu0 0
  %221 = vmatpush1.bf16.msra.mxu0 0
  %222 = vmatprep.mubr.bf16.mxu0 0
  %223 = vmatmul.mubr.bf16.gmra.mrb[0].mxu0 %v185
  %v224 = vpop.f32.mrb[0].mxu0
  %v225 = vadd.f32 %v157, %v224
  %v226 = vpop.f32.mrb[0].mxu0
  %v227 = vpop.f32.mrb[0].mxu0
  %v228 = vadd.f32 %v157, %v227
  %v229 = vpop.f32.mrb[0].mxu0
  %230 = vmatprep.mubr.bf16.mxu0 0
  %231 = vmatmul.mubr.bf16.gmra.mrb[0].mxu0 %v188
  %v232 = vpop.f32.mrb[0].mxu0
  %v233 = vadd.f32 %v157, %v232
  %v234 = vpop.f32.mrb[0].mxu0
  %v235 = vpop.f32.mrb[0].mxu0
  %v236 = vadd.f32 %v157, %v235
  %v237 = vpop.f32.mrb[0].mxu0
  %238 = vdwg.mxu0
  %239 = vst.msk [vmem:[%s5] sm:$0xff] %vm58, %v225
  %240 = vst.msk [vmem:[%s5 + $0x8] sm:$0xff] %vm58, %v228
  %241 = vst.msk [vmem:[%s5 + $0x10] sm:$0xff] %vm58, %v233
  %242 = vst.msk [vmem:[%s5 + $0x18] sm:$0xff] %vm58, %v236
  // Predicated region
  $region22: #{_lambda_.23} parent=0 // pred_check
    _
  $region23: #{_lambda_.23} parent=0 // pred_check_branch
    %244 = sbr.rel (0) target = $region25
  $region24: #{_lambda_.23} parent=0 // pred_region
    _
  $region25: #{_lambda_.23} parent=0 // pred_fallthru
    _
  // Predicated region
  $region26: #{_lambda_.23} parent=0 // pred_check
    _
  $region27: #{_lambda_.23} parent=0 // pred_check_branch
    %246 = sbr.rel (0) target = $region29
  $region28: #{_lambda_.23} parent=0 // pred_region
    _
  $region29: #{_lambda_.23} parent=0 // pred_fallthru
    _

// kernel: _lambda_.30
$region0: #{_lambda_.30}
  #allocation0 [shape = 'u32[]', space=smem, size = 0x4, offset = 0x4, fixed_abs, tag = 'smem constant byte address 0x4 - core index']
  #allocation1 [shape = 'u32[144,128]{1,0:T(1,128)}', space=vmem, size = 0x12000, scoped, tag = 'internal scratch']
  #allocation2 [shape = 'f32[32,128]{1,0:T(8,128)}', space=vmem, size = 0x4000, scoped, tag = 'scratch operand']
  %s0 = inlined_call_operand.vmem [shape: bf16[32,32], index: 0, kind: input, shape index: {}]
  %s1 = inlined_call_operand.vmem [shape: bf16[32,128], index: 1, kind: input, shape index: {}]
  %s2 = inlined_call_operand.vmem [shape: f32[1,128], index: 2, kind: input, shape index: {}]
  %s3 = inlined_call_operand.vmem [shape: f32[32,128], index: 3, kind: output, shape index: {}]
  %s4 = sld [smem:[#allocation0]]
  $region30: #{_lambda_.30} parent=0
    _
  %s6 = ssub.s32 1, %s4
  %s7 = scalar_select 0, %s6, %s4
  // Predicated region
  $region2: #{_lambda_.30} parent=0 // pred_check
    _
  $region3: #{_lambda_.30} parent=0 // pred_check_branch
    %9 = sbr.rel (0) target = $region5
  $region4: #{_lambda_.30} parent=0 // pred_region
    _
  $region5: #{_lambda_.30} parent=0 // pred_fallthru
    _
  // Predicated region
  $region6: #{_lambda_.30} parent=0 // pred_check
    _
  $region7: #{_lambda_.30} parent=0 // pred_check_branch
    %11 = sbr.rel (0) target = $region9
  $region8: #{_lambda_.30} parent=0 // pred_region
    _
  $region9: #{_lambda_.30} parent=0 // pred_fallthru
    _
  // Predicated region
  $region10: #{_lambda_.30} parent=0 // pred_check
    _
  $region11: #{_lambda_.30} parent=0 // pred_check_branch
    %13 = sbr.rel (0) target = $region13
  $region12: #{_lambda_.30} parent=0 // pred_region
    _
  $region13: #{_lambda_.30} parent=0 // pred_fallthru
    _
  %p15 = scmp.eq.s32.totalorder 0, 0
  // Predicated region
  $region14: #{_lambda_.30} parent=0 // pred_check
    %p16 = pneg %p15
  $region15: #{_lambda_.30} parent=0 // pred_check_branch
    %18 = sbr.rel (%p16) target = $region17
  $region16: #{_lambda_.30} parent=0 // pred_region
    %19 = vst [vmem:[#allocation2] sm:$0xff] 0.0
    %20 = vst [vmem:[#allocation2 + $0x8] sm:$0xff] 0.0
    %21 = vst [vmem:[#allocation2 + $0x10] sm:$0xff] 0.0
    %22 = vst [vmem:[#allocation2 + $0x18] sm:$0xff] 0.0
  $region17: #{_lambda_.30} parent=0 // pred_fallthru
    _
  %v23 = vld [vmem:[#allocation2] sm:$0xff]
  %v24 = vld [vmem:[#allocation2 + $0x8] sm:$0xff]
  %v25 = vld [vmem:[#allocation2 + $0x10] sm:$0xff]
  %v26 = vld [vmem:[#allocation2 + $0x18] sm:$0xff]
  %v27 = vld [vmem:[%s0] sm:$0xf]
  %v28 = vld [vmem:[%s0 + $0x4] sm:$0xf]
  %v29 = vld [vmem:[%s0 + $0x8] sm:$0xf]
  %v30 = vld [vmem:[%s0 + $0xc] sm:$0xf]
  %v31 = vld [vmem:[%s1] sm:$0xf]
  %v32 = vld [vmem:[%s1 + $0x4] sm:$0xf]
  %v33 = vld [vmem:[%s1 + $0x8] sm:$0xf]
  %v34 = vld [vmem:[%s1 + $0xc] sm:$0xf]
  %v39 = vunpack.c.l.b16 %v27
  %v40 = vunpack.c.l.b16 %v28
  %v41 = vunpack.c.l.b16 %v29
  %v42 = vunpack.c.l.b16 %v30
  %v43 = vpack.c.b16 %v40, %v39
  %v44 = vpack.c.b16 %v42, %v41
  %v49 = vunpack.c.l.b16 %v31
  %v50 = vunpack.c.l.b16 %v32
  %v51 = vunpack.c.l.b16 %v33
  %v52 = vunpack.c.l.b16 %v34
  %v53 = vpack.c.b16 %v50, %v49
  %v54 = vpack.c.b16 %v52, %v51
  %vm57 = vcmask 261120
  %v59 = vsel %vm57, %v43, 0
  %v62 = vsel %vm57, %v44, 0
  %64 = vmatprep.subr.bf16.mxu0 0
  %65 = vmatpush1.bf16.msra.mxu0 %v53
  %66 = vmatprep.subr.bf16.mxu0 0
  %67 = vmatpush1.bf16.msra.mxu0 %v54
  %68 = vmatprep.subr.bf16.mxu0 0
  %69 = vmatpush1.bf16.msra.mxu0 0
  %70 = vmatprep.subr.bf16.mxu0 0
  %71 = vmatpush1.bf16.msra.mxu0 0
  %72 = vmatprep.subr.bf16.mxu0 0
  %73 = vmatpush1.bf16.msra.mxu0 0
  %74 = vmatprep.subr.bf16.mxu0 0
  %75 = vmatpush1.bf16.msra.mxu0 0
  %76 = vmatprep.subr.bf16.mxu0 0
  %77 = vmatpush1.bf16.msra.mxu0 0
  %78 = vmatprep.subr.bf16.mxu0 0
  %79 = vmatpush1.bf16.msra.mxu0 0
  %80 = vmatprep.subr.bf16.mxu0 0
  %81 = vmatpush1.bf16.msra.mxu0 0
  %82 = vmatprep.subr.bf16.mxu0 0
  %83 = vmatpush1.bf16.msra.mxu0 0
  %84 = vmatprep.subr.bf16.mxu0 0
  %85 = vmatpush1.bf16.msra.mxu0 0
  %86 = vmatprep.subr.bf16.mxu0 0
  %87 = vmatpush1.bf16.msra.mxu0 0
  %88 = vmatprep.subr.bf16.mxu0 0
  %89 = vmatpush1.bf16.msra.mxu0 0
  %90 = vmatprep.subr.bf16.mxu0 0
  %91 = vmatpush1.bf16.msra.mxu0 0
  %92 = vmatprep.subr.bf16.mxu0 0
  %93 = vmatpush1.bf16.msra.mxu0 0
  %94 = vmatprep.subr.bf16.mxu0 0
  %95 = vmatpush1.bf16.msra.mxu0 0
  %96 = vmatprep.mubr.bf16.mxu0 0
  %97 = vmatmul.mubr.bf16.gmra.mrb[0].mxu0 %v59
  %v98 = vpop.f32.mrb[0].mxu0
  %v99 = vadd.f32 0.0, %v98
  %v100 = vpop.f32.mrb[0].mxu0
  %v101 = vpop.f32.mrb[0].mxu0
  %v102 = vadd.f32 0.0, %v101
  %v103 = vpop.f32.mrb[0].mxu0
  %104 = vmatprep.mubr.bf16.mxu0 0
  %105 = vmatmul.mubr.bf16.gmra.mrb[0].mxu0 %v62
  %v106 = vpop.f32.mrb[0].mxu0
  %v107 = vadd.f32 0.0, %v106
  %v108 = vpop.f32.mrb[0].mxu0
  %v109 = vpop.f32.mrb[0].mxu0
  %v110 = vadd.f32 0.0, %v109
  %v111 = vpop.f32.mrb[0].mxu0
  %112 = vdwg.mxu0
  %v113 = vadd.f32 %v23, %v99
  %v114 = vadd.f32 %v24, %v102
  %v115 = vadd.f32 %v25, %v107
  %v116 = vadd.f32 %v26, %v110
  %117 = vst [vmem:[#allocation2] sm:$0xff] %v113
  %118 = vst [vmem:[#allocation2 + $0x8] sm:$0xff] %v114
  %119 = vst [vmem:[#allocation2 + $0x10] sm:$0xff] %v115
  %120 = vst [vmem:[#allocation2 + $0x18] sm:$0xff] %v116
  // Predicated region
  $region18: #{_lambda_.30} parent=0 // pred_check
    %p121 = pneg %p15
  $region19: #{_lambda_.30} parent=0 // pred_check_branch
    %123 = sbr.rel (%p121) target = $region21
  $region20: #{_lambda_.30} parent=0 // pred_region
    %v124 = vld [vmem:[#allocation2] sm:$0xff]
    %v125 = vld [vmem:[#allocation2 + $0x8] sm:$0xff]
    %v126 = vld [vmem:[#allocation2 + $0x10] sm:$0xff]
    %v127 = vld [vmem:[#allocation2 + $0x18] sm:$0xff]
    %v128 = vld [vmem:[%s2] sm:$0x1]
    %v130 = vlaneseq
    %v131 = vshrl.u32 %v130, 7
    %v132 = vsub.s32 0, %v131
    %v133 = vrot.slane %v128, %v132
    %v135 = vadd.f32 %v124, %v133
    %v136 = vadd.f32 %v125, %v133
    %v137 = vadd.f32 %v126, %v133
    %v138 = vadd.f32 %v127, %v133
    %139 = vst [vmem:[%s3] sm:$0xff] %v135
    %140 = vst [vmem:[%s3 + $0x8] sm:$0xff] %v136
    %141 = vst [vmem:[%s3 + $0x10] sm:$0xff] %v137
    %142 = vst [vmem:[%s3 + $0x18] sm:$0xff] %v138
  $region21: #{_lambda_.30} parent=0 // pred_fallthru
    _
  // Predicated region
  $region22: #{_lambda_.30} parent=0 // pred_check
    _
  $region23: #{_lambda_.30} parent=0 // pred_check_branch
    %144 = sbr.rel (0) target = $region25
  $region24: #{_lambda_.30} parent=0 // pred_region
    _
  $region25: #{_lambda_.30} parent=0 // pred_fallthru
    _
  // Predicated region
  $region26: #{_lambda_.30} parent=0 // pred_check
    _
  $region27: #{_lambda_.30} parent=0 // pred_check_branch
    %146 = sbr.rel (0) target = $region29
  $region28: #{_lambda_.30} parent=0 // pred_region
    _
  $region29: #{_lambda_.30} parent=0 // pred_fallthru
    _

// kernel: _lambda_.26
$region0: #{_lambda_.26}
  #allocation0 [shape = 'u32[]', space=smem, size = 0x4, offset = 0x4, fixed_abs, tag = 'smem constant byte address 0x4 - core index']
  #allocation1 [shape = 'u32[144,128]{1,0:T(1,128)}', space=vmem, size = 0x12000, scoped, tag = 'internal scratch']
  %s0 = inlined_call_operand.vmem [shape: bf16[8,4,4,8], index: 0, kind: input, shape index: {}]
  %s1 = inlined_call_operand.vmem [shape: bf16[8,4,4,8], index: 1, kind: input, shape index: {}]
  %s2 = inlined_call_operand.vmem [shape: bf16[8,4,4,8], index: 2, kind: input, shape index: {}]
  %s3 = inlined_call_operand.vmem [shape: f32[8,4,4,8], index: 3, kind: output, shape index: {}]
  %s4 = sld [smem:[#allocation0]]
  $region45: #{_lambda_.26} parent=0
    _
  %s6 = ssub.s32 1, %s4
  %s7 = scalar_select 0, %s6, %s4
  loop: start=0, step=1, limit=10
  $region2: #{_lambda_.26} parent=0 // loop_pre_header
    _
  $region3: #{_lambda_.26} parent=0 // loop_header
    %s9 = sphi 0, %s13
    %p10 = scmp.ge.s32.totalorder %s9, 10
    %s16 = sphi 0, %s28
    %s17 = sphi 0, %s24
    %s18 = sphi 0, %s16
    %s19 = sphi 0, %s17
    %s20 = sphi 0, %s18
    %s21 = sphi 0, %s19
    %s33 = sphi 0, %s35
    %s36 = sphi 0, %s33
    %s37 = sphi 0, %s36
    %s53 = sphi 0, %s37
    %s61 = sphi 0, %s63
    %s64 = sphi 0, %s61
    %s65 = sphi 0, %s64
    %s81 = sphi 0, %s65
    %s89 = sphi 0, %s91
    %s92 = sphi 0, %s89
    %s93 = sphi 0, %s92
    %s109 = sphi 0, %s93
    %s117 = sphi 0, %s119
    %s120 = sphi 0, %s117
    %s121 = sphi 0, %s120
    %s137 = sphi 0, %s121
  $region4: #{_lambda_.26} parent=0 // loop_header_branch
    %12 = sbr.rel (%p10) target = $region8
  $region5: #{_lambda_.26} parent=0 // loop_body
    %s14 = ssub.s32 %s9, 1
    %s15 = ssub.s32 %s9, 2
    %s22 = sadd.s32 1, %s17
    %p23 = scmp.ge.s32.totalorder %s22, 1
    %s24 = scalar_select %p23, 0, %s22
    %s25 = sadd.s32 1, %s16
    %s26 = scalar_select %p23, %s25, %s16
    %p27 = scmp.ge.s32.totalorder %s26, 8
    %s28 = scalar_select %p27, 0, %s26
    %s29 = ssub.s32 %s16, %s28
    %s30 = ssub.s32 %s17, %s24
    %s31 = sor.u32 %s29, %s30
    %p32 = scmp.eq.s32.totalorder %s31, 0
    %s34 = sadd.s32 %s33, 1
    %s35 = scalar_select %p32, %s33, %s34
    %p38 = pneg %p32
    %p39 = scmp.eq.s32.totalorder %s9, 7
    %p40 = por %p38, %p39
    %p41 = scmp.ne.s32.totalorder %s33, %s36
    %p42 = scmp.eq.s32.totalorder %s9, 0
    %p43 = por %p41, %p42
    %p44 = scmp.ne.s32.totalorder %s33, %s36
    %p45 = scmp.eq.s32.totalorder %s14, 7
    %p46 = por %p44, %p45
    %p47 = scmp.ne.s32.totalorder %s36, %s37
    %p48 = scmp.eq.s32.totalorder %s14, 0
    %p49 = por %p47, %p48
    %p50 = scmp.ne.s32.totalorder %s36, %s37
    %p51 = scmp.eq.s32.totalorder %s15, 7
    %p52 = por %p50, %p51
    %p54 = scmp.ne.s32.totalorder %s37, %s53
    %p55 = scmp.eq.s32.totalorder %s15, 0
    %p56 = por %p54, %p55
    %s57 = ssub.s32 %s16, %s28
    %s58 = ssub.s32 %s17, %s24
    %s59 = sor.u32 %s57, %s58
    %p60 = scmp.eq.s32.totalorder %s59, 0
    %s62 = sadd.s32 %s61, 1
    %s63 = scalar_select %p60, %s61, %s62
    %p66 = pneg %p60
    %p67 = scmp.eq.s32.totalorder %s9, 7
    %p68 = por %p66, %p67
    %p69 = scmp.ne.s32.totalorder %s61, %s64
    %p70 = scmp.eq.s32.totalorder %s9, 0
    %p71 = por %p69, %p70
    %p72 = scmp.ne.s32.totalorder %s61, %s64
    %p73 = scmp.eq.s32.totalorder %s14, 7
    %p74 = por %p72, %p73
    %p75 = scmp.ne.s32.totalorder %s64, %s65
    %p76 = scmp.eq.s32.totalorder %s14, 0
    %p77 = por %p75, %p76
    %p78 = scmp.ne.s32.totalorder %s64, %s65
    %p79 = scmp.eq.s32.totalorder %s15, 7
    %p80 = por %p78, %p79
    %p82 = scmp.ne.s32.totalorder %s65, %s81
    %p83 = scmp.eq.s32.totalorder %s15, 0
    %p84 = por %p82, %p83
    %s85 = ssub.s32 %s16, %s28
    %s86 = ssub.s32 %s17, %s24
    %s87 = sor.u32 %s85, %s86
    %p88 = scmp.eq.s32.totalorder %s87, 0
    %s90 = sadd.s32 %s89, 1
    %s91 = scalar_select %p88, %s89, %s90
    %p94 = pneg %p88
    %p95 = scmp.eq.s32.totalorder %s9, 7
    %p96 = por %p94, %p95
    %p97 = scmp.ne.s32.totalorder %s89, %s92
    %p98 = scmp.eq.s32.totalorder %s9, 0
    %p99 = por %p97, %p98
    %p100 = scmp.ne.s32.totalorder %s89, %s92
    %p101 = scmp.eq.s32.totalorder %s14, 7
    %p102 = por %p100, %p101
    %p103 = scmp.ne.s32.totalorder %s92, %s93
    %p104 = scmp.eq.s32.totalorder %s14, 0
    %p105 = por %p103, %p104
    %p106 = scmp.ne.s32.totalorder %s92, %s93
    %p107 = scmp.eq.s32.totalorder %s15, 7
    %p108 = por %p106, %p107
    %p110 = scmp.ne.s32.totalorder %s93, %s109
    %p111 = scmp.eq.s32.totalorder %s15, 0
    %p112 = por %p110, %p111
    %s113 = ssub.s32 %s16, %s28
    %s114 = ssub.s32 %s17, %s24
    %s115 = sor.u32 %s113, %s114
    %p116 = scmp.eq.s32.totalorder %s115, 0
    %s118 = sadd.s32 %s117, 1
    %s119 = scalar_select %p116, %s117, %s118
    %p122 = pneg %p116
    %p123 = scmp.eq.s32.totalorder %s9, 7
    %p124 = por %p122, %p123
    %p125 = scmp.ne.s32.totalorder %s117, %s120
    %p126 = scmp.eq.s32.totalorder %s9, 0
    %p127 = por %p125, %p126
    %p128 = scmp.ne.s32.totalorder %s117, %s120
    %p129 = scmp.eq.s32.totalorder %s14, 7
    %p130 = por %p128, %p129
    %p131 = scmp.ne.s32.totalorder %s120, %s121
    %p132 = scmp.eq.s32.totalorder %s14, 0
    %p133 = por %p131, %p132
    %p134 = scmp.ne.s32.totalorder %s120, %s121
    %p135 = scmp.eq.s32.totalorder %s15, 7
    %p136 = por %p134, %p135
    %p138 = scmp.ne.s32.totalorder %s121, %s137
    %p139 = scmp.eq.s32.totalorder %s15, 0
    %p140 = por %p138, %p139
    %p141 = scmp.le.s32.totalorder 1, %s9
    %p142 = scmp.lt.s32.totalorder %s9, 9
    %p143 = pnand %p141, %p142
    %p144 = pneg %p143
    // Predicated region
    $region9: #{_lambda_.26} parent=5 // pred_check
      _
    $region10: #{_lambda_.26} parent=5 // pred_check_branch
      %146 = sbr.rel (%p143) target = $region12
    $region11: #{_lambda_.26} parent=5 // pred_region
      %s147 = ssub.s32 %s9, 1
    $region12: #{_lambda_.26} parent=5 // pred_fallthru
      _
    %p148 = scmp.lt.s32.totalorder %s9, 8
    // Predicated region
    $region13: #{_lambda_.26} parent=5 // pred_check
      %p149 = pneg %p148
    $region14: #{_lambda_.26} parent=5 // pred_check_branch
      %151 = sbr.rel (%p149) target = $region16
    $region15: #{_lambda_.26} parent=5 // pred_region
      // Predicated region
      $region17: #{_lambda_.26} parent=15 // pred_check
        %p152 = pneg %p43
      $region18: #{_lambda_.26} parent=15 // pred_check_branch
        %154 = sbr.rel (%p152) target = $region20
      $region19: #{_lambda_.26} parent=15 // pred_region
        %s155 = smul.u32 4, %s17
        %p156 = scmp.lt.s32.totalorder %s16, 7
        %s157 = scalar_select %p156, %s16, 7
        %p158 = scmp.lt.s32.totalorder %s155, 3
        %s159 = scalar_select %p158, %s155, 3
        %s160 = smul.addr %s157, 4
        %s161 = sadd.s32 %s159, %s160
        %s162 = smul.addr %s161, 2
        %s163 = scalar_lea.vmem %s0, %s162
        %s164 = smul.u32 4, %s17
      $region20: #{_lambda_.26} parent=15 // pred_fallthru
        _
      // Predicated region
      $region21: #{_lambda_.26} parent=15 // pred_check
        %p165 = pneg %p71
      $region22: #{_lambda_.26} parent=15 // pred_check_branch
        %167 = sbr.rel (%p165) target = $region24
      $region23: #{_lambda_.26} parent=15 // pred_region
        %s168 = smul.u32 4, %s17
        %p169 = scmp.lt.s32.totalorder %s16, 7
        %s170 = scalar_select %p169, %s16, 7
        %p171 = scmp.lt.s32.totalorder %s168, 3
        %s172 = scalar_select %p171, %s168, 3
        %s173 = smul.addr %s170, 4
        %s174 = sadd.s32 %s172, %s173
        %s175 = smul.addr %s174, 2
        %s176 = scalar_lea.vmem %s1, %s175
        %s177 = smul.u32 4, %s17
      $region24: #{_lambda_.26} parent=15 // pred_fallthru
        _
      // Predicated region
      $region25: #{_lambda_.26} parent=15 // pred_check
        %p178 = pneg %p99
      $region26: #{_lambda_.26} parent=15 // pred_check_branch
        %180 = sbr.rel (%p178) target = $region28
      $region27: #{_lambda_.26} parent=15 // pred_region
        %s181 = smul.u32 4, %s17
        %p182 = scmp.lt.s32.totalorder %s16, 7
        %s183 = scalar_select %p182, %s16, 7
        %p184 = scmp.lt.s32.totalorder %s181, 3
        %s185 = scalar_select %p184, %s181, 3
        %s186 = smul.addr %s183, 4
        %s187 = sadd.s32 %s185, %s186
        %s188 = smul.addr %s187, 2
        %s189 = scalar_lea.vmem %s2, %s188
        %s190 = smul.u32 4, %s17
      $region28: #{_lambda_.26} parent=15 // pred_fallthru
        _
    $region16: #{_lambda_.26} parent=5 // pred_fallthru
      _
    %p191 = scmp.le.s32.totalorder 1, %s9
    %p192 = scmp.lt.s32.totalorder %s9, 9
    %p193 = pnand %p191, %p192
    %p194 = pneg %p193
    // Predicated region
    $region29: #{_lambda_.26} parent=5 // pred_check
      _
    $region30: #{_lambda_.26} parent=5 // pred_check_branch
      %196 = sbr.rel (%p193) target = $region32
    $region31: #{_lambda_.26} parent=5 // pred_region
      %s197 = ssub.s32 %s9, 1
      %s198 = smul.u32 4, %s19
      %p199 = scmp.lt.s32.totalorder %s18, 7
      %s200 = scalar_select %p199, %s18, 7
      %p201 = scmp.lt.s32.totalorder %s198, 3
      %s202 = scalar_select %p201, %s198, 3
      %s203 = smul.addr %s200, 4
      %s204 = sadd.s32 %s202, %s203
      %s205 = smul.addr %s204, 2
      %s206 = scalar_lea.vmem %s0, %s205
      %p207 = pneg %p49
      %p208 = pneg %p46
      %s209 = smul.u32 4, %s19
      %p210 = scmp.lt.s32.totalorder %s18, 7
      %s211 = scalar_select %p210, %s18, 7
      %p212 = scmp.lt.s32.totalorder %s209, 3
      %s213 = scalar_select %p212, %s209, 3
      %s214 = smul.addr %s211, 4
      %s215 = sadd.s32 %s213, %s214
      %s216 = smul.addr %s215, 2
      %s217 = scalar_lea.vmem %s1, %s216
      %p218 = pneg %p77
      %p219 = pneg %p74
      %s220 = smul.u32 4, %s19
      %p221 = scmp.lt.s32.totalorder %s18, 7
      %s222 = scalar_select %p221, %s18, 7
      %p223 = scmp.lt.s32.totalorder %s220, 3
      %s224 = scalar_select %p223, %s220, 3
      %s225 = smul.addr %s222, 4
      %s226 = sadd.s32 %s224, %s225
      %s227 = smul.addr %s226, 2
      %s228 = scalar_lea.vmem %s2, %s227
      %p229 = pneg %p105
      %p230 = pneg %p102
      %p231 = pneg %p133
      %p232 = pneg %p130
      %s233 = smul.u32 4, %s19
      %p234 = scmp.lt.s32.totalorder %s18, 7
      %s235 = scalar_select %p234, %s18, 7
      %p236 = scmp.lt.s32.totalorder %s233, 3
      %s237 = scalar_select %p236, %s233, 3
      %s238 = smul.addr %s235, 4
      %s239 = sadd.s32 %s237, %s238
      %s240 = smul.addr %s239, 4
      %s241 = scalar_lea.vmem %s3, %s240
      %s242 = smul.u32 4, %s19
      %p243 = scmp.lt.s32.totalorder %s18, 7
      %s244 = scalar_select %p243, %s18, 7
      %p245 = scmp.lt.s32.totalorder %s242, 3
      %s246 = scalar_select %p245, %s242, 3
      %s247 = smul.addr %s244, 4
      %s248 = sadd.s32 %s246, %s247
      %s249 = smul.addr %s248, 2
      %s250 = scalar_lea.vmem %s0, %s249
      %s251 = smul.u32 4, %s19
      %s252 = smul.u32 4, %s19
      %p253 = scmp.lt.s32.totalorder %s18, 7
      %s254 = scalar_select %p253, %s18, 7
      %p255 = scmp.lt.s32.totalorder %s252, 3
      %s256 = scalar_select %p255, %s252, 3
      %s257 = smul.addr %s254, 4
      %s258 = sadd.s32 %s256, %s257
      %s259 = smul.addr %s258, 2
      %s260 = scalar_lea.vmem %s1, %s259
      %s261 = smul.u32 4, %s19
      %s262 = smul.u32 4, %s19
      %p263 = scmp.lt.s32.totalorder %s18, 7
      %s264 = scalar_select %p263, %s18, 7
      %p265 = scmp.lt.s32.totalorder %s262, 3
      %s266 = scalar_select %p265, %s262, 3
      %s267 = smul.addr %s264, 4
      %s268 = sadd.s32 %s266, %s267
      %s269 = smul.addr %s268, 2
      %s270 = scalar_lea.vmem %s2, %s269
      %s271 = smul.u32 4, %s19
      %s272 = smul.u32 4, %s19
      %p273 = scmp.lt.s32.totalorder %s18, 7
      %s274 = scalar_select %p273, %s18, 7
      %p275 = scmp.lt.s32.totalorder %s272, 3
      %s276 = scalar_select %p275, %s272, 3
      %s277 = smul.addr %s274, 4
      %s278 = sadd.s32 %s276, %s277
      %s279 = smul.addr %s278, 4
      %s280 = scalar_lea.vmem %s3, %s279
      %s281 = smul.u32 4, %s19
      %v283 = vld [vmem:[%s250] sm:$0x3]
      %v284 = vld [vmem:[%s250 + $0x2] sm:$0x3]
      %v285 = vld [vmem:[%s250 + $0x4] sm:$0x3]
      %v286 = vld [vmem:[%s250 + $0x6] sm:$0x3]
      %v287 = vld [vmem:[%s260] sm:$0x3]
      %v288 = vld [vmem:[%s260 + $0x2] sm:$0x3]
      %v289 = vld [vmem:[%s260 + $0x4] sm:$0x3]
      %v290 = vld [vmem:[%s260 + $0x6] sm:$0x3]
      %v291 = vld [vmem:[%s270] sm:$0x3]
      %v292 = vld [vmem:[%s270 + $0x2] sm:$0x3]
      %v293 = vld [vmem:[%s270 + $0x4] sm:$0x3]
      %v294 = vld [vmem:[%s270 + $0x6] sm:$0x3]
      %vm295 = vcmask 64512
      %v297 = vsel %vm295, %v283, 0
      %v300 = vsel %vm295, %v287, 0
      %302 = vmatprep.subr.bf16.mxu0 0
      %303 = vmatpush1.bf16.xpose.msra.mxu0 %v300
      %304 = vmatprep.subr.bf16.mxu0 0
      %305 = vmatpush1.bf16.xpose.msra.mxu0 0
      %306 = vmatprep.subr.bf16.mxu0 0
      %307 = vmatpush1.bf16.xpose.msra.mxu0 0
      %308 = vmatprep.subr.bf16.mxu0 0
      %309 = vmatpush1.bf16.xpose.msra.mxu0 0
      %310 = vmatprep.subr.bf16.mxu0 0
      %311 = vmatpush1.bf16.xpose.msra.mxu0 0
      %312 = vmatprep.subr.bf16.mxu0 0
      %313 = vmatpush1.bf16.xpose.msra.mxu0 0
      %314 = vmatprep.subr.bf16.mxu0 0
      %315 = vmatpush1.bf16.xpose.msra.mxu0 0
      %316 = vmatprep.subr.bf16.mxu0 0
      %317 = vmatpush1.bf16.xpose.msra.mxu0 0
      %318 = vmatprep.subr.bf16.mxu0 0
      %319 = vmatpush1.bf16.xpose.msra.mxu0 0
      %320 = vmatprep.subr.bf16.mxu0 0
      %321 = vmatpush1.bf16.xpose.msra.mxu0 0
      %322 = vmatprep.subr.bf16.mxu0 0
      %323 = vmatpush1.bf16.xpose.msra.mxu0 0
      %324 = vmatprep.subr.bf16.mxu0 0
      %325 = vmatpush1.bf16.xpose.msra.mxu0 0
      %326 = vmatprep.subr.bf16.mxu0 0
      %327 = vmatpush1.bf16.xpose.msra.mxu0 0
      %328 = vmatprep.subr.bf16.mxu0 0
      %329 = vmatpush1.bf16.xpose.msra.mxu0 0
      %330 = vmatprep.subr.bf16.mxu0 0
      %331 = vmatpush1.bf16.xpose.msra.mxu0 0
      %332 = vmatprep.subr.bf16.mxu0 0
      %333 = vmatpush1.bf16.xpose.msra.mxu0 0
      %334 = vmatprep.mubr.bf16.mxu0 0
      %335 = vmatmul.mubr.bf16.gmra.mrb[0].mxu0 %v297
      %v336 = vpop.f32.mrb[0].mxu0
      %v337 = vadd.f32 0.0, %v336
      %v338 = vpop.f32.mrb[0].mxu0
      %v339 = vpop.f32.mrb[0].mxu0
      %v340 = vpop.f32.mrb[0].mxu0
      %341 = vdwg.mxu0
      %v343 = vsel %vm295, %v284, 0
      %v346 = vsel %vm295, %v288, 0
      %348 = vmatprep.subr.bf16.mxu0 0
      %349 = vmatpush1.bf16.xpose.msra.mxu0 %v346
      %350 = vmatprep.subr.bf16.mxu0 0
      %351 = vmatpush1.bf16.xpose.msra.mxu0 0
      %352 = vmatprep.subr.bf16.mxu0 0
      %353 = vmatpush1.bf16.xpose.msra.mxu0 0
      %354 = vmatprep.subr.bf16.mxu0 0
      %355 = vmatpush1.bf16.xpose.msra.mxu0 0
      %356 = vmatprep.subr.bf16.mxu0 0
      %357 = vmatpush1.bf16.xpose.msra.mxu0 0
      %358 = vmatprep.subr.bf16.mxu0 0
      %359 = vmatpush1.bf16.xpose.msra.mxu0 0
      %360 = vmatprep.subr.bf16.mxu0 0
      %361 = vmatpush1.bf16.xpose.msra.mxu0 0
      %362 = vmatprep.subr.bf16.mxu0 0
      %363 = vmatpush1.bf16.xpose.msra.mxu0 0
      %364 = vmatprep.subr.bf16.mxu0 0
      %365 = vmatpush1.bf16.xpose.msra.mxu0 0
      %366 = vmatprep.subr.bf16.mxu0 0
      %367 = vmatpush1.bf16.xpose.msra.mxu0 0
      %368 = vmatprep.subr.bf16.mxu0 0
      %369 = vmatpush1.bf16.xpose.msra.mxu0 0
      %370 = vmatprep.subr.bf16.mxu0 0
      %371 = vmatpush1.bf16.xpose.msra.mxu0 0
      %372 = vmatprep.subr.bf16.mxu0 0
      %373 = vmatpush1.bf16.xpose.msra.mxu0 0
      %374 = vmatprep.subr.bf16.mxu0 0
      %375 = vmatpush1.bf16.xpose.msra.mxu0 0
      %376 = vmatprep.subr.bf16.mxu0 0
      %377 = vmatpush1.bf16.xpose.msra.mxu0 0
      %378 = vmatprep.subr.bf16.mxu0 0
      %379 = vmatpush1.bf16.xpose.msra.mxu0 0
      %380 = vmatprep.mubr.bf16.mxu0 0
      %381 = vmatmul.mubr.bf16.gmra.mrb[0].mxu0 %v343
      %v382 = vpop.f32.mrb[0].mxu0
      %v383 = vadd.f32 0.0, %v382
      %v384 = vpop.f32.mrb[0].mxu0
      %v385 = vpop.f32.mrb[0].mxu0
      %v386 = vpop.f32.mrb[0].mxu0
      %387 = vdwg.mxu0
      %v389 = vsel %vm295, %v285, 0
      %v392 = vsel %vm295, %v289, 0
      %394 = vmatprep.subr.bf16.mxu0 0
      %395 = vmatpush1.bf16.xpose.msra.mxu0 %v392
      %396 = vmatprep.subr.bf16.mxu0 0
      %397 = vmatpush1.bf16.xpose.msra.mxu0 0
      %398 = vmatprep.subr.bf16.mxu0 0
      %399 = vmatpush1.bf16.xpose.msra.mxu0 0
      %400 = vmatprep.subr.bf16.mxu0 0
      %401 = vmatpush1.bf16.xpose.msra.mxu0 0
      %402 = vmatprep.subr.bf16.mxu0 0
      %403 = vmatpush1.bf16.xpose.msra.mxu0 0
      %404 = vmatprep.subr.bf16.mxu0 0
      %405 = vmatpush1.bf16.xpose.msra.mxu0 0
      %406 = vmatprep.subr.bf16.mxu0 0
      %407 = vmatpush1.bf16.xpose.msra.mxu0 0
      %408 = vmatprep.subr.bf16.mxu0 0
      %409 = vmatpush1.bf16.xpose.msra.mxu0 0
      %410 = vmatprep.subr.bf16.mxu0 0
      %411 = vmatpush1.bf16.xpose.msra.mxu0 0
      %412 = vmatprep.subr.bf16.mxu0 0
      %413 = vmatpush1.bf16.xpose.msra.mxu0 0
      %414 = vmatprep.subr.bf16.mxu0 0
      %415 = vmatpush1.bf16.xpose.msra.mxu0 0
      %416 = vmatprep.subr.bf16.mxu0 0
      %417 = vmatpush1.bf16.xpose.msra.mxu0 0
      %418 = vmatprep.subr.bf16.mxu0 0
      %419 = vmatpush1.bf16.xpose.msra.mxu0 0
      %420 = vmatprep.subr.bf16.mxu0 0
      %421 = vmatpush1.bf16.xpose.msra.mxu0 0
      %422 = vmatprep.subr.bf16.mxu0 0
      %423 = vmatpush1.bf16.xpose.msra.mxu0 0
      %424 = vmatprep.subr.bf16.mxu0 0
      %425 = vmatpush1.bf16.xpose.msra.mxu0 0
      %426 = vmatprep.mubr.bf16.mxu0 0
      %427 = vmatmul.mubr.bf16.gmra.mrb[0].mxu0 %v389
      %v428 = vpop.f32.mrb[0].mxu0
      %v429 = vadd.f32 0.0, %v428
      %v430 = vpop.f32.mrb[0].mxu0
      %v431 = vpop.f32.mrb[0].mxu0
      %v432 = vpop.f32.mrb[0].mxu0
      %433 = vdwg.mxu0
      %v435 = vsel %vm295, %v286, 0
      %v438 = vsel %vm295, %v290, 0
      %440 = vmatprep.subr.bf16.mxu0 0
      %441 = vmatpush1.bf16.xpose.msra.mxu0 %v438
      %442 = vmatprep.subr.bf16.mxu0 0
      %443 = vmatpush1.bf16.xpose.msra.mxu0 0
      %444 = vmatprep.subr.bf16.mxu0 0
      %445 = vmatpush1.bf16.xpose.msra.mxu0 0
      %446 = vmatprep.subr.bf16.mxu0 0
      %447 = vmatpush1.bf16.xpose.msra.mxu0 0
      %448 = vmatprep.subr.bf16.mxu0 0
      %449 = vmatpush1.bf16.xpose.msra.mxu0 0
      %450 = vmatprep.subr.bf16.mxu0 0
      %451 = vmatpush1.bf16.xpose.msra.mxu0 0
      %452 = vmatprep.subr.bf16.mxu0 0
      %453 = vmatpush1.bf16.xpose.msra.mxu0 0
      %454 = vmatprep.subr.bf16.mxu0 0
      %455 = vmatpush1.bf16.xpose.msra.mxu0 0
      %456 = vmatprep.subr.bf16.mxu0 0
      %457 = vmatpush1.bf16.xpose.msra.mxu0 0
      %458 = vmatprep.subr.bf16.mxu0 0
      %459 = vmatpush1.bf16.xpose.msra.mxu0 0
      %460 = vmatprep.subr.bf16.mxu0 0
      %461 = vmatpush1.bf16.xpose.msra.mxu0 0
      %462 = vmatprep.subr.bf16.mxu0 0
      %463 = vmatpush1.bf16.xpose.msra.mxu0 0
      %464 = vmatprep.subr.bf16.mxu0 0
      %465 = vmatpush1.bf16.xpose.msra.mxu0 0
      %466 = vmatprep.subr.bf16.mxu0 0
      %467 = vmatpush1.bf16.xpose.msra.mxu0 0
      %468 = vmatprep.subr.bf16.mxu0 0
      %469 = vmatpush1.bf16.xpose.msra.mxu0 0
      %470 = vmatprep.subr.bf16.mxu0 0
      %471 = vmatpush1.bf16.xpose.msra.mxu0 0
      %472 = vmatprep.mubr.bf16.mxu0 0
      %473 = vmatmul.mubr.bf16.gmra.mrb[0].mxu0 %v435
      %v474 = vpop.f32.mrb[0].mxu0
      %v475 = vadd.f32 0.0, %v474
      %v476 = vpop.f32.mrb[0].mxu0
      %v477 = vpop.f32.mrb[0].mxu0
      %v478 = vpop.f32.mrb[0].mxu0
      %479 = vdwg.mxu0
      %v480 = vmul.f32 %v337, 0.35355338
      %v481 = vmul.f32 %v383, 0.35355338
      %v482 = vmul.f32 %v429, 0.35355338
      %v483 = vmul.f32 %v475, 0.35355338
      %v484 = vlaneseq
      %v485 = vshrl.u32 %v484, 7
      %v486 = vlaneseq
      %v487 = vand.u32 %v486, 127
      %vm488 = vcmp.ge.s32.totalorder %v485, %v487
      %v489 = vsel %vm488, 1, 0
      %vm490 = vcmp.eq.s32.totalorder %v489, 1
      %v491 = vsel %vm490, %v480, -1e+30
      %v492 = vsel %vm490, %v481, -1e+30
      %v493 = vsel %vm490, %v482, -1e+30
      %v494 = vsel %vm490, %v483, -1e+30
      %vm495 = vcmask 27648
      %v496 = vsel %vm495, %v491, -inf
      %497 = vmax.xlane.f32.xlu0 %v496
      %v498 = vpop.xlane.xlu0 %497
      %v499 = vsel %vm495, %v492, -inf
      %500 = vmax.xlane.f32.xlu0 %v499
      %v501 = vpop.xlane.xlu0 %500
      %v502 = vsel %vm495, %v493, -inf
      %503 = vmax.xlane.f32.xlu0 %v502
      %v504 = vpop.xlane.xlu0 %503
      %v505 = vsel %vm495, %v494, -inf
      %506 = vmax.xlane.f32.xlu0 %v505
      %v507 = vpop.xlane.xlu0 %506
      %v508 = vsub.f32 %v491, %v498
      %v509 = vsub.f32 %v492, %v501
      %v510 = vsub.f32 %v493, %v504
      %v511 = vsub.f32 %v494, %v507
      %v512 = vmul.f32 %v508, 1.442695
      %v513 = vpow.pop %v512
      %v514 = vmul.f32 %v509, 1.442695
      %v515 = vpow.pop %v514
      %v516 = vmul.f32 %v510, 1.442695
      %v517 = vpow.pop %v516
      %v518 = vmul.f32 %v511, 1.442695
      %v519 = vpow.pop %v518
      %v520 = vsel %vm495, %v513, 0.0
      %521 = vadd.xlane.f32.xlu0 %v520
      %v522 = vpop.xlane.xlu0 %521
      %v523 = vsel %vm495, %v515, 0.0
      %524 = vadd.xlane.f32.xlu0 %v523
      %v525 = vpop.xlane.xlu0 %524
      %v526 = vsel %vm495, %v517, 0.0
      %527 = vadd.xlane.f32.xlu0 %v526
      %v528 = vpop.xlane.xlu0 %527
      %v529 = vsel %vm495, %v519, 0.0
      %530 = vadd.xlane.f32.xlu0 %v529
      %v531 = vpop.xlane.xlu0 %530
      %v532 = vrcp.pop %v522
      %v533 = vrcp.pop %v525
      %v534 = vrcp.pop %v528
      %v535 = vrcp.pop %v531
      %v536 = vmul.f32 %v513, %v532
      %v537 = vmul.f32 %v515, %v533
      %v538 = vmul.f32 %v517, %v534
      %v539 = vmul.f32 %v519, %v535
      %v540 = vpack.c.bf16 %v536, %v536
      %v541 = vpack.c.bf16 %v537, %v537
      %v542 = vpack.c.bf16 %v538, %v538
      %v543 = vpack.c.bf16 %v539, %v539
      %vm544 = vcmask 31744
      %v546 = vsel %vm544, %v540, 0
      %vm548 = vcmask 1041408
      %v550 = vsel %vm548, %v291, 0
      %552 = vmatprep.subr.bf16.mxu0 0
      %553 = vmatpush1.bf16.msra.mxu0 %v550
      %554 = vmatprep.subr.bf16.mxu0 0
      %555 = vmatpush1.bf16.msra.mxu0 0
      %556 = vmatprep.subr.bf16.mxu0 0
      %557 = vmatpush1.bf16.msra.mxu0 0
      %558 = vmatprep.subr.bf16.mxu0 0
      %559 = vmatpush1.bf16.msra.mxu0 0
      %560 = vmatprep.subr.bf16.mxu0 0
      %561 = vmatpush1.bf16.msra.mxu0 0
      %562 = vmatprep.subr.bf16.mxu0 0
      %563 = vmatpush1.bf16.msra.mxu0 0
      %564 = vmatprep.subr.bf16.mxu0 0
      %565 = vmatpush1.bf16.msra.mxu0 0
      %566 = vmatprep.subr.bf16.mxu0 0
      %567 = vmatpush1.bf16.msra.mxu0 0
      %568 = vmatprep.subr.bf16.mxu0 0
      %569 = vmatpush1.bf16.msra.mxu0 0
      %570 = vmatprep.subr.bf16.mxu0 0
      %571 = vmatpush1.bf16.msra.mxu0 0
      %572 = vmatprep.subr.bf16.mxu0 0
      %573 = vmatpush1.bf16.msra.mxu0 0
      %574 = vmatprep.subr.bf16.mxu0 0
      %575 = vmatpush1.bf16.msra.mxu0 0
      %576 = vmatprep.subr.bf16.mxu0 0
      %577 = vmatpush1.bf16.msra.mxu0 0
      %578 = vmatprep.subr.bf16.mxu0 0
      %579 = vmatpush1.bf16.msra.mxu0 0
      %580 = vmatprep.subr.bf16.mxu0 0
      %581 = vmatpush1.bf16.msra.mxu0 0
      %582 = vmatprep.subr.bf16.mxu0 0
      %583 = vmatpush1.bf16.msra.mxu0 0
      %584 = vmatprep.mubr.bf16.mxu0 0
      %585 = vmatmul.mubr.bf16.gmra.mrb[0].mxu0 %v546
      %v586 = vpop.f32.mrb[0].mxu0
      %v587 = vadd.f32 0.0, %v586
      %v588 = vpop.f32.mrb[0].mxu0
      %v589 = vpop.f32.mrb[0].mxu0
      %v590 = vpop.f32.mrb[0].mxu0
      %591 = vdwg.mxu0
      %v593 = vsel %vm544, %v541, 0
      %v596 = vsel %vm548, %v292, 0
      %598 = vmatprep.subr.bf16.mxu0 0
      %599 = vmatpush1.bf16.msra.mxu0 %v596
      %600 = vmatprep.subr.bf16.mxu0 0
      %601 = vmatpush1.bf16.msra.mxu0 0
      %602 = vmatprep.subr.bf16.mxu0 0
      %603 = vmatpush1.bf16.msra.mxu0 0
      %604 = vmatprep.subr.bf16.mxu0 0
      %605 = vmatpush1.bf16.msra.mxu0 0
      %606 = vmatprep.subr.bf16.mxu0 0
      %607 = vmatpush1.bf16.msra.mxu0 0
      %608 = vmatprep.subr.bf16.mxu0 0
      %609 = vmatpush1.bf16.msra.mxu0 0
      %610 = vmatprep.subr.bf16.mxu0 0
      %611 = vmatpush1.bf16.msra.mxu0 0
      %612 = vmatprep.subr.bf16.mxu0 0
      %613 = vmatpush1.bf16.msra.mxu0 0
      %614 = vmatprep.subr.bf16.mxu0 0
      %615 = vmatpush1.bf16.msra.mxu0 0
      %616 = vmatprep.subr.bf16.mxu0 0
      %617 = vmatpush1.bf16.msra.mxu0 0
      %618 = vmatprep.subr.bf16.mxu0 0
      %619 = vmatpush1.bf16.msra.mxu0 0
      %620 = vmatprep.subr.bf16.mxu0 0
      %621 = vmatpush1.bf16.msra.mxu0 0
      %622 = vmatprep.subr.bf16.mxu0 0
      %623 = vmatpush1.bf16.msra.mxu0 0
      %624 = vmatprep.subr.bf16.mxu0 0
      %625 = vmatpush1.bf16.msra.mxu0 0
      %626 = vmatprep.subr.bf16.mxu0 0
      %627 = vmatpush1.bf16.msra.mxu0 0
      %628 = vmatprep.subr.bf16.mxu0 0
      %629 = vmatpush1.bf16.msra.mxu0 0
      %630 = vmatprep.mubr.bf16.mxu0 0
      %631 = vmatmul.mubr.bf16.gmra.mrb[0].mxu0 %v593
      %v632 = vpop.f32.mrb[0].mxu0
      %v633 = vadd.f32 0.0, %v632
      %v634 = vpop.f32.mrb[0].mxu0
      %v635 = vpop.f32.mrb[0].mxu0
      %v636 = vpop.f32.mrb[0].mxu0
      %637 = vdwg.mxu0
      %v639 = vsel %vm544, %v542, 0
      %v642 = vsel %vm548, %v293, 0
      %644 = vmatprep.subr.bf16.mxu0 0
      %645 = vmatpush1.bf16.msra.mxu0 %v642
      %646 = vmatprep.subr.bf16.mxu0 0
      %647 = vmatpush1.bf16.msra.mxu0 0
      %648 = vmatprep.subr.bf16.mxu0 0
      %649 = vmatpush1.bf16.msra.mxu0 0
      %650 = vmatprep.subr.bf16.mxu0 0
      %651 = vmatpush1.bf16.msra.mxu0 0
      %652 = vmatprep.subr.bf16.mxu0 0
      %653 = vmatpush1.bf16.msra.mxu0 0
      %654 = vmatprep.subr.bf16.mxu0 0
      %655 = vmatpush1.bf16.msra.mxu0 0
      %656 = vmatprep.subr.bf16.mxu0 0
      %657 = vmatpush1.bf16.msra.mxu0 0
      %658 = vmatprep.subr.bf16.mxu0 0
      %659 = vmatpush1.bf16.msra.mxu0 0
      %660 = vmatprep.subr.bf16.mxu0 0
      %661 = vmatpush1.bf16.msra.mxu0 0
      %662 = vmatprep.subr.bf16.mxu0 0
      %663 = vmatpush1.bf16.msra.mxu0 0
      %664 = vmatprep.subr.bf16.mxu0 0
      %665 = vmatpush1.bf16.msra.mxu0 0
      %666 = vmatprep.subr.bf16.mxu0 0
      %667 = vmatpush1.bf16.msra.mxu0 0
      %668 = vmatprep.subr.bf16.mxu0 0
      %669 = vmatpush1.bf16.msra.mxu0 0
      %670 = vmatprep.subr.bf16.mxu0 0
      %671 = vmatpush1.bf16.msra.mxu0 0
      %672 = vmatprep.subr.bf16.mxu0 0
      %673 = vmatpush1.bf16.msra.mxu0 0
      %674 = vmatprep.subr.bf16.mxu0 0
      %675 = vmatpush1.bf16.msra.mxu0 0
      %676 = vmatprep.mubr.bf16.mxu0 0
      %677 = vmatmul.mubr.bf16.gmra.mrb[0].mxu0 %v639
      %v678 = vpop.f32.mrb[0].mxu0
      %v679 = vadd.f32 0.0, %v678
      %v680 = vpop.f32.mrb[0].mxu0
      %v681 = vpop.f32.mrb[0].mxu0
      %v682 = vpop.f32.mrb[0].mxu0
      %683 = vdwg.mxu0
      %v685 = vsel %vm544, %v543, 0
      %v688 = vsel %vm548, %v294, 0
      %690 = vmatprep.subr.bf16.mxu0 0
      %691 = vmatpush1.bf16.msra.mxu0 %v688
      %692 = vmatprep.subr.bf16.mxu0 0
      %693 = vmatpush1.bf16.msra.mxu0 0
      %694 = vmatprep.subr.bf16.mxu0 0
      %695 = vmatpush1.bf16.msra.mxu0 0
      %696 = vmatprep.subr.bf16.mxu0 0
      %697 = vmatpush1.bf16.msra.mxu0 0
      %698 = vmatprep.subr.bf16.mxu0 0
      %699 = vmatpush1.bf16.msra.mxu0 0
      %700 = vmatprep.subr.bf16.mxu0 0
      %701 = vmatpush1.bf16.msra.mxu0 0
      %702 = vmatprep.subr.bf16.mxu0 0
      %703 = vmatpush1.bf16.msra.mxu0 0
      %704 = vmatprep.subr.bf16.mxu0 0
      %705 = vmatpush1.bf16.msra.mxu0 0
      %706 = vmatprep.subr.bf16.mxu0 0
      %707 = vmatpush1.bf16.msra.mxu0 0
      %708 = vmatprep.subr.bf16.mxu0 0
      %709 = vmatpush1.bf16.msra.mxu0 0
      %710 = vmatprep.subr.bf16.mxu0 0
      %711 = vmatpush1.bf16.msra.mxu0 0
      %712 = vmatprep.subr.bf16.mxu0 0
      %713 = vmatpush1.bf16.msra.mxu0 0
      %714 = vmatprep.subr.bf16.mxu0 0
      %715 = vmatpush1.bf16.msra.mxu0 0
      %716 = vmatprep.subr.bf16.mxu0 0
      %717 = vmatpush1.bf16.msra.mxu0 0
      %718 = vmatprep.subr.bf16.mxu0 0
      %719 = vmatpush1.bf16.msra.mxu0 0
      %720 = vmatprep.subr.bf16.mxu0 0
      %721 = vmatpush1.bf16.msra.mxu0 0
      %722 = vmatprep.mubr.bf16.mxu0 0
      %723 = vmatmul.mubr.bf16.gmra.mrb[0].mxu0 %v685
      %v724 = vpop.f32.mrb[0].mxu0
      %v725 = vadd.f32 0.0, %v724
      %v726 = vpop.f32.mrb[0].mxu0
      %v727 = vpop.f32.mrb[0].mxu0
      %v728 = vpop.f32.mrb[0].mxu0
      %729 = vdwg.mxu0
      %vm730 = vcmask 60416
      %731 = vst.msk [vmem:[%s280] sm:$0xf] %vm730, %v587
      %732 = vst.msk [vmem:[%s280 + $0x4] sm:$0xf] %vm730, %v633
      %733 = vst.msk [vmem:[%s280 + $0x8] sm:$0xf] %vm730, %v679
      %734 = vst.msk [vmem:[%s280 + $0xc] sm:$0xf] %vm730, %v725
      %s735 = smul.u32 4, %s19
      %p736 = scmp.lt.s32.totalorder %s18, 7
      %s737 = scalar_select %p736, %s18, 7
      %p738 = scmp.lt.s32.totalorder %s735, 3
      %s739 = scalar_select %p738, %s735, 3
      %s740 = smul.addr %s737, 4
      %s741 = sadd.s32 %s739, %s740
      %s742 = smul.addr %s741, 4
      %s743 = scalar_lea.vmem %s3, %s742
      // Predicated region
      $region33: #{_lambda_.26} parent=31 // pred_check
        %p744 = pneg %p130
      $region34: #{_lambda_.26} parent=31 // pred_check_branch
        %746 = sbr.rel (%p744) target = $region36
      $region35: #{_lambda_.26} parent=31 // pred_region
        %s747 = smul.u32 4, %s19
      $region36: #{_lambda_.26} parent=31 // pred_fallthru
        _
    $region32: #{_lambda_.26} parent=5 // pred_fallthru
      _
    %p748 = scmp.le.s32.totalorder 2, %s9
    // Predicated region
    $region37: #{_lambda_.26} parent=5 // pred_check
      %p749 = pneg %p748
    $region38: #{_lambda_.26} parent=5 // pred_check_branch
      %751 = sbr.rel (%p749) target = $region40
    $region39: #{_lambda_.26} parent=5 // pred_region
      %s752 = ssub.s32 %s9, 2
      // Predicated region
      $region41: #{_lambda_.26} parent=39 // pred_check
        %p753 = pneg %p136
      $region42: #{_lambda_.26} parent=39 // pred_check_branch
        %755 = sbr.rel (%p753) target = $region44
      $region43: #{_lambda_.26} parent=39 // pred_region
        %s756 = smul.u32 4, %s21
        %p757 = scmp.lt.s32.totalorder %s20, 7
        %s758 = scalar_select %p757, %s20, 7
        %p759 = scmp.lt.s32.totalorder %s756, 3
        %s760 = scalar_select %p759, %s756, 3
        %s761 = smul.addr %s758, 4
        %s762 = sadd.s32 %s760, %s761
        %s763 = smul.addr %s762, 4
        %s764 = scalar_lea.vmem %s3, %s763
      $region44: #{_lambda_.26} parent=39 // pred_fallthru
        _
    $region40: #{_lambda_.26} parent=5 // pred_fallthru
      _
  $region6: #{_lambda_.26} parent=0 // loop_footer
    %s13 = sadd.s32 1, %s9
  $region7: #{_lambda_.26} parent=0 // loop_footer_branch
    %8 = sbr.rel target = $region3
  $region8: #{_lambda_.26} parent=0 // loop_exit
    _

// kernel: _lambda_.31
$region0: #{_lambda_.31}
  #allocation0 [shape = 'u32[]', space=smem, size = 0x4, offset = 0x4, fixed_abs, tag = 'smem constant byte address 0x4 - core index']
  #allocation1 [shape = 'u32[144,128]{1,0:T(1,128)}', space=vmem, size = 0x12000, scoped, tag = 'internal scratch']
  #allocation2 [shape = 'f32[128,2]{1,0:T(8,128)}', space=vmem, size = 0x10000, scoped, tag = 'scratch operand']
  %s0 = inlined_call_operand.vmem [shape: bf16[128,32], index: 0, kind: input, shape index: {}]
  %s1 = inlined_call_operand.vmem [shape: bf16[32,2], index: 1, kind: input, shape index: {}]
  %s2 = inlined_call_operand.vmem [shape: f32[1,2], index: 2, kind: input, shape index: {}]
  %s3 = inlined_call_operand.vmem [shape: f32[128,2], index: 3, kind: output, shape index: {}]
  %s4 = sld [smem:[#allocation0]]
  $region30: #{_lambda_.31} parent=0
    _
  %s6 = ssub.s32 1, %s4
  %s7 = scalar_select 0, %s6, %s4
  // Predicated region
  $region2: #{_lambda_.31} parent=0 // pred_check
    _
  $region3: #{_lambda_.31} parent=0 // pred_check_branch
    %9 = sbr.rel (0) target = $region5
  $region4: #{_lambda_.31} parent=0 // pred_region
    _
  $region5: #{_lambda_.31} parent=0 // pred_fallthru
    _
  // Predicated region
  $region6: #{_lambda_.31} parent=0 // pred_check
    _
  $region7: #{_lambda_.31} parent=0 // pred_check_branch
    %11 = sbr.rel (0) target = $region9
  $region8: #{_lambda_.31} parent=0 // pred_region
    _
  $region9: #{_lambda_.31} parent=0 // pred_fallthru
    _
  // Predicated region
  $region10: #{_lambda_.31} parent=0 // pred_check
    _
  $region11: #{_lambda_.31} parent=0 // pred_check_branch
    %13 = sbr.rel (0) target = $region13
  $region12: #{_lambda_.31} parent=0 // pred_region
    _
  $region13: #{_lambda_.31} parent=0 // pred_fallthru
    _
  %p15 = scmp.eq.s32.totalorder 0, 0
  // Predicated region
  $region14: #{_lambda_.31} parent=0 // pred_check
    %p16 = pneg %p15
  $region15: #{_lambda_.31} parent=0 // pred_check_branch
    %18 = sbr.rel (%p16) target = $region17
  $region16: #{_lambda_.31} parent=0 // pred_region
    %vm19 = vcmask 15360
    %20 = vst.msk [vmem:[#allocation2] sm:$0xff] %vm19, 0.0
    %21 = vst.msk [vmem:[#allocation2 + $0x8] sm:$0xff] %vm19, 0.0
    %22 = vst.msk [vmem:[#allocation2 + $0x10] sm:$0xff] %vm19, 0.0
    %23 = vst.msk [vmem:[#allocation2 + $0x18] sm:$0xff] %vm19, 0.0
    %24 = vst.msk [vmem:[#allocation2 + $0x20] sm:$0xff] %vm19, 0.0
    %25 = vst.msk [vmem:[#allocation2 + $0x28] sm:$0xff] %vm19, 0.0
    %26 = vst.msk [vmem:[#allocation2 + $0x30] sm:$0xff] %vm19, 0.0
    %27 = vst.msk [vmem:[#allocation2 + $0x38] sm:$0xff] %vm19, 0.0
    %28 = vst.msk [vmem:[#allocation2 + $0x40] sm:$0xff] %vm19, 0.0
    %29 = vst.msk [vmem:[#allocation2 + $0x48] sm:$0xff] %vm19, 0.0
    %30 = vst.msk [vmem:[#allocation2 + $0x50] sm:$0xff] %vm19, 0.0
    %31 = vst.msk [vmem:[#allocation2 + $0x58] sm:$0xff] %vm19, 0.0
    %32 = vst.msk [vmem:[#allocation2 + $0x60] sm:$0xff] %vm19, 0.0
    %33 = vst.msk [vmem:[#allocation2 + $0x68] sm:$0xff] %vm19, 0.0
    %34 = vst.msk [vmem:[#allocation2 + $0x70] sm:$0xff] %vm19, 0.0
    %35 = vst.msk [vmem:[#allocation2 + $0x78] sm:$0xff] %vm19, 0.0
  $region17: #{_lambda_.31} parent=0 // pred_fallthru
    _
  %v36 = vld [vmem:[#allocation2] sm:$0xff]
  %v37 = vld [vmem:[#allocation2 + $0x8] sm:$0xff]
  %v38 = vld [vmem:[#allocation2 + $0x10] sm:$0xff]
  %v39 = vld [vmem:[#allocation2 + $0x18] sm:$0xff]
  %v40 = vld [vmem:[#allocation2 + $0x20] sm:$0xff]
  %v41 = vld [vmem:[#allocation2 + $0x28] sm:$0xff]
  %v42 = vld [vmem:[#allocation2 + $0x30] sm:$0xff]
  %v43 = vld [vmem:[#allocation2 + $0x38] sm:$0xff]
  %v44 = vld [vmem:[#allocation2 + $0x40] sm:$0xff]
  %v45 = vld [vmem:[#allocation2 + $0x48] sm:$0xff]
  %v46 = vld [vmem:[#allocation2 + $0x50] sm:$0xff]
  %v47 = vld [vmem:[#allocation2 + $0x58] sm:$0xff]
  %v48 = vld [vmem:[#allocation2 + $0x60] sm:$0xff]
  %v49 = vld [vmem:[#allocation2 + $0x68] sm:$0xff]
  %v50 = vld [vmem:[#allocation2 + $0x70] sm:$0xff]
  %v51 = vld [vmem:[#allocation2 + $0x78] sm:$0xff]
  %v52 = vld [vmem:[%s0] sm:$0xf]
  %v53 = vld [vmem:[%s0 + $0x4] sm:$0xf]
  %v54 = vld [vmem:[%s0 + $0x8] sm:$0xf]
  %v55 = vld [vmem:[%s0 + $0xc] sm:$0xf]
  %v56 = vld [vmem:[%s0 + $0x10] sm:$0xf]
  %v57 = vld [vmem:[%s0 + $0x14] sm:$0xf]
  %v58 = vld [vmem:[%s0 + $0x18] sm:$0xf]
  %v59 = vld [vmem:[%s0 + $0x1c] sm:$0xf]
  %v60 = vld [vmem:[%s0 + $0x20] sm:$0xf]
  %v61 = vld [vmem:[%s0 + $0x24] sm:$0xf]
  %v62 = vld [vmem:[%s0 + $0x28] sm:$0xf]
  %v63 = vld [vmem:[%s0 + $0x2c] sm:$0xf]
  %v64 = vld [vmem:[%s0 + $0x30] sm:$0xf]
  %v65 = vld [vmem:[%s0 + $0x34] sm:$0xf]
  %v66 = vld [vmem:[%s0 + $0x38] sm:$0xf]
  %v67 = vld [vmem:[%s0 + $0x3c] sm:$0xf]
  %v68 = vld [vmem:[%s1] sm:$0xf]
  %v69 = vld [vmem:[%s1 + $0x4] sm:$0xf]
  %v70 = vld [vmem:[%s1 + $0x8] sm:$0xf]
  %v71 = vld [vmem:[%s1 + $0xc] sm:$0xf]
  %v88 = vunpack.c.l.b16 %v52
  %v89 = vunpack.c.l.b16 %v53
  %v90 = vunpack.c.l.b16 %v54
  %v91 = vunpack.c.l.b16 %v55
  %v92 = vunpack.c.l.b16 %v56
  %v93 = vunpack.c.l.b16 %v57
  %v94 = vunpack.c.l.b16 %v58
  %v95 = vunpack.c.l.b16 %v59
  %v96 = vunpack.c.l.b16 %v60
  %v97 = vunpack.c.l.b16 %v61
  %v98 = vunpack.c.l.b16 %v62
  %v99 = vunpack.c.l.b16 %v63
  %v100 = vunpack.c.l.b16 %v64
  %v101 = vunpack.c.l.b16 %v65
  %v102 = vunpack.c.l.b16 %v66
  %v103 = vunpack.c.l.b16 %v67
  %v104 = vpack.c.b16 %v89, %v88
  %v105 = vpack.c.b16 %v91, %v90
  %v106 = vpack.c.b16 %v93, %v92
  %v107 = vpack.c.b16 %v95, %v94
  %v108 = vpack.c.b16 %v97, %v96
  %v109 = vpack.c.b16 %v99, %v98
  %v110 = vpack.c.b16 %v101, %v100
  %v111 = vpack.c.b16 %v103, %v102
  %v116 = vunpack.c.l.b16 %v68
  %v117 = vunpack.c.l.b16 %v69
  %v118 = vunpack.c.l.b16 %v70
  %v119 = vunpack.c.l.b16 %v71
  %v120 = vpack.c.b16 %v117, %v116
  %v121 = vpack.c.b16 %v119, %v118
  %vm124 = vcmask 261120
  %v126 = vsel %vm124, %v104, 0
  %v129 = vsel %vm124, %v105, 0
  %v132 = vsel %vm124, %v106, 0
  %v135 = vsel %vm124, %v107, 0
  %v138 = vsel %vm124, %v108, 0
  %v141 = vsel %vm124, %v109, 0
  %v144 = vsel %vm124, %v110, 0
  %v147 = vsel %vm124, %v111, 0
  %149 = vmatprep.subr.bf16.mxu0 0
  %150 = vmatpush1.bf16.msra.mxu0 %v120
  %151 = vmatprep.subr.bf16.mxu0 0
  %152 = vmatpush1.bf16.msra.mxu0 %v121
  %153 = vmatprep.subr.bf16.mxu0 0
  %154 = vmatpush1.bf16.msra.mxu0 0
  %155 = vmatprep.subr.bf16.mxu0 0
  %156 = vmatpush1.bf16.msra.mxu0 0
  %157 = vmatprep.subr.bf16.mxu0 0
  %158 = vmatpush1.bf16.msra.mxu0 0
  %159 = vmatprep.subr.bf16.mxu0 0
  %160 = vmatpush1.bf16.msra.mxu0 0
  %161 = vmatprep.subr.bf16.mxu0 0
  %162 = vmatpush1.bf16.msra.mxu0 0
  %163 = vmatprep.subr.bf16.mxu0 0
  %164 = vmatpush1.bf16.msra.mxu0 0
  %165 = vmatprep.subr.bf16.mxu0 0
  %166 = vmatpush1.bf16.msra.mxu0 0
  %167 = vmatprep.subr.bf16.mxu0 0
  %168 = vmatpush1.bf16.msra.mxu0 0
  %169 = vmatprep.subr.bf16.mxu0 0
  %170 = vmatpush1.bf16.msra.mxu0 0
  %171 = vmatprep.subr.bf16.mxu0 0
  %172 = vmatpush1.bf16.msra.mxu0 0
  %173 = vmatprep.subr.bf16.mxu0 0
  %174 = vmatpush1.bf16.msra.mxu0 0
  %175 = vmatprep.subr.bf16.mxu0 0
  %176 = vmatpush1.bf16.msra.mxu0 0
  %177 = vmatprep.subr.bf16.mxu0 0
  %178 = vmatpush1.bf16.msra.mxu0 0
  %179 = vmatprep.subr.bf16.mxu0 0
  %180 = vmatpush1.bf16.msra.mxu0 0
  %181 = vmatprep.mubr.bf16.mxu0 0
  %182 = vmatmul.mubr.bf16.gmra.mrb[0].mxu0 %v126
  %v183 = vpop.f32.mrb[0].mxu0
  %v184 = vadd.f32 0.0, %v183
  %v185 = vpop.f32.mrb[0].mxu0
  %v186 = vpop.f32.mrb[0].mxu0
  %v187 = vadd.f32 0.0, %v186
  %v188 = vpop.f32.mrb[0].mxu0
  %189 = vmatprep.mubr.bf16.mxu0 0
  %190 = vmatmul.mubr.bf16.gmra.mrb[0].mxu0 %v129
  %v191 = vpop.f32.mrb[0].mxu0
  %v192 = vadd.f32 0.0, %v191
  %v193 = vpop.f32.mrb[0].mxu0
  %v194 = vpop.f32.mrb[0].mxu0
  %v195 = vadd.f32 0.0, %v194
  %v196 = vpop.f32.mrb[0].mxu0
  %197 = vmatprep.mubr.bf16.mxu0 0
  %198 = vmatmul.mubr.bf16.gmra.mrb[0].mxu0 %v132
  %v199 = vpop.f32.mrb[0].mxu0
  %v200 = vadd.f32 0.0, %v199
  %v201 = vpop.f32.mrb[0].mxu0
  %v202 = vpop.f32.mrb[0].mxu0
  %v203 = vadd.f32 0.0, %v202
  %v204 = vpop.f32.mrb[0].mxu0
  %205 = vmatprep.mubr.bf16.mxu0 0
  %206 = vmatmul.mubr.bf16.gmra.mrb[0].mxu0 %v135
  %v207 = vpop.f32.mrb[0].mxu0
  %v208 = vadd.f32 0.0, %v207
  %v209 = vpop.f32.mrb[0].mxu0
  %v210 = vpop.f32.mrb[0].mxu0
  %v211 = vadd.f32 0.0, %v210
  %v212 = vpop.f32.mrb[0].mxu0
  %213 = vmatprep.mubr.bf16.mxu0 0
  %214 = vmatmul.mubr.bf16.gmra.mrb[0].mxu0 %v138
  %v215 = vpop.f32.mrb[0].mxu0
  %v216 = vadd.f32 0.0, %v215
  %v217 = vpop.f32.mrb[0].mxu0
  %v218 = vpop.f32.mrb[0].mxu0
  %v219 = vadd.f32 0.0, %v218
  %v220 = vpop.f32.mrb[0].mxu0
  %221 = vmatprep.mubr.bf16.mxu0 0
  %222 = vmatmul.mubr.bf16.gmra.mrb[0].mxu0 %v141
  %v223 = vpop.f32.mrb[0].mxu0
  %v224 = vadd.f32 0.0, %v223
  %v225 = vpop.f32.mrb[0].mxu0
  %v226 = vpop.f32.mrb[0].mxu0
  %v227 = vadd.f32 0.0, %v226
  %v228 = vpop.f32.mrb[0].mxu0
  %229 = vmatprep.mubr.bf16.mxu0 0
  %230 = vmatmul.mubr.bf16.gmra.mrb[0].mxu0 %v144
  %v231 = vpop.f32.mrb[0].mxu0
  %v232 = vadd.f32 0.0, %v231
  %v233 = vpop.f32.mrb[0].mxu0
  %v234 = vpop.f32.mrb[0].mxu0
  %v235 = vadd.f32 0.0, %v234
  %v236 = vpop.f32.mrb[0].mxu0
  %237 = vmatprep.mubr.bf16.mxu0 0
  %238 = vmatmul.mubr.bf16.gmra.mrb[0].mxu0 %v147
  %v239 = vpop.f32.mrb[0].mxu0
  %v240 = vadd.f32 0.0, %v239
  %v241 = vpop.f32.mrb[0].mxu0
  %v242 = vpop.f32.mrb[0].mxu0
  %v243 = vadd.f32 0.0, %v242
  %v244 = vpop.f32.mrb[0].mxu0
  %245 = vdwg.mxu0
  %v246 = vadd.f32 %v36, %v184
  %v247 = vadd.f32 %v37, %v187
  %v248 = vadd.f32 %v38, %v192
  %v249 = vadd.f32 %v39, %v195
  %v250 = vadd.f32 %v40, %v200
  %v251 = vadd.f32 %v41, %v203
  %v252 = vadd.f32 %v42, %v208
  %v253 = vadd.f32 %v43, %v211
  %v254 = vadd.f32 %v44, %v216
  %v255 = vadd.f32 %v45, %v219
  %v256 = vadd.f32 %v46, %v224
  %v257 = vadd.f32 %v47, %v227
  %v258 = vadd.f32 %v48, %v232
  %v259 = vadd.f32 %v49, %v235
  %v260 = vadd.f32 %v50, %v240
  %v261 = vadd.f32 %v51, %v243
  %vm262 = vcmask 15360
  %263 = vst.msk [vmem:[#allocation2] sm:$0xff] %vm262, %v246
  %264 = vst.msk [vmem:[#allocation2 + $0x8] sm:$0xff] %vm262, %v247
  %265 = vst.msk [vmem:[#allocation2 + $0x10] sm:$0xff] %vm262, %v248
  %266 = vst.msk [vmem:[#allocation2 + $0x18] sm:$0xff] %vm262, %v249
  %267 = vst.msk [vmem:[#allocation2 + $0x20] sm:$0xff] %vm262, %v250
  %268 = vst.msk [vmem:[#allocation2 + $0x28] sm:$0xff] %vm262, %v251
  %269 = vst.msk [vmem:[#allocation2 + $0x30] sm:$0xff] %vm262, %v252
  %270 = vst.msk [vmem:[#allocation2 + $0x38] sm:$0xff] %vm262, %v253
  %271 = vst.msk [vmem:[#allocation2 + $0x40] sm:$0xff] %vm262, %v254
  %272 = vst.msk [vmem:[#allocation2 + $0x48] sm:$0xff] %vm262, %v255
  %273 = vst.msk [vmem:[#allocation2 + $0x50] sm:$0xff] %vm262, %v256
  %274 = vst.msk [vmem:[#allocation2 + $0x58] sm:$0xff] %vm262, %v257
  %275 = vst.msk [vmem:[#allocation2 + $0x60] sm:$0xff] %vm262, %v258
  %276 = vst.msk [vmem:[#allocation2 + $0x68] sm:$0xff] %vm262, %v259
  %277 = vst.msk [vmem:[#allocation2 + $0x70] sm:$0xff] %vm262, %v260
  %278 = vst.msk [vmem:[#allocation2 + $0x78] sm:$0xff] %vm262, %v261
  // Predicated region
  $region18: #{_lambda_.31} parent=0 // pred_check
    %p279 = pneg %p15
  $region19: #{_lambda_.31} parent=0 // pred_check_branch
    %281 = sbr.rel (%p279) target = $region21
  $region20: #{_lambda_.31} parent=0 // pred_region
    %v282 = vld [vmem:[#allocation2] sm:$0xff]
    %v283 = vld [vmem:[#allocation2 + $0x8] sm:$0xff]
    %v284 = vld [vmem:[#allocation2 + $0x10] sm:$0xff]
    %v285 = vld [vmem:[#allocation2 + $0x18] sm:$0xff]
    %v286 = vld [vmem:[#allocation2 + $0x20] sm:$0xff]
    %v287 = vld [vmem:[#allocation2 + $0x28] sm:$0xff]
    %v288 = vld [vmem:[#allocation2 + $0x30] sm:$0xff]
    %v289 = vld [vmem:[#allocation2 + $0x38] sm:$0xff]
    %v290 = vld [vmem:[#allocation2 + $0x40] sm:$0xff]
    %v291 = vld [vmem:[#allocation2 + $0x48] sm:$0xff]
    %v292 = vld [vmem:[#allocation2 + $0x50] sm:$0xff]
    %v293 = vld [vmem:[#allocation2 + $0x58] sm:$0xff]
    %v294 = vld [vmem:[#allocation2 + $0x60] sm:$0xff]
    %v295 = vld [vmem:[#allocation2 + $0x68] sm:$0xff]
    %v296 = vld [vmem:[#allocation2 + $0x70] sm:$0xff]
    %v297 = vld [vmem:[#allocation2 + $0x78] sm:$0xff]
    %v298 = vld [vmem:[%s2] sm:$0x1]
    %v300 = vlaneseq
    %v301 = vshrl.u32 %v300, 7
    %v302 = vsub.s32 0, %v301
    %v303 = vrot.slane %v298, %v302
    %v305 = vadd.f32 %v282, %v303
    %v306 = vadd.f32 %v283, %v303
    %v307 = vadd.f32 %v284, %v303
    %v308 = vadd.f32 %v285, %v303
    %v309 = vadd.f32 %v286, %v303
    %v310 = vadd.f32 %v287, %v303
    %v311 = vadd.f32 %v288, %v303
    %v312 = vadd.f32 %v289, %v303
    %v313 = vadd.f32 %v290, %v303
    %v314 = vadd.f32 %v291, %v303
    %v315 = vadd.f32 %v292, %v303
    %v316 = vadd.f32 %v293, %v303
    %v317 = vadd.f32 %v294, %v303
    %v318 = vadd.f32 %v295, %v303
    %v319 = vadd.f32 %v296, %v303
    %v320 = vadd.f32 %v297, %v303
    %321 = vst.msk [vmem:[%s3] sm:$0xff] %vm262, %v305
    %322 = vst.msk [vmem:[%s3 + $0x8] sm:$0xff] %vm262, %v306
    %323 = vst.msk [vmem:[%s3 + $0x10] sm:$0xff] %vm262, %v307
    %324 = vst.msk [vmem:[%s3 + $0x18] sm:$0xff] %vm262, %v308
    %325 = vst.msk [vmem:[%s3 + $0x20] sm:$0xff] %vm262, %v309
    %326 = vst.msk [vmem:[%s3 + $0x28] sm:$0xff] %vm262, %v310
    %327 = vst.msk [vmem:[%s3 + $0x30] sm:$0xff] %vm262, %v311
    %328 = vst.msk [vmem:[%s3 + $0x38] sm:$0xff] %vm262, %v312
    %329 = vst.msk [vmem:[%s3 + $0x40] sm:$0xff] %vm262, %v313
    %330 = vst.msk [vmem:[%s3 + $0x48] sm:$0xff] %vm262, %v314
    %331 = vst.msk [vmem:[%s3 + $0x50] sm:$0xff] %vm262, %v315
    %332 = vst.msk [vmem:[%s3 + $0x58] sm:$0xff] %vm262, %v316
    %333 = vst.msk [vmem:[%s3 + $0x60] sm:$0xff] %vm262, %v317
    %334 = vst.msk [vmem:[%s3 + $0x68] sm:$0xff] %vm262, %v318
    %335 = vst.msk [vmem:[%s3 + $0x70] sm:$0xff] %vm262, %v319
    %336 = vst.msk [vmem:[%s3 + $0x78] sm:$0xff] %vm262, %v320
  $region21: #{_lambda_.31} parent=0 // pred_fallthru
    _
  // Predicated region
  $region22: #{_lambda_.31} parent=0 // pred_check
    _
  $region23: #{_lambda_.31} parent=0 // pred_check_branch
    %338 = sbr.rel (0) target = $region25
  $region24: #{_lambda_.31} parent=0 // pred_region
    _
  $region25: #{_lambda_.31} parent=0 // pred_fallthru
    _
  // Predicated region
  $region26: #{_lambda_.31} parent=0 // pred_check
    _
  $region27: #{_lambda_.31} parent=0 // pred_check_branch
    %340 = sbr.rel (0) target = $region29
  $region28: #{_lambda_.31} parent=0 // pred_region
    _
  $region29: #{_lambda_.31} parent=0 // pred_fallthru
    _

</llo_original>
